<compile_context>
chip_gen: v7x
topology: tpu7x:2x2x1
jax: 0.10.0
libtpu: 0.0.40
codegen_flags: <defaults>
</compile_context>

<pallas_src>
import functools

import jax
import jax.numpy as jnp
from jax.experimental import pallas as pl
from jax.experimental.pallas import tpu as pltpu

A_LEAK = 0.001      # Leaky_ReLU6 slope
BN_EPS = 1e-5


def leaky_hsig(v):
    """leaky_hsigmoid(x) = min(6, max(a*(x+3), x+3)) / 6"""
    t = v + 3.0
    return jnp.minimum(6.0, jnp.maximum(A_LEAK * t, t)) * (1.0 / 6.0)


# ----------------------------------------------------------------------------
# Lane-axis cyclic shift: result[..., i] = v[..., (i + off) % size].
# mode=+1: pltpu.roll is jnp.roll-like (out[i] = in[i - shift])
# mode=-1: reversed convention (out[i] = in[i + shift])
# mode= 0: fall back to slice+concatenate.
# ----------------------------------------------------------------------------
def lane_shift(v, off, size, mode):
    off = off % size
    if off == 0:
        return v
    if mode == 1:
        return pltpu.roll(v, size - off, axis=v.ndim - 1)
    if mode == -1:
        return pltpu.roll(v, off, axis=v.ndim - 1)
    return jnp.concatenate([v[..., off:], v[..., :off]], axis=-1)


_ROLL_MODE = None


def _roll_mode():
    """One-time tiny probe kernel to detect pltpu.roll's direction (also
    exercises a cross-lane-tile rotation on the exact (2, 256) shape used)."""
    global _ROLL_MODE
    if _ROLL_MODE is not None:
        return _ROLL_MODE

    def probe(x_ref, o_ref):
        o_ref[...] = pltpu.roll(x_ref[...], 131, axis=1)

    mode = 0
    try:
        x = jnp.tile(jnp.arange(256, dtype=jnp.float32)[None, :], (2, 1))
        y = pl.pallas_call(
            probe, out_shape=jax.ShapeDtypeStruct((2, 256), jnp.float32))(x)
        v = float(y[0, 0])
        if v == 125.0:      # out[0] = x[-131]  -> jnp.roll-like
            mode = 1
        elif v == 131.0:    # out[0] = x[131]   -> reversed
            mode = -1
    except Exception:
        mode = 0            # roll unavailable -> slice+concat fallback
    _ROLL_MODE = mode
    return mode


# ----------------------------------------------------------------------------
# Pallas kernel: full CBAM forward for one sample (grid step = one batch item).
# ----------------------------------------------------------------------------
def cbam_kernel(x_ref, w1_ref, b1_ref, w2_ref, rmask_ref, cmask_ref,
                wsp_ref, sh_ref, o_ref, *, width, roll_mode):
    x = x_ref[...]                                            # (C, HW) lane-dense f32
    C, HW = x.shape

    # ---------------- channel gate (SeModule) ----------------
    # Tiny 1x1 convs on the VPU (broadcast-multiply + reduce); orientations keep
    # C on sublanes throughout so se broadcasts into f1 with no relayout.
    pooled = jnp.sum(x, axis=1, keepdims=True) * (1.0 / HW)                   # (C, 1)
    hid = jnp.sum(w1_ref[...] * pooled, axis=0, keepdims=True) + b1_ref[...]  # (1, r)
    hid = jnp.maximum(hid, 0.0)                                               # ReLU (BN1 folded)
    se = leaky_hsig(jnp.sum(w2_ref[...] * hid, axis=1, keepdims=True))        # (C, 1)
    f1 = x * se                                               # F_1 = x * se(x)

    # ---------------- spatial gate ----------------
    cmax = jnp.max(f1, axis=0, keepdims=True)                 # (1, HW)
    cmean = jnp.sum(f1, axis=0, keepdims=True) * (1.0 / C)    # (1, HW)
    comp = jnp.concatenate([cmax, cmean], axis=0)             # (2, HW)

    rmask = rmask_ref[...]                                    # (7, HW)
    cmask = cmask_ref[...]                                    # (7, HW)

    # 7x7 conv (2->1 ch, pad=3) as 49 cyclic lane shifts + FMA.  Tap weights
    # (BN2 folded) come from SMEM; the row/col validity masks zero out every
    # contribution the cyclic shift wraps across an image edge (= zero padding).
    acc = jnp.zeros((1, HW), jnp.float32)
    t = 0
    for iy in range(7):            # static unroll: 49 taps, only a few live vregs
        for ix in range(7):
            off = (iy - 3) * width + (ix - 3)
            rolled = lane_shift(comp, off, HW, roll_mode)                 # (2, HW)
            tapped = (wsp_ref[2 * t] * rolled[0:1]
                      + wsp_ref[2 * t + 1] * rolled[1:2])                 # (1, HW)
            mask = rmask[iy:iy + 1, :] * cmask[ix:ix + 1, :]              # (1, HW)
            acc = acc + mask * tapped
            t += 1
    conv = acc + sh_ref[0]                                    # + folded BN2 shift

    hs = leaky_hsig(conv)
    scale = pl.reciprocal(1.0 + jnp.exp(-hs), approx=True)    # sigmoid on the EUP
    o_ref[...] = f1 * scale                                   # F_2 = F_1 * scale


# ----------------------------------------------------------------------------
# Wrapper: fold BN params, build validity masks, set up BlockSpecs / grid.
# ----------------------------------------------------------------------------
def cbam_forward(x, p):
    N, C, H, W = x.shape
    HW = H * W
    r = p["w1"].shape[0]

    # fold BN1 (eval mode) into the first 1x1 conv; orient (C, r) for the
    # in-kernel sublane-reduce matvec
    s1 = p["bn1_gamma"] / jnp.sqrt(p["bn1_var"] + BN_EPS)                  # (r,)
    w1_cr = (p["w1"] * s1[:, None]).T.astype(jnp.float32)                  # (C, r)
    b1 = (p["bn1_beta"] - p["bn1_mean"] * s1).reshape(1, r).astype(jnp.float32)
    w2_cr = p["w2"].astype(jnp.float32)                                    # (C, r)

    # fold BN2 (eval mode) into the 7x7 spatial conv; flatten tap weights for SMEM
    s2 = p["bn2_gamma"] / jnp.sqrt(p["bn2_var"] + BN_EPS)                  # (1,)
    shift2 = (p["bn2_beta"] - p["bn2_mean"] * s2).astype(jnp.float32)      # (1,)
    wsp_eff = (p["wsp"][0] * s2[0]).astype(jnp.float32)                    # (2, 7, 7)
    wsp_flat = jnp.transpose(wsp_eff, (1, 2, 0)).reshape(-1)               # (98,) [tap, ch]

    # zero-padding validity, factored as row-mask x col-mask (replaces the old
    # 100 KiB per-tap weight-mask tensor with ~14 KiB)
    pos = jnp.arange(HW, dtype=jnp.int32)
    row, col = pos // W, pos % W
    koff = jnp.arange(-3, 4, dtype=jnp.int32)
    rmask = ((row[None] + koff[:, None] >= 0)
             & (row[None] + koff[:, None] < H)).astype(jnp.float32)        # (7, HW)
    cmask = ((col[None] + koff[:, None] >= 0)
             & (col[None] + koff[:, None] < W)).astype(jnp.float32)        # (7, HW)

    x_flat = x.reshape(N, C, HW).astype(jnp.float32)          # lane-dense view

    kernel = functools.partial(cbam_kernel, width=W, roll_mode=_roll_mode())
    out = pl.pallas_call(
        kernel,
        out_shape=jax.ShapeDtypeStruct((N, C, HW), jnp.float32),
        grid_spec=pltpu.PrefetchScalarGridSpec(
            num_scalar_prefetch=0,
            grid=(N,),                                              # one sample / step
            in_specs=[
                pl.BlockSpec((None, C, HW), lambda n: (n, 0, 0)),   # x (lane-dense)
                pl.BlockSpec((C, r), lambda n: (0, 0)),             # w1 (BN1 folded)
                pl.BlockSpec((1, r), lambda n: (0, 0)),             # b1 (BN1 folded)
                pl.BlockSpec((C, r), lambda n: (0, 0)),             # w2
                pl.BlockSpec((7, HW), lambda n: (0, 0)),            # row validity mask
                pl.BlockSpec((7, HW), lambda n: (0, 0)),            # col validity mask
                pl.BlockSpec(memory_space=pltpu.MemorySpace.SMEM),  # 98 tap weights
                pl.BlockSpec(memory_space=pltpu.MemorySpace.SMEM),  # folded BN2 shift
            ],
            out_specs=pl.BlockSpec((None, C, HW), lambda n: (n, 0, 0)),
        ),
        compiler_params=pltpu.CompilerParams(
            dimension_semantics=("parallel",)),                     # v7x: 1 sample / TC
    )(x_flat, w1_cr, b1, w2_cr, rmask, cmask, wsp_flat, shift2)
    return out.reshape(N, C, H, W)


# ----------------------------------------------------------------------------
# Pure-JAX reference (inference-mode BN), for correctness checking.
# ----------------------------------------------------------------------------
def cbam_reference(x, p):
    # channel gate
    pooled = jnp.mean(x, axis=(2, 3))                                     # (N, C)
    hid = pooled @ p["w1"].T                                              # (N, r)
    hid = (hid - p["bn1_mean"]) / jnp.sqrt(p["bn1_var"] + BN_EPS) * p["bn1_gamma"] + p["bn1_beta"]
    hid = jnp.maximum(hid, 0.0)
    se = leaky_hsig(hid @ p["w2"].T)                                      # (N, C)
    f1 = x * se[:, :, None, None]
    # spatial gate
    cmax = jnp.max(f1, axis=1, keepdims=True)
    cmean = jnp.mean(f1, axis=1, keepdims=True)
    comp = jnp.concatenate([cmax, cmean], axis=1)                         # (N, 2, H, W)
    conv = jax.lax.conv_general_dilated(
        comp, p["wsp"], window_strides=(1, 1), padding=((3, 3), (3, 3)),
        dimension_numbers=("NCHW", "OIHW", "NCHW"))                       # (N, 1, H, W)
    conv = (conv - p["bn2_mean"][0]) / jnp.sqrt(p["bn2_var"][0] + BN_EPS) \
           * p["bn2_gamma"][0] + p["bn2_beta"][0]
    scale = jax.nn.sigmoid(leaky_hsig(conv))
    return f1 * scale


# ----------------------------------------------------------------------------
if __name__ == "__main__":
    # small shapes: batch=2, channels=16, 16x16 spatial; reduction=16 -> r = max(1, 8) = 8
    N, C, H, W = 2, 16, 16, 16
    reduction = 16
    r = max(C // reduction, 8)

    key = jax.random.PRNGKey(0)
    kx, k1, k2, k3, k4, k5, k6, k7, k8, k9, k10, k11 = jax.random.split(key, 12)

    x = jax.random.normal(kx, (N, C, H, W), dtype=jnp.float32)

    params = {
        # SeModule: Conv2d(C, r, 1), BN(r), Conv2d(r, C, 1)
        "w1": jax.random.normal(k1, (r, C), dtype=jnp.float32) * 0.3,
        "bn1_gamma": jax.random.uniform(k4, (r,), minval=0.8, maxval=1.2, dtype=jnp.float32),
        "bn1_beta": jax.random.normal(k5, (r,), dtype=jnp.float32) * 0.05,
        "bn1_mean": jax.random.normal(k6, (r,), dtype=jnp.float32) * 0.05,
        "bn1_var": jax.random.uniform(k7, (r,), minval=0.8, maxval=1.2, dtype=jnp.float32),
        "w2": jax.random.normal(k2, (C, r), dtype=jnp.float32) * 0.3,
        # SpatialGate: Conv2d(2, 1, 7, pad=3), BN(1)
        "wsp": jax.random.normal(k3, (1, 2, 7, 7), dtype=jnp.float32) * 0.2,
        "bn2_gamma": jax.random.uniform(k8, (1,), minval=0.8, maxval=1.2, dtype=jnp.float32),
        "bn2_beta": jax.random.normal(k9, (1,), dtype=jnp.float32) * 0.05,
        "bn2_mean": jax.random.normal(k10, (1,), dtype=jnp.float32) * 0.05,
        "bn2_var": jax.random.uniform(k11, (1,), minval=0.8, maxval=1.2, dtype=jnp.float32),
    }
    # TODO(synk): BatchNorm is reproduced in eval (running-stats) mode; PyTorch
    # train-mode batch statistics are not modeled.

    out = jax.block_until_ready(cbam_forward(x, params))
    ref = jax.block_until_ready(cbam_reference(x, params))

    assert out.shape == (N, C, H, W) and out.dtype == jnp.float32
    assert jnp.allclose(out, ref, atol=2e-3, rtol=2e-3), (
        f"mismatch: max abs err = {jnp.max(jnp.abs(out - ref))}")

    print("KERNEL_OK")
</pallas_src>

<mosaic_0001>
module attributes {stable_mosaic.version = 11 : i64} {
  func.func @probe(%arg0: memref<2x256xf32, #tpu.memory_space<vmem>>, %arg1: memref<2x256xf32, #tpu.memory_space<vmem>>) attributes {dimension_semantics = [], scalar_prefetch = 0 : i64, scratch_operands = 0 : i64, tpu.core_type = #tpu.core_type<tc>} {
    %c0 = arith.constant 0 : index
    %c0_0 = arith.constant 0 : index
    %0 = vector.load %arg0[%c0, %c0_0] : memref<2x256xf32, #tpu.memory_space<vmem>>, vector<2x256xf32>
    %c131_i32 = arith.constant 131 : i32
    %1 = tpu.dynamic_rotate %0 by %c131_i32 dim 1 : vector<2x256xf32>, i32 -> vector<2x256xf32>
    %c0_1 = arith.constant 0 : index
    %c0_2 = arith.constant 0 : index
    %2 = vector.load %arg1[%c0_1, %c0_2] : memref<2x256xf32, #tpu.memory_space<vmem>>, vector<2x256xf32>
    tpu.vector_store %arg1[%c0_1, %c0_2], %1 {strides = array<i32>} : memref<2x256xf32, #tpu.memory_space<vmem>>, vector<2x256xf32>,
    return
  }
}

module attributes {stable_mosaic.version = 11 : i64} {
  func.func @cbam_kernel(%arg0: i32, %arg1: memref<1x16x256xf32, #tpu.memory_space<vmem>>, %arg2: memref<16x8xf32, #tpu.memory_space<vmem>>, %arg3: memref<1x8xf32, #tpu.memory_space<vmem>>, %arg4: memref<16x8xf32, #tpu.memory_space<vmem>>, %arg5: memref<7x256xf32, #tpu.memory_space<vmem>>, %arg6: memref<7x256xf32, #tpu.memory_space<vmem>>, %arg7: memref<98xf32, #tpu.memory_space<smem>>, %arg8: memref<1xf32, #tpu.memory_space<smem>>, %arg9: memref<1x16x256xf32, #tpu.memory_space<vmem>>) attributes {dimension_semantics = [#tpu.dimension_semantics<parallel>], iteration_bounds = array<i64: 2>, scalar_prefetch = 0 : i64, scratch_operands = 0 : i64, tpu.core_type = #tpu.core_type<tc>, window_params = [{transform_indices = @transform_0, window_bounds = array<i64: 1, 16, 256>}, {pipeline_mode = #tpu.pipeline_mode<synchronous>, transform_indices = @transform_1, window_bounds = array<i64: 16, 8>}, {pipeline_mode = #tpu.pipeline_mode<synchronous>, transform_indices = @transform_2, window_bounds = array<i64: 1, 8>}, {pipeline_mode = #tpu.pipeline_mode<synchronous>, transform_indices = @transform_3, window_bounds = array<i64: 16, 8>}, {pipeline_mode = #tpu.pipeline_mode<synchronous>, transform_indices = @transform_4, window_bounds = array<i64: 7, 256>}, {pipeline_mode = #tpu.pipeline_mode<synchronous>, transform_indices = @transform_5, window_bounds = array<i64: 7, 256>}, {transform_indices = @transform_6, window_bounds = array<i64: 98>}, {transform_indices = @transform_7, window_bounds = array<i64: 1>}, {transform_indices = @transform_8, window_bounds = array<i64: 1, 16, 256>}]} {
    %c0 = arith.constant 0 : index
    %c0_0 = arith.constant 0 : index
    %c0_1 = arith.constant 0 : index
    %0 = vector.load %arg1[%c0, %c0_0, %c0_1] : memref<1x16x256xf32, #tpu.memory_space<vmem>>, vector<1x16x256xf32>
    %1 = vector.shape_cast %0 : vector<1x16x256xf32> to vector<16x256xf32>
    %cst = arith.constant dense<0.000000e+00> : vector<16xf32>
    %2 = vector.multi_reduction <add>, %1, %cst [1] : vector<16x256xf32> to vector<16xf32>
    %3 = vector.shape_cast %2 : vector<16xf32> to vector<16x1xf32>
    %cst_2 = arith.constant 3.906250e-03 : f32
    %4 = vector.broadcast %cst_2 : f32 to vector<16x1xf32>
    %5 = arith.mulf %3, %4 : vector<16x1xf32>
    %c0_3 = arith.constant 0 : index
    %c0_4 = arith.constant 0 : index
    %6 = vector.load %arg2[%c0_3, %c0_4] : memref<16x8xf32, #tpu.memory_space<vmem>>, vector<16x8xf32>
    %7 = vector.broadcast %5 : vector<16x1xf32> to vector<16x8xf32>
    %8 = arith.mulf %6, %7 : vector<16x8xf32>
    %cst_5 = arith.constant dense<0.000000e+00> : vector<8xf32>
    %9 = vector.multi_reduction <add>, %8, %cst_5 [0] : vector<16x8xf32> to vector<8xf32>
    %10 = vector.shape_cast %9 : vector<8xf32> to vector<1x8xf32>
    %c0_6 = arith.constant 0 : index
    %c0_7 = arith.constant 0 : index
    %11 = vector.load %arg3[%c0_6, %c0_7] : memref<1x8xf32, #tpu.memory_space<vmem>>, vector<1x8xf32>
    %12 = arith.addf %10, %11 : vector<1x8xf32>
    %cst_8 = arith.constant 0.000000e+00 : f32
    %13 = vector.broadcast %cst_8 : f32 to vector<1x8xf32>
    %14 = arith.maximumf %12, %13 : vector<1x8xf32>
    %c0_9 = arith.constant 0 : index
    %c0_10 = arith.constant 0 : index
    %15 = vector.load %arg4[%c0_9, %c0_10] : memref<16x8xf32, #tpu.memory_space<vmem>>, vector<16x8xf32>
    %16 = vector.broadcast %14 : vector<1x8xf32> to vector<16x8xf32>
    %17 = arith.mulf %15, %16 : vector<16x8xf32>
    %cst_11 = arith.constant dense<0.000000e+00> : vector<16xf32>
    %18 = vector.multi_reduction <add>, %17, %cst_11 [1] : vector<16x8xf32> to vector<16xf32>
    %19 = vector.shape_cast %18 : vector<16xf32> to vector<16x1xf32>
    %cst_12 = arith.constant 3.000000e+00 : f32
    %20 = vector.broadcast %cst_12 : f32 to vector<16x1xf32>
    %21 = arith.addf %19, %20 : vector<16x1xf32>
    %cst_13 = arith.constant 1.000000e-03 : f32
    %22 = vector.broadcast %cst_13 : f32 to vector<16x1xf32>
    %23 = arith.mulf %22, %21 : vector<16x1xf32>
    %24 = arith.maximumf %23, %21 : vector<16x1xf32>
    %cst_14 = arith.constant 6.000000e+00 : f32
    %25 = vector.broadcast %cst_14 : f32 to vector<16x1xf32>
    %26 = arith.minimumf %25, %24 : vector<16x1xf32>
    %cst_15 = arith.constant 0.166666672 : f32
    %27 = vector.broadcast %cst_15 : f32 to vector<16x1xf32>
    %28 = arith.mulf %26, %27 : vector<16x1xf32>
    %29 = vector.broadcast %28 : vector<16x1xf32> to vector<16x256xf32>
    %30 = arith.mulf %1, %29 : vector<16x256xf32>
    %cst_16 = arith.constant dense<0xFF800000> : vector<256xf32>
    %31 = vector.multi_reduction <maximumf>, %30, %cst_16 [0] : vector<16x256xf32> to vector<256xf32>
    %32 = vector.shape_cast %31 : vector<256xf32> to vector<1x256xf32>
    %cst_17 = arith.constant dense<0.000000e+00> : vector<256xf32>
    %33 = vector.multi_reduction <add>, %30, %cst_17 [0] : vector<16x256xf32> to vector<256xf32>
    %34 = vector.shape_cast %33 : vector<256xf32> to vector<1x256xf32>
    %cst_18 = arith.constant 6.250000e-02 : f32
    %35 = vector.broadcast %cst_18 : f32 to vector<1x256xf32>
    %36 = arith.mulf %34, %35 : vector<1x256xf32>
    %37 = tpu.concatenate %32, %36 in 0 : vector<1x256xf32>, vector<1x256xf32> -> vector<2x256xf32>
    %c0_19 = arith.constant 0 : index
    %c0_20 = arith.constant 0 : index
    %38 = vector.load %arg5[%c0_19, %c0_20] : memref<7x256xf32, #tpu.memory_space<vmem>>, vector<7x256xf32>
    %c0_21 = arith.constant 0 : index
    %c0_22 = arith.constant 0 : index
    %39 = vector.load %arg6[%c0_21, %c0_22] : memref<7x256xf32, #tpu.memory_space<vmem>>, vector<7x256xf32>
    %cst_23 = arith.constant 0.000000e+00 : f32
    %40 = vector.broadcast %cst_23 : f32 to vector<1x256xf32>
    %41 = vector.extract_strided_slice %37 {offsets = [0, 205], sizes = [2, 51], strides = [1, 1]} : vector<2x256xf32> to vector<2x51xf32>
    %42 = vector.extract_strided_slice %37 {offsets = [0, 0], sizes = [2, 205], strides = [1, 1]} : vector<2x256xf32> to vector<2x205xf32>
    %43 = tpu.concatenate %41, %42 in 1 : vector<2x51xf32>, vector<2x205xf32> -> vector<2x256xf32>
    %c0_24 = arith.constant 0 : index
    %44 = memref.load %arg7[%c0_24] : memref<98xf32, #tpu.memory_space<smem>>
    %45 = vector.extract_strided_slice %43 {offsets = [0, 0], sizes = [1, 256], strides = [1, 1]} : vector<2x256xf32> to vector<1x256xf32>
    %46 = vector.broadcast %44 : f32 to vector<1x256xf32>
    %47 = arith.mulf %46, %45 : vector<1x256xf32>
    %c1 = arith.constant 1 : index
    %48 = memref.load %arg7[%c1] : memref<98xf32, #tpu.memory_space<smem>>
    %49 = vector.extract_strided_slice %43 {offsets = [1, 0], sizes = [1, 256], strides = [1, 1]} : vector<2x256xf32> to vector<1x256xf32>
    %50 = vector.broadcast %48 : f32 to vector<1x256xf32>
    %51 = arith.mulf %50, %49 : vector<1x256xf32>
    %52 = arith.addf %47, %51 : vector<1x256xf32>
    %53 = vector.extract_strided_slice %38 {offsets = [0, 0], sizes = [1, 256], strides = [1, 1]} : vector<7x256xf32> to vector<1x256xf32>
    %54 = vector.extract_strided_slice %39 {offsets = [0, 0], sizes = [1, 256], strides = [1, 1]} : vector<7x256xf32> to vector<1x256xf32>
    %55 = arith.mulf %53, %54 : vector<1x256xf32>
    %56 = arith.mulf %55, %52 : vector<1x256xf32>
    %57 = arith.addf %40, %56 : vector<1x256xf32>
    %58 = vector.extract_strided_slice %37 {offsets = [0, 206], sizes = [2, 50], strides = [1, 1]} : vector<2x256xf32> to vector<2x50xf32>
    %59 = vector.extract_strided_slice %37 {offsets = [0, 0], sizes = [2, 206], strides = [1, 1]} : vector<2x256xf32> to vector<2x206xf32>
    %60 = tpu.concatenate %58, %59 in 1 : vector<2x50xf32>, vector<2x206xf32> -> vector<2x256xf32>
    %c2 = arith.constant 2 : index
    %61 = memref.load %arg7[%c2] : memref<98xf32, #tpu.memory_space<smem>>
    %62 = vector.extract_strided_slice %60 {offsets = [0, 0], sizes = [1, 256], strides = [1, 1]} : vector<2x256xf32> to vector<1x256xf32>
    %63 = vector.broadcast %61 : f32 to vector<1x256xf32>
    %64 = arith.mulf %63, %62 : vector<1x256xf32>
    %c3 = arith.constant 3 : index
    %65 = memref.load %arg7[%c3] : memref<98xf32, #tpu.memory_space<smem>>
    %66 = vector.extract_strided_slice %60 {offsets = [1, 0], sizes = [1, 256], strides = [1, 1]} : vector<2x256xf32> to vector<1x256xf32>
    %67 = vector.broadcast %65 : f32 to vector<1x256xf32>
    %68 = arith.mulf %67, %66 : vector<1x256xf32>
    %69 = arith.addf %64, %68 : vector<1x256xf32>
    %70 = vector.extract_strided_slice %38 {offsets = [0, 0], sizes = [1, 256], strides = [1, 1]} : vector<7x256xf32> to vector<1x256xf32>
    %71 = vector.extract_strided_slice %39 {offsets = [1, 0], sizes = [1, 256], strides = [1, 1]} : vector<7x256xf32> to vector<1x256xf32>
    %72 = arith.mulf %70, %71 : vector<1x256xf32>
    %73 = arith.mulf %72, %69 : vector<1x256xf32>
    %74 = arith.addf %57, %73 : vector<1x256xf32>
    %75 = vector.extract_strided_slice %37 {offsets = [0, 207], sizes = [2, 49], strides = [1, 1]} : vector<2x256xf32> to vector<2x49xf32>
    %76 = vector.extract_strided_slice %37 {offsets = [0, 0], sizes = [2, 207], strides = [1, 1]} : vector<2x256xf32> to vector<2x207xf32>
    %77 = tpu.concatenate %75, %76 in 1 : vector<2x49xf32>, vector<2x207xf32> -> vector<2x256xf32>
    %c4 = arith.constant 4 : index
    %78 = memref.load %arg7[%c4] : memref<98xf32, #tpu.memory_space<smem>>
    %79 = vector.extract_strided_slice %77 {offsets = [0, 0], sizes = [1, 256], strides = [1, 1]} : vector<2x256xf32> to vector<1x256xf32>
    %80 = vector.broadcast %78 : f32 to vector<1x256xf32>
    %81 = arith.mulf %80, %79 : vector<1x256xf32>
    %c5 = arith.constant 5 : index
    %82 = memref.load %arg7[%c5] : memref<98xf32, #tpu.memory_space<smem>>
    %83 = vector.extract_strided_slice %77 {offsets = [1, 0], sizes = [1, 256], strides = [1, 1]} : vector<2x256xf32> to vector<1x256xf32>
    %84 = vector.broadcast %82 : f32 to vector<1x256xf32>
    %85 = arith.mulf %84, %83 : vector<1x256xf32>
    %86 = arith.addf %81, %85 : vector<1x256xf32>
    %87 = vector.extract_strided_slice %38 {offsets = [0, 0], sizes = [1, 256], strides = [1, 1]} : vector<7x256xf32> to vector<1x256xf32>
    %88 = vector.extract_strided_slice %39 {offsets = [2, 0], sizes = [1, 256], strides = [1, 1]} : vector<7x256xf32> to vector<1x256xf32>
    %89 = arith.mulf %87, %88 : vector<1x256xf32>
    %90 = arith.mulf %89, %86 : vector<1x256xf32>
    %91 = arith.addf %74, %90 : vector<1x256xf32>
    %92 = vector.extract_strided_slice %37 {offsets = [0, 208], sizes = [2, 48], strides = [1, 1]} : vector<2x256xf32> to vector<2x48xf32>
    %93 = vector.extract_strided_slice %37 {offsets = [0, 0], sizes = [2, 208], strides = [1, 1]} : vector<2x256xf32> to vector<2x208xf32>
    %94 = tpu.concatenate %92, %93 in 1 : vector<2x48xf32>, vector<2x208xf32> -> vector<2x256xf32>
    %c6 = arith.constant 6 : index
    %95 = memref.load %arg7[%c6] : memref<98xf32, #tpu.memory_space<smem>>
    %96 = vector.extract_strided_slice %94 {offsets = [0, 0], sizes = [1, 256], strides = [1, 1]} : vector<2x256xf32> to vector<1x256xf32>
    %97 = vector.broadcast %95 : f32 to vector<1x256xf32>
    %98 = arith.mulf %97, %96 : vector<1x256xf32>
    %c7 = arith.constant 7 : index
    %99 = memref.load %arg7[%c7] : memref<98xf32, #tpu.memory_space<smem>>
    %100 = vector.extract_strided_slice %94 {offsets = [1, 0], sizes = [1, 256], strides = [1, 1]} : vector<2x256xf32> to vector<1x256xf32>
    %101 = vector.broadcast %99 : f32 to vector<1x256xf32>
    %102 = arith.mulf %101, %100 : vector<1x256xf32>
    %103 = arith.addf %98, %102 : vector<1x256xf32>
    %104 = vector.extract_strided_slice %38 {offsets = [0, 0], sizes = [1, 256], strides = [1, 1]} : vector<7x256xf32> to vector<1x256xf32>
    %105 = vector.extract_strided_slice %39 {offsets = [3, 0], sizes = [1, 256], strides = [1, 1]} : vector<7x256xf32> to vector<1x256xf32>
    %106 = arith.mulf %104, %105 : vector<1x256xf32>
    %107 = arith.mulf %106, %103 : vector<1x256xf32>
    %108 = arith.addf %91, %107 : vector<1x256xf32>
    %109 = vector.extract_strided_slice %37 {offsets = [0, 209], sizes = [2, 47], strides = [1, 1]} : vector<2x256xf32> to vector<2x47xf32>
    %110 = vector.extract_strided_slice %37 {offsets = [0, 0], sizes = [2, 209], strides = [1, 1]} : vector<2x256xf32> to vector<2x209xf32>
    %111 = tpu.concatenate %109, %110 in 1 : vector<2x47xf32>, vector<2x209xf32> -> vector<2x256xf32>
    %c8 = arith.constant 8 : index
    %112 = memref.load %arg7[%c8] : memref<98xf32, #tpu.memory_space<smem>>
    %113 = vector.extract_strided_slice %111 {offsets = [0, 0], sizes = [1, 256], strides = [1, 1]} : vector<2x256xf32> to vector<1x256xf32>
    %114 = vector.broadcast %112 : f32 to vector<1x256xf32>
    %115 = arith.mulf %114, %113 : vector<1x256xf32>
    %c9 = arith.constant 9 : index
    %116 = memref.load %arg7[%c9] : memref<98xf32, #tpu.memory_space<smem>>
    %117 = vector.extract_strided_slice %111 {offsets = [1, 0], sizes = [1, 256], strides = [1, 1]} : vector<2x256xf32> to vector<1x256xf32>
    %118 = vector.broadcast %116 : f32 to vector<1x256xf32>
    %119 = arith.mulf %118, %117 : vector<1x256xf32>
    %120 = arith.addf %115, %119 : vector<1x256xf32>
    %121 = vector.extract_strided_slice %38 {offsets = [0, 0], sizes = [1, 256], strides = [1, 1]} : vector<7x256xf32> to vector<1x256xf32>
    %122 = vector.extract_strided_slice %39 {offsets = [4, 0], sizes = [1, 256], strides = [1, 1]} : vector<7x256xf32> to vector<1x256xf32>
    %123 = arith.mulf %121, %122 : vector<1x256xf32>
    %124 = arith.mulf %123, %120 : vector<1x256xf32>
    %125 = arith.addf %108, %124 : vector<1x256xf32>
    %126 = vector.extract_strided_slice %37 {offsets = [0, 210], sizes = [2, 46], strides = [1, 1]} : vector<2x256xf32> to vector<2x46xf32>
    %127 = vector.extract_strided_slice %37 {offsets = [0, 0], sizes = [2, 210], strides = [1, 1]} : vector<2x256xf32> to vector<2x210xf32>
    %128 = tpu.concatenate %126, %127 in 1 : vector<2x46xf32>, vector<2x210xf32> -> vector<2x256xf32>
    %c10 = arith.constant 10 : index
    %129 = memref.load %arg7[%c10] : memref<98xf32, #tpu.memory_space<smem>>
    %130 = vector.extract_strided_slice %128 {offsets = [0, 0], sizes = [1, 256], strides = [1, 1]} : vector<2x256xf32> to vector<1x256xf32>
    %131 = vector.broadcast %129 : f32 to vector<1x256xf32>
    %132 = arith.mulf %131, %130 : vector<1x256xf32>
    %c11 = arith.constant 11 : index
    %133 = memref.load %arg7[%c11] : memref<98xf32, #tpu.memory_space<smem>>
    %134 = vector.extract_strided_slice %128 {offsets = [1, 0], sizes = [1, 256], strides = [1, 1]} : vector<2x256xf32> to vector<1x256xf32>
    %135 = vector.broadcast %133 : f32 to vector<1x256xf32>
    %136 = arith.mulf %135, %134 : vector<1x256xf32>
    %137 = arith.addf %132, %136 : vector<1x256xf32>
    %138 = vector.extract_strided_slice %38 {offsets = [0, 0], sizes = [1, 256], strides = [1, 1]} : vector<7x256xf32> to vector<1x256xf32>
    %139 = vector.extract_strided_slice %39 {offsets = [5, 0], sizes = [1, 256], strides = [1, 1]} : vector<7x256xf32> to vector<1x256xf32>
    %140 = arith.mulf %138, %139 : vector<1x256xf32>
    %141 = arith.mulf %140, %137 : vector<1x256xf32>
    %142 = arith.addf %125, %141 : vector<1x256xf32>
    %143 = vector.extract_strided_slice %37 {offsets = [0, 211], sizes = [2, 45], strides = [1, 1]} : vector<2x256xf32> to vector<2x45xf32>
    %144 = vector.extract_strided_slice %37 {offsets = [0, 0], sizes = [2, 211], strides = [1, 1]} : vector<2x256xf32> to vector<2x211xf32>
    %145 = tpu.concatenate %143, %144 in 1 : vector<2x45xf32>, vector<2x211xf32> -> vector<2x256xf32>
    %c12 = arith.constant 12 : index
    %146 = memref.load %arg7[%c12] : memref<98xf32, #tpu.memory_space<smem>>
    %147 = vector.extract_strided_slice %145 {offsets = [0, 0], sizes = [1, 256], strides = [1, 1]} : vector<2x256xf32> to vector<1x256xf32>
    %148 = vector.broadcast %146 : f32 to vector<1x256xf32>
    %149 = arith.mulf %148, %147 : vector<1x256xf32>
    %c13 = arith.constant 13 : index
    %150 = memref.load %arg7[%c13] : memref<98xf32, #tpu.memory_space<smem>>
    %151 = vector.extract_strided_slice %145 {offsets = [1, 0], sizes = [1, 256], strides = [1, 1]} : vector<2x256xf32> to vector<1x256xf32>
    %152 = vector.broadcast %150 : f32 to vector<1x256xf32>
    %153 = arith.mulf %152, %151 : vector<1x256xf32>
    %154 = arith.addf %149, %153 : vector<1x256xf32>
    %155 = vector.extract_strided_slice %38 {offsets = [0, 0], sizes = [1, 256], strides = [1, 1]} : vector<7x256xf32> to vector<1x256xf32>
    %156 = vector.extract_strided_slice %39 {offsets = [6, 0], sizes = [1, 256], strides = [1, 1]} : vector<7x256xf32> to vector<1x256xf32>
    %157 = arith.mulf %155, %156 : vector<1x256xf32>
    %158 = arith.mulf %157, %154 : vector<1x256xf32>
    %159 = arith.addf %142, %158 : vector<1x256xf32>
    %160 = vector.extract_strided_slice %37 {offsets = [0, 221], sizes = [2, 35], strides = [1, 1]} : vector<2x256xf32> to vector<2x35xf32>
    %161 = vector.extract_strided_slice %37 {offsets = [0, 0], sizes = [2, 221], strides = [1, 1]} : vector<2x256xf32> to vector<2x221xf32>
    %162 = tpu.concatenate %160, %161 in 1 : vector<2x35xf32>, vector<2x221xf32> -> vector<2x256xf32>
    %c14 = arith.constant 14 : index
    %163 = memref.load %arg7[%c14] : memref<98xf32, #tpu.memory_space<smem>>
    %164 = vector.extract_strided_slice %162 {offsets = [0, 0], sizes = [1, 256], strides = [1, 1]} : vector<2x256xf32> to vector<1x256xf32>
    %165 = vector.broadcast %163 : f32 to vector<1x256xf32>
    %166 = arith.mulf %165, %164 : vector<1x256xf32>
    %c15 = arith.constant 15 : index
    %167 = memref.load %arg7[%c15] : memref<98xf32, #tpu.memory_space<smem>>
    %168 = vector.extract_strided_slice %162 {offsets = [1, 0], sizes = [1, 256], strides = [1, 1]} : vector<2x256xf32> to vector<1x256xf32>
    %169 = vector.broadcast %167 : f32 to vector<1x256xf32>
    %170 = arith.mulf %169, %168 : vector<1x256xf32>
    %171 = arith.addf %166, %170 : vector<1x256xf32>
    %172 = vector.extract_strided_slice %38 {offsets = [1, 0], sizes = [1, 256], strides = [1, 1]} : vector<7x256xf32> to vector<1x256xf32>
    %173 = vector.extract_strided_slice %39 {offsets = [0, 0], sizes = [1, 256], strides = [1, 1]} : vector<7x256xf32> to vector<1x256xf32>
    %174 = arith.mulf %172, %173 : vector<1x256xf32>
    %175 = arith.mulf %174, %171 : vector<1x256xf32>
    %176 = arith.addf %159, %175 : vector<1x256xf32>
    %177 = vector.extract_strided_slice %37 {offsets = [0, 222], sizes = [2, 34], strides = [1, 1]} : vector<2x256xf32> to vector<2x34xf32>
    %178 = vector.extract_strided_slice %37 {offsets = [0, 0], sizes = [2, 222], strides = [1, 1]} : vector<2x256xf32> to vector<2x222xf32>
    %179 = tpu.concatenate %177, %178 in 1 : vector<2x34xf32>, vector<2x222xf32> -> vector<2x256xf32>
    %c16 = arith.constant 16 : index
    %180 = memref.load %arg7[%c16] : memref<98xf32, #tpu.memory_space<smem>>
    %181 = vector.extract_strided_slice %179 {offsets = [0, 0], sizes = [1, 256], strides = [1, 1]} : vector<2x256xf32> to vector<1x256xf32>
    %182 = vector.broadcast %180 : f32 to vector<1x256xf32>
    %183 = arith.mulf %182, %181 : vector<1x256xf32>
    %c17 = arith.constant 17 : index
    %184 = memref.load %arg7[%c17] : memref<98xf32, #tpu.memory_space<smem>>
    %185 = vector.extract_strided_slice %179 {offsets = [1, 0], sizes = [1, 256], strides = [1, 1]} : vector<2x256xf32> to vector<1x256xf32>
    %186 = vector.broadcast %184 : f32 to vector<1x256xf32>
    %187 = arith.mulf %186, %185 : vector<1x256xf32>
    %188 = arith.addf %183, %187 : vector<1x256xf32>
    %189 = vector.extract_strided_slice %38 {offsets = [1, 0], sizes = [1, 256], strides = [1, 1]} : vector<7x256xf32> to vector<1x256xf32>
    %190 = vector.extract_strided_slice %39 {offsets = [1, 0], sizes = [1, 256], strides = [1, 1]} : vector<7x256xf32> to vector<1x256xf32>
    %191 = arith.mulf %189, %190 : vector<1x256xf32>
    %192 = arith.mulf %191, %188 : vector<1x256xf32>
    %193 = arith.addf %176, %192 : vector<1x256xf32>
    %194 = vector.extract_strided_slice %37 {offsets = [0, 223], sizes = [2, 33], strides = [1, 1]} : vector<2x256xf32> to vector<2x33xf32>
    %195 = vector.extract_strided_slice %37 {offsets = [0, 0], sizes = [2, 223], strides = [1, 1]} : vector<2x256xf32> to vector<2x223xf32>
    %196 = tpu.concatenate %194, %195 in 1 : vector<2x33xf32>, vector<2x223xf32> -> vector<2x256xf32>
    %c18 = arith.constant 18 : index
    %197 = memref.load %arg7[%c18] : memref<98xf32, #tpu.memory_space<smem>>
    %198 = vector.extract_strided_slice %196 {offsets = [0, 0], sizes = [1, 256], strides = [1, 1]} : vector<2x256xf32> to vector<1x256xf32>
    %199 = vector.broadcast %197 : f32 to vector<1x256xf32>
    %200 = arith.mulf %199, %198 : vector<1x256xf32>
    %c19 = arith.constant 19 : index
    %201 = memref.load %arg7[%c19] : memref<98xf32, #tpu.memory_space<smem>>
    %202 = vector.extract_strided_slice %196 {offsets = [1, 0], sizes = [1, 256], strides = [1, 1]} : vector<2x256xf32> to vector<1x256xf32>
    %203 = vector.broadcast %201 : f32 to vector<1x256xf32>
    %204 = arith.mulf %203, %202 : vector<1x256xf32>
    %205 = arith.addf %200, %204 : vector<1x256xf32>
    %206 = vector.extract_strided_slice %38 {offsets = [1, 0], sizes = [1, 256], strides = [1, 1]} : vector<7x256xf32> to vector<1x256xf32>
    %207 = vector.extract_strided_slice %39 {offsets = [2, 0], sizes = [1, 256], strides = [1, 1]} : vector<7x256xf32> to vector<1x256xf32>
    %208 = arith.mulf %206, %207 : vector<1x256xf32>
    %209 = arith.mulf %208, %205 : vector<1x256xf32>
    %210 = arith.addf %193, %209 : vector<1x256xf32>
    %211 = vector.extract_strided_slice %37 {offsets = [0, 224], sizes = [2, 32], strides = [1, 1]} : vector<2x256xf32> to vector<2x32xf32>
    %212 = vector.extract_strided_slice %37 {offsets = [0, 0], sizes = [2, 224], strides = [1, 1]} : vector<2x256xf32> to vector<2x224xf32>
    %213 = tpu.concatenate %211, %212 in 1 : vector<2x32xf32>, vector<2x224xf32> -> vector<2x256xf32>
    %c20 = arith.constant 20 : index
    %214 = memref.load %arg7[%c20] : memref<98xf32, #tpu.memory_space<smem>>
    %215 = vector.extract_strided_slice %213 {offsets = [0, 0], sizes = [1, 256], strides = [1, 1]} : vector<2x256xf32> to vector<1x256xf32>
    %216 = vector.broadcast %214 : f32 to vector<1x256xf32>
    %217 = arith.mulf %216, %215 : vector<1x256xf32>
    %c21 = arith.constant 21 : index
    %218 = memref.load %arg7[%c21] : memref<98xf32, #tpu.memory_space<smem>>
    %219 = vector.extract_strided_slice %213 {offsets = [1, 0], sizes = [1, 256], strides = [1, 1]} : vector<2x256xf32> to vector<1x256xf32>
    %220 = vector.broadcast %218 : f32 to vector<1x256xf32>
    %221 = arith.mulf %220, %219 : vector<1x256xf32>
    %222 = arith.addf %217, %221 : vector<1x256xf32>
    %223 = vector.extract_strided_slice %38 {offsets = [1, 0], sizes = [1, 256], strides = [1, 1]} : vector<7x256xf32> to vector<1x256xf32>
    %224 = vector.extract_strided_slice %39 {offsets = [3, 0], sizes = [1, 256], strides = [1, 1]} : vector<7x256xf32> to vector<1x256xf32>
    %225 = arith.mulf %223, %224 : vector<1x256xf32>
    %226 = arith.mulf %225, %222 : vector<1x256xf32>
    %227 = arith.addf %210, %226 : vector<1x256xf32>
    %228 = vector.extract_strided_slice %37 {offsets = [0, 225], sizes = [2, 31], strides = [1, 1]} : vector<2x256xf32> to vector<2x31xf32>
    %229 = vector.extract_strided_slice %37 {offsets = [0, 0], sizes = [2, 225], strides = [1, 1]} : vector<2x256xf32> to vector<2x225xf32>
    %230 = tpu.concatenate %228, %229 in 1 : vector<2x31xf32>, vector<2x225xf32> -> vector<2x256xf32>
    %c22 = arith.constant 22 : index
    %231 = memref.load %arg7[%c22] : memref<98xf32, #tpu.memory_space<smem>>
    %232 = vector.extract_strided_slice %230 {offsets = [0, 0], sizes = [1, 256], strides = [1, 1]} : vector<2x256xf32> to vector<1x256xf32>
    %233 = vector.broadcast %231 : f32 to vector<1x256xf32>
    %234 = arith.mulf %233, %232 : vector<1x256xf32>
    %c23 = arith.constant 23 : index
    %235 = memref.load %arg7[%c23] : memref<98xf32, #tpu.memory_space<smem>>
    %236 = vector.extract_strided_slice %230 {offsets = [1, 0], sizes = [1, 256], strides = [1, 1]} : vector<2x256xf32> to vector<1x256xf32>
    %237 = vector.broadcast %235 : f32 to vector<1x256xf32>
    %238 = arith.mulf %237, %236 : vector<1x256xf32>
    %239 = arith.addf %234, %238 : vector<1x256xf32>
    %240 = vector.extract_strided_slice %38 {offsets = [1, 0], sizes = [1, 256], strides = [1, 1]} : vector<7x256xf32> to vector<1x256xf32>
    %241 = vector.extract_strided_slice %39 {offsets = [4, 0], sizes = [1, 256], strides = [1, 1]} : vector<7x256xf32> to vector<1x256xf32>
    %242 = arith.mulf %240, %241 : vector<1x256xf32>
    %243 = arith.mulf %242, %239 : vector<1x256xf32>
    %244 = arith.addf %227, %243 : vector<1x256xf32>
    %245 = vector.extract_strided_slice %37 {offsets = [0, 226], sizes = [2, 30], strides = [1, 1]} : vector<2x256xf32> to vector<2x30xf32>
    %246 = vector.extract_strided_slice %37 {offsets = [0, 0], sizes = [2, 226], strides = [1, 1]} : vector<2x256xf32> to vector<2x226xf32>
    %247 = tpu.concatenate %245, %246 in 1 : vector<2x30xf32>, vector<2x226xf32> -> vector<2x256xf32>
    %c24 = arith.constant 24 : index
    %248 = memref.load %arg7[%c24] : memref<98xf32, #tpu.memory_space<smem>>
    %249 = vector.extract_strided_slice %247 {offsets = [0, 0], sizes = [1, 256], strides = [1, 1]} : vector<2x256xf32> to vector<1x256xf32>
    %250 = vector.broadcast %248 : f32 to vector<1x256xf32>
    %251 = arith.mulf %250, %249 : vector<1x256xf32>
    %c25 = arith.constant 25 : index
    %252 = memref.load %arg7[%c25] : memref<98xf32, #tpu.memory_space<smem>>
    %253 = vector.extract_strided_slice %247 {offsets = [1, 0], sizes = [1, 256], strides = [1, 1]} : vector<2x256xf32> to vector<1x256xf32>
    %254 = vector.broadcast %252 : f32 to vector<1x256xf32>
    %255 = arith.mulf %254, %253 : vector<1x256xf32>
    %256 = arith.addf %251, %255 : vector<1x256xf32>
    %257 = vector.extract_strided_slice %38 {offsets = [1, 0], sizes = [1, 256], strides = [1, 1]} : vector<7x256xf32> to vector<1x256xf32>
    %258 = vector.extract_strided_slice %39 {offsets = [5, 0], sizes = [1, 256], strides = [1, 1]} : vector<7x256xf32> to vector<1x256xf32>
    %259 = arith.mulf %257, %258 : vector<1x256xf32>
    %260 = arith.mulf %259, %256 : vector<1x256xf32>
    %261 = arith.addf %244, %260 : vector<1x256xf32>
    %262 = vector.extract_strided_slice %37 {offsets = [0, 227], sizes = [2, 29], strides = [1, 1]} : vector<2x256xf32> to vector<2x29xf32>
    %263 = vector.extract_strided_slice %37 {offsets = [0, 0], sizes = [2, 227], strides = [1, 1]} : vector<2x256xf32> to vector<2x227xf32>
    %264 = tpu.concatenate %262, %263 in 1 : vector<2x29xf32>, vector<2x227xf32> -> vector<2x256xf32>
    %c26 = arith.constant 26 : index
    %265 = memref.load %arg7[%c26] : memref<98xf32, #tpu.memory_space<smem>>
    %266 = vector.extract_strided_slice %264 {offsets = [0, 0], sizes = [1, 256], strides = [1, 1]} : vector<2x256xf32> to vector<1x256xf32>
    %267 = vector.broadcast %265 : f32 to vector<1x256xf32>
    %268 = arith.mulf %267, %266 : vector<1x256xf32>
    %c27 = arith.constant 27 : index
    %269 = memref.load %arg7[%c27] : memref<98xf32, #tpu.memory_space<smem>>
    %270 = vector.extract_strided_slice %264 {offsets = [1, 0], sizes = [1, 256], strides = [1, 1]} : vector<2x256xf32> to vector<1x256xf32>
    %271 = vector.broadcast %269 : f32 to vector<1x256xf32>
    %272 = arith.mulf %271, %270 : vector<1x256xf32>
    %273 = arith.addf %268, %272 : vector<1x256xf32>
    %274 = vector.extract_strided_slice %38 {offsets = [1, 0], sizes = [1, 256], strides = [1, 1]} : vector<7x256xf32> to vector<1x256xf32>
    %275 = vector.extract_strided_slice %39 {offsets = [6, 0], sizes = [1, 256], strides = [1, 1]} : vector<7x256xf32> to vector<1x256xf32>
    %276 = arith.mulf %274, %275 : vector<1x256xf32>
    %277 = arith.mulf %276, %273 : vector<1x256xf32>
    %278 = arith.addf %261, %277 : vector<1x256xf32>
    %279 = vector.extract_strided_slice %37 {offsets = [0, 237], sizes = [2, 19], strides = [1, 1]} : vector<2x256xf32> to vector<2x19xf32>
    %280 = vector.extract_strided_slice %37 {offsets = [0, 0], sizes = [2, 237], strides = [1, 1]} : vector<2x256xf32> to vector<2x237xf32>
    %281 = tpu.concatenate %279, %280 in 1 : vector<2x19xf32>, vector<2x237xf32> -> vector<2x256xf32>
    %c28 = arith.constant 28 : index
    %282 = memref.load %arg7[%c28] : memref<98xf32, #tpu.memory_space<smem>>
    %283 = vector.extract_strided_slice %281 {offsets = [0, 0], sizes = [1, 256], strides = [1, 1]} : vector<2x256xf32> to vector<1x256xf32>
    %284 = vector.broadcast %282 : f32 to vector<1x256xf32>
    %285 = arith.mulf %284, %283 : vector<1x256xf32>
    %c29 = arith.constant 29 : index
    %286 = memref.load %arg7[%c29] : memref<98xf32, #tpu.memory_space<smem>>
    %287 = vector.extract_strided_slice %281 {offsets = [1, 0], sizes = [1, 256], strides = [1, 1]} : vector<2x256xf32> to vector<1x256xf32>
    %288 = vector.broadcast %286 : f32 to vector<1x256xf32>
    %289 = arith.mulf %288, %287 : vector<1x256xf32>
    %290 = arith.addf %285, %289 : vector<1x256xf32>
    %291 = vector.extract_strided_slice %38 {offsets = [2, 0], sizes = [1, 256], strides = [1, 1]} : vector<7x256xf32> to vector<1x256xf32>
    %292 = vector.extract_strided_slice %39 {offsets = [0, 0], sizes = [1, 256], strides = [1, 1]} : vector<7x256xf32> to vector<1x256xf32>
    %293 = arith.mulf %291, %292 : vector<1x256xf32>
    %294 = arith.mulf %293, %290 : vector<1x256xf32>
    %295 = arith.addf %278, %294 : vector<1x256xf32>
    %296 = vector.extract_strided_slice %37 {offsets = [0, 238], sizes = [2, 18], strides = [1, 1]} : vector<2x256xf32> to vector<2x18xf32>
    %297 = vector.extract_strided_slice %37 {offsets = [0, 0], sizes = [2, 238], strides = [1, 1]} : vector<2x256xf32> to vector<2x238xf32>
    %298 = tpu.concatenate %296, %297 in 1 : vector<2x18xf32>, vector<2x238xf32> -> vector<2x256xf32>
    %c30 = arith.constant 30 : index
    %299 = memref.load %arg7[%c30] : memref<98xf32, #tpu.memory_space<smem>>
    %300 = vector.extract_strided_slice %298 {offsets = [0, 0], sizes = [1, 256], strides = [1, 1]} : vector<2x256xf32> to vector<1x256xf32>
    %301 = vector.broadcast %299 : f32 to vector<1x256xf32>
    %302 = arith.mulf %301, %300 : vector<1x256xf32>
    %c31 = arith.constant 31 : index
    %303 = memref.load %arg7[%c31] : memref<98xf32, #tpu.memory_space<smem>>
    %304 = vector.extract_strided_slice %298 {offsets = [1, 0], sizes = [1, 256], strides = [1, 1]} : vector<2x256xf32> to vector<1x256xf32>
    %305 = vector.broadcast %303 : f32 to vector<1x256xf32>
    %306 = arith.mulf %305, %304 : vector<1x256xf32>
    %307 = arith.addf %302, %306 : vector<1x256xf32>
    %308 = vector.extract_strided_slice %38 {offsets = [2, 0], sizes = [1, 256], strides = [1, 1]} : vector<7x256xf32> to vector<1x256xf32>
    %309 = vector.extract_strided_slice %39 {offsets = [1, 0], sizes = [1, 256], strides = [1, 1]} : vector<7x256xf32> to vector<1x256xf32>
    %310 = arith.mulf %308, %309 : vector<1x256xf32>
    %311 = arith.mulf %310, %307 : vector<1x256xf32>
    %312 = arith.addf %295, %311 : vector<1x256xf32>
    %313 = vector.extract_strided_slice %37 {offsets = [0, 239], sizes = [2, 17], strides = [1, 1]} : vector<2x256xf32> to vector<2x17xf32>
    %314 = vector.extract_strided_slice %37 {offsets = [0, 0], sizes = [2, 239], strides = [1, 1]} : vector<2x256xf32> to vector<2x239xf32>
    %315 = tpu.concatenate %313, %314 in 1 : vector<2x17xf32>, vector<2x239xf32> -> vector<2x256xf32>
    %c32 = arith.constant 32 : index
    %316 = memref.load %arg7[%c32] : memref<98xf32, #tpu.memory_space<smem>>
    %317 = vector.extract_strided_slice %315 {offsets = [0, 0], sizes = [1, 256], strides = [1, 1]} : vector<2x256xf32> to vector<1x256xf32>
    %318 = vector.broadcast %316 : f32 to vector<1x256xf32>
    %319 = arith.mulf %318, %317 : vector<1x256xf32>
    %c33 = arith.constant 33 : index
    %320 = memref.load %arg7[%c33] : memref<98xf32, #tpu.memory_space<smem>>
    %321 = vector.extract_strided_slice %315 {offsets = [1, 0], sizes = [1, 256], strides = [1, 1]} : vector<2x256xf32> to vector<1x256xf32>
    %322 = vector.broadcast %320 : f32 to vector<1x256xf32>
    %323 = arith.mulf %322, %321 : vector<1x256xf32>
    %324 = arith.addf %319, %323 : vector<1x256xf32>
    %325 = vector.extract_strided_slice %38 {offsets = [2, 0], sizes = [1, 256], strides = [1, 1]} : vector<7x256xf32> to vector<1x256xf32>
    %326 = vector.extract_strided_slice %39 {offsets = [2, 0], sizes = [1, 256], strides = [1, 1]} : vector<7x256xf32> to vector<1x256xf32>
    %327 = arith.mulf %325, %326 : vector<1x256xf32>
    %328 = arith.mulf %327, %324 : vector<1x256xf32>
    %329 = arith.addf %312, %328 : vector<1x256xf32>
    %330 = vector.extract_strided_slice %37 {offsets = [0, 240], sizes = [2, 16], strides = [1, 1]} : vector<2x256xf32> to vector<2x16xf32>
    %331 = vector.extract_strided_slice %37 {offsets = [0, 0], sizes = [2, 240], strides = [1, 1]} : vector<2x256xf32> to vector<2x240xf32>
    %332 = tpu.concatenate %330, %331 in 1 : vector<2x16xf32>, vector<2x240xf32> -> vector<2x256xf32>
    %c34 = arith.constant 34 : index
    %333 = memref.load %arg7[%c34] : memref<98xf32, #tpu.memory_space<smem>>
    %334 = vector.extract_strided_slice %332 {offsets = [0, 0], sizes = [1, 256], strides = [1, 1]} : vector<2x256xf32> to vector<1x256xf32>
    %335 = vector.broadcast %333 : f32 to vector<1x256xf32>
    %336 = arith.mulf %335, %334 : vector<1x256xf32>
    %c35 = arith.constant 35 : index
    %337 = memref.load %arg7[%c35] : memref<98xf32, #tpu.memory_space<smem>>
    %338 = vector.extract_strided_slice %332 {offsets = [1, 0], sizes = [1, 256], strides = [1, 1]} : vector<2x256xf32> to vector<1x256xf32>
    %339 = vector.broadcast %337 : f32 to vector<1x256xf32>
    %340 = arith.mulf %339, %338 : vector<1x256xf32>
    %341 = arith.addf %336, %340 : vector<1x256xf32>
    %342 = vector.extract_strided_slice %38 {offsets = [2, 0], sizes = [1, 256], strides = [1, 1]} : vector<7x256xf32> to vector<1x256xf32>
    %343 = vector.extract_strided_slice %39 {offsets = [3, 0], sizes = [1, 256], strides = [1, 1]} : vector<7x256xf32> to vector<1x256xf32>
    %344 = arith.mulf %342, %343 : vector<1x256xf32>
    %345 = arith.mulf %344, %341 : vector<1x256xf32>
    %346 = arith.addf %329, %345 : vector<1x256xf32>
    %347 = vector.extract_strided_slice %37 {offsets = [0, 241], sizes = [2, 15], strides = [1, 1]} : vector<2x256xf32> to vector<2x15xf32>
    %348 = vector.extract_strided_slice %37 {offsets = [0, 0], sizes = [2, 241], strides = [1, 1]} : vector<2x256xf32> to vector<2x241xf32>
    %349 = tpu.concatenate %347, %348 in 1 : vector<2x15xf32>, vector<2x241xf32> -> vector<2x256xf32>
    %c36 = arith.constant 36 : index
    %350 = memref.load %arg7[%c36] : memref<98xf32, #tpu.memory_space<smem>>
    %351 = vector.extract_strided_slice %349 {offsets = [0, 0], sizes = [1, 256], strides = [1, 1]} : vector<2x256xf32> to vector<1x256xf32>
    %352 = vector.broadcast %350 : f32 to vector<1x256xf32>
    %353 = arith.mulf %352, %351 : vector<1x256xf32>
    %c37 = arith.constant 37 : index
    %354 = memref.load %arg7[%c37] : memref<98xf32, #tpu.memory_space<smem>>
    %355 = vector.extract_strided_slice %349 {offsets = [1, 0], sizes = [1, 256], strides = [1, 1]} : vector<2x256xf32> to vector<1x256xf32>
    %356 = vector.broadcast %354 : f32 to vector<1x256xf32>
    %357 = arith.mulf %356, %355 : vector<1x256xf32>
    %358 = arith.addf %353, %357 : vector<1x256xf32>
    %359 = vector.extract_strided_slice %38 {offsets = [2, 0], sizes = [1, 256], strides = [1, 1]} : vector<7x256xf32> to vector<1x256xf32>
    %360 = vector.extract_strided_slice %39 {offsets = [4, 0], sizes = [1, 256], strides = [1, 1]} : vector<7x256xf32> to vector<1x256xf32>
    %361 = arith.mulf %359, %360 : vector<1x256xf32>
    %362 = arith.mulf %361, %358 : vector<1x256xf32>
    %363 = arith.addf %346, %362 : vector<1x256xf32>
    %364 = vector.extract_strided_slice %37 {offsets = [0, 242], sizes = [2, 14], strides = [1, 1]} : vector<2x256xf32> to vector<2x14xf32>
    %365 = vector.extract_strided_slice %37 {offsets = [0, 0], sizes = [2, 242], strides = [1, 1]} : vector<2x256xf32> to vector<2x242xf32>
    %366 = tpu.concatenate %364, %365 in 1 : vector<2x14xf32>, vector<2x242xf32> -> vector<2x256xf32>
    %c38 = arith.constant 38 : index
    %367 = memref.load %arg7[%c38] : memref<98xf32, #tpu.memory_space<smem>>
    %368 = vector.extract_strided_slice %366 {offsets = [0, 0], sizes = [1, 256], strides = [1, 1]} : vector<2x256xf32> to vector<1x256xf32>
    %369 = vector.broadcast %367 : f32 to vector<1x256xf32>
    %370 = arith.mulf %369, %368 : vector<1x256xf32>
    %c39 = arith.constant 39 : index
    %371 = memref.load %arg7[%c39] : memref<98xf32, #tpu.memory_space<smem>>
    %372 = vector.extract_strided_slice %366 {offsets = [1, 0], sizes = [1, 256], strides = [1, 1]} : vector<2x256xf32> to vector<1x256xf32>
    %373 = vector.broadcast %371 : f32 to vector<1x256xf32>
    %374 = arith.mulf %373, %372 : vector<1x256xf32>
    %375 = arith.addf %370, %374 : vector<1x256xf32>
    %376 = vector.extract_strided_slice %38 {offsets = [2, 0], sizes = [1, 256], strides = [1, 1]} : vector<7x256xf32> to vector<1x256xf32>
    %377 = vector.extract_strided_slice %39 {offsets = [5, 0], sizes = [1, 256], strides = [1, 1]} : vector<7x256xf32> to vector<1x256xf32>
    %378 = arith.mulf %376, %377 : vector<1x256xf32>
    %379 = arith.mulf %378, %375 : vector<1x256xf32>
    %380 = arith.addf %363, %379 : vector<1x256xf32>
    %381 = vector.extract_strided_slice %37 {offsets = [0, 243], sizes = [2, 13], strides = [1, 1]} : vector<2x256xf32> to vector<2x13xf32>
    %382 = vector.extract_strided_slice %37 {offsets = [0, 0], sizes = [2, 243], strides = [1, 1]} : vector<2x256xf32> to vector<2x243xf32>
    %383 = tpu.concatenate %381, %382 in 1 : vector<2x13xf32>, vector<2x243xf32> -> vector<2x256xf32>
    %c40 = arith.constant 40 : index
    %384 = memref.load %arg7[%c40] : memref<98xf32, #tpu.memory_space<smem>>
    %385 = vector.extract_strided_slice %383 {offsets = [0, 0], sizes = [1, 256], strides = [1, 1]} : vector<2x256xf32> to vector<1x256xf32>
    %386 = vector.broadcast %384 : f32 to vector<1x256xf32>
    %387 = arith.mulf %386, %385 : vector<1x256xf32>
    %c41 = arith.constant 41 : index
    %388 = memref.load %arg7[%c41] : memref<98xf32, #tpu.memory_space<smem>>
    %389 = vector.extract_strided_slice %383 {offsets = [1, 0], sizes = [1, 256], strides = [1, 1]} : vector<2x256xf32> to vector<1x256xf32>
    %390 = vector.broadcast %388 : f32 to vector<1x256xf32>
    %391 = arith.mulf %390, %389 : vector<1x256xf32>
    %392 = arith.addf %387, %391 : vector<1x256xf32>
    %393 = vector.extract_strided_slice %38 {offsets = [2, 0], sizes = [1, 256], strides = [1, 1]} : vector<7x256xf32> to vector<1x256xf32>
    %394 = vector.extract_strided_slice %39 {offsets = [6, 0], sizes = [1, 256], strides = [1, 1]} : vector<7x256xf32> to vector<1x256xf32>
    %395 = arith.mulf %393, %394 : vector<1x256xf32>
    %396 = arith.mulf %395, %392 : vector<1x256xf32>
    %397 = arith.addf %380, %396 : vector<1x256xf32>
    %398 = vector.extract_strided_slice %37 {offsets = [0, 253], sizes = [2, 3], strides = [1, 1]} : vector<2x256xf32> to vector<2x3xf32>
    %399 = vector.extract_strided_slice %37 {offsets = [0, 0], sizes = [2, 253], strides = [1, 1]} : vector<2x256xf32> to vector<2x253xf32>
    %400 = tpu.concatenate %398, %399 in 1 : vector<2x3xf32>, vector<2x253xf32> -> vector<2x256xf32>
    %c42 = arith.constant 42 : index
    %401 = memref.load %arg7[%c42] : memref<98xf32, #tpu.memory_space<smem>>
    %402 = vector.extract_strided_slice %400 {offsets = [0, 0], sizes = [1, 256], strides = [1, 1]} : vector<2x256xf32> to vector<1x256xf32>
    %403 = vector.broadcast %401 : f32 to vector<1x256xf32>
    %404 = arith.mulf %403, %402 : vector<1x256xf32>
    %c43 = arith.constant 43 : index
    %405 = memref.load %arg7[%c43] : memref<98xf32, #tpu.memory_space<smem>>
    %406 = vector.extract_strided_slice %400 {offsets = [1, 0], sizes = [1, 256], strides = [1, 1]} : vector<2x256xf32> to vector<1x256xf32>
    %407 = vector.broadcast %405 : f32 to vector<1x256xf32>
    %408 = arith.mulf %407, %406 : vector<1x256xf32>
    %409 = arith.addf %404, %408 : vector<1x256xf32>
    %410 = vector.extract_strided_slice %38 {offsets = [3, 0], sizes = [1, 256], strides = [1, 1]} : vector<7x256xf32> to vector<1x256xf32>
    %411 = vector.extract_strided_slice %39 {offsets = [0, 0], sizes = [1, 256], strides = [1, 1]} : vector<7x256xf32> to vector<1x256xf32>
    %412 = arith.mulf %410, %411 : vector<1x256xf32>
    %413 = arith.mulf %412, %409 : vector<1x256xf32>
    %414 = arith.addf %397, %413 : vector<1x256xf32>
    %415 = vector.extract_strided_slice %37 {offsets = [0, 254], sizes = [2, 2], strides = [1, 1]} : vector<2x256xf32> to vector<2x2xf32>
    %416 = vector.extract_strided_slice %37 {offsets = [0, 0], sizes = [2, 254], strides = [1, 1]} : vector<2x256xf32> to vector<2x254xf32>
    %417 = tpu.concatenate %415, %416 in 1 : vector<2x2xf32>, vector<2x254xf32> -> vector<2x256xf32>
    %c44 = arith.constant 44 : index
    %418 = memref.load %arg7[%c44] : memref<98xf32, #tpu.memory_space<smem>>
    %419 = vector.extract_strided_slice %417 {offsets = [0, 0], sizes = [1, 256], strides = [1, 1]} : vector<2x256xf32> to vector<1x256xf32>
    %420 = vector.broadcast %418 : f32 to vector<1x256xf32>
    %421 = arith.mulf %420, %419 : vector<1x256xf32>
    %c45 = arith.constant 45 : index
    %422 = memref.load %arg7[%c45] : memref<98xf32, #tpu.memory_space<smem>>
    %423 = vector.extract_strided_slice %417 {offsets = [1, 0], sizes = [1, 256], strides = [1, 1]} : vector<2x256xf32> to vector<1x256xf32>
    %424 = vector.broadcast %422 : f32 to vector<1x256xf32>
    %425 = arith.mulf %424, %423 : vector<1x256xf32>
    %426 = arith.addf %421, %425 : vector<1x256xf32>
    %427 = vector.extract_strided_slice %38 {offsets = [3, 0], sizes = [1, 256], strides = [1, 1]} : vector<7x256xf32> to vector<1x256xf32>
    %428 = vector.extract_strided_slice %39 {offsets = [1, 0], sizes = [1, 256], strides = [1, 1]} : vector<7x256xf32> to vector<1x256xf32>
    %429 = arith.mulf %427, %428 : vector<1x256xf32>
    %430 = arith.mulf %429, %426 : vector<1x256xf32>
    %431 = arith.addf %414, %430 : vector<1x256xf32>
    %432 = vector.extract_strided_slice %37 {offsets = [0, 255], sizes = [2, 1], strides = [1, 1]} : vector<2x256xf32> to vector<2x1xf32>
    %433 = vector.extract_strided_slice %37 {offsets = [0, 0], sizes = [2, 255], strides = [1, 1]} : vector<2x256xf32> to vector<2x255xf32>
    %434 = tpu.concatenate %432, %433 in 1 : vector<2x1xf32>, vector<2x255xf32> -> vector<2x256xf32>
    %c46 = arith.constant 46 : index
    %435 = memref.load %arg7[%c46] : memref<98xf32, #tpu.memory_space<smem>>
    %436 = vector.extract_strided_slice %434 {offsets = [0, 0], sizes = [1, 256], strides = [1, 1]} : vector<2x256xf32> to vector<1x256xf32>
    %437 = vector.broadcast %435 : f32 to vector<1x256xf32>
    %438 = arith.mulf %437, %436 : vector<1x256xf32>
    %c47 = arith.constant 47 : index
    %439 = memref.load %arg7[%c47] : memref<98xf32, #tpu.memory_space<smem>>
    %440 = vector.extract_strided_slice %434 {offsets = [1, 0], sizes = [1, 256], strides = [1, 1]} : vector<2x256xf32> to vector<1x256xf32>
    %441 = vector.broadcast %439 : f32 to vector<1x256xf32>
    %442 = arith.mulf %441, %440 : vector<1x256xf32>
    %443 = arith.addf %438, %442 : vector<1x256xf32>
    %444 = vector.extract_strided_slice %38 {offsets = [3, 0], sizes = [1, 256], strides = [1, 1]} : vector<7x256xf32> to vector<1x256xf32>
    %445 = vector.extract_strided_slice %39 {offsets = [2, 0], sizes = [1, 256], strides = [1, 1]} : vector<7x256xf32> to vector<1x256xf32>
    %446 = arith.mulf %444, %445 : vector<1x256xf32>
    %447 = arith.mulf %446, %443 : vector<1x256xf32>
    %448 = arith.addf %431, %447 : vector<1x256xf32>
    %c48 = arith.constant 48 : index
    %449 = memref.load %arg7[%c48] : memref<98xf32, #tpu.memory_space<smem>>
    %450 = vector.extract_strided_slice %37 {offsets = [0, 0], sizes = [1, 256], strides = [1, 1]} : vector<2x256xf32> to vector<1x256xf32>
    %451 = vector.broadcast %449 : f32 to vector<1x256xf32>
    %452 = arith.mulf %451, %450 : vector<1x256xf32>
    %c49 = arith.constant 49 : index
    %453 = memref.load %arg7[%c49] : memref<98xf32, #tpu.memory_space<smem>>
    %454 = vector.extract_strided_slice %37 {offsets = [1, 0], sizes = [1, 256], strides = [1, 1]} : vector<2x256xf32> to vector<1x256xf32>
    %455 = vector.broadcast %453 : f32 to vector<1x256xf32>
    %456 = arith.mulf %455, %454 : vector<1x256xf32>
    %457 = arith.addf %452, %456 : vector<1x256xf32>
    %458 = vector.extract_strided_slice %38 {offsets = [3, 0], sizes = [1, 256], strides = [1, 1]} : vector<7x256xf32> to vector<1x256xf32>
    %459 = vector.extract_strided_slice %39 {offsets = [3, 0], sizes = [1, 256], strides = [1, 1]} : vector<7x256xf32> to vector<1x256xf32>
    %460 = arith.mulf %458, %459 : vector<1x256xf32>
    %461 = arith.mulf %460, %457 : vector<1x256xf32>
    %462 = arith.addf %448, %461 : vector<1x256xf32>
    %463 = vector.extract_strided_slice %37 {offsets = [0, 1], sizes = [2, 255], strides = [1, 1]} : vector<2x256xf32> to vector<2x255xf32>
    %464 = vector.extract_strided_slice %37 {offsets = [0, 0], sizes = [2, 1], strides = [1, 1]} : vector<2x256xf32> to vector<2x1xf32>
    %465 = tpu.concatenate %463, %464 in 1 : vector<2x255xf32>, vector<2x1xf32> -> vector<2x256xf32>
    %c50 = arith.constant 50 : index
    %466 = memref.load %arg7[%c50] : memref<98xf32, #tpu.memory_space<smem>>
    %467 = vector.extract_strided_slice %465 {offsets = [0, 0], sizes = [1, 256], strides = [1, 1]} : vector<2x256xf32> to vector<1x256xf32>
    %468 = vector.broadcast %466 : f32 to vector<1x256xf32>
    %469 = arith.mulf %468, %467 : vector<1x256xf32>
    %c51 = arith.constant 51 : index
    %470 = memref.load %arg7[%c51] : memref<98xf32, #tpu.memory_space<smem>>
    %471 = vector.extract_strided_slice %465 {offsets = [1, 0], sizes = [1, 256], strides = [1, 1]} : vector<2x256xf32> to vector<1x256xf32>
    %472 = vector.broadcast %470 : f32 to vector<1x256xf32>
    %473 = arith.mulf %472, %471 : vector<1x256xf32>
    %474 = arith.addf %469, %473 : vector<1x256xf32>
    %475 = vector.extract_strided_slice %38 {offsets = [3, 0], sizes = [1, 256], strides = [1, 1]} : vector<7x256xf32> to vector<1x256xf32>
    %476 = vector.extract_strided_slice %39 {offsets = [4, 0], sizes = [1, 256], strides = [1, 1]} : vector<7x256xf32> to vector<1x256xf32>
    %477 = arith.mulf %475, %476 : vector<1x256xf32>
    %478 = arith.mulf %477, %474 : vector<1x256xf32>
    %479 = arith.addf %462, %478 : vector<1x256xf32>
    %480 = vector.extract_strided_slice %37 {offsets = [0, 2], sizes = [2, 254], strides = [1, 1]} : vector<2x256xf32> to vector<2x254xf32>
    %481 = vector.extract_strided_slice %37 {offsets = [0, 0], sizes = [2, 2], strides = [1, 1]} : vector<2x256xf32> to vector<2x2xf32>
    %482 = tpu.concatenate %480, %481 in 1 : vector<2x254xf32>, vector<2x2xf32> -> vector<2x256xf32>
    %c52 = arith.constant 52 : index
    %483 = memref.load %arg7[%c52] : memref<98xf32, #tpu.memory_space<smem>>
    %484 = vector.extract_strided_slice %482 {offsets = [0, 0], sizes = [1, 256], strides = [1, 1]} : vector<2x256xf32> to vector<1x256xf32>
    %485 = vector.broadcast %483 : f32 to vector<1x256xf32>
    %486 = arith.mulf %485, %484 : vector<1x256xf32>
    %c53 = arith.constant 53 : index
    %487 = memref.load %arg7[%c53] : memref<98xf32, #tpu.memory_space<smem>>
    %488 = vector.extract_strided_slice %482 {offsets = [1, 0], sizes = [1, 256], strides = [1, 1]} : vector<2x256xf32> to vector<1x256xf32>
    %489 = vector.broadcast %487 : f32 to vector<1x256xf32>
    %490 = arith.mulf %489, %488 : vector<1x256xf32>
    %491 = arith.addf %486, %490 : vector<1x256xf32>
    %492 = vector.extract_strided_slice %38 {offsets = [3, 0], sizes = [1, 256], strides = [1, 1]} : vector<7x256xf32> to vector<1x256xf32>
    %493 = vector.extract_strided_slice %39 {offsets = [5, 0], sizes = [1, 256], strides = [1, 1]} : vector<7x256xf32> to vector<1x256xf32>
    %494 = arith.mulf %492, %493 : vector<1x256xf32>
    %495 = arith.mulf %494, %491 : vector<1x256xf32>
    %496 = arith.addf %479, %495 : vector<1x256xf32>
    %497 = vector.extract_strided_slice %37 {offsets = [0, 3], sizes = [2, 253], strides = [1, 1]} : vector<2x256xf32> to vector<2x253xf32>
    %498 = vector.extract_strided_slice %37 {offsets = [0, 0], sizes = [2, 3], strides = [1, 1]} : vector<2x256xf32> to vector<2x3xf32>
    %499 = tpu.concatenate %497, %498 in 1 : vector<2x253xf32>, vector<2x3xf32> -> vector<2x256xf32>
    %c54 = arith.constant 54 : index
    %500 = memref.load %arg7[%c54] : memref<98xf32, #tpu.memory_space<smem>>
    %501 = vector.extract_strided_slice %499 {offsets = [0, 0], sizes = [1, 256], strides = [1, 1]} : vector<2x256xf32> to vector<1x256xf32>
    %502 = vector.broadcast %500 : f32 to vector<1x256xf32>
    %503 = arith.mulf %502, %501 : vector<1x256xf32>
    %c55 = arith.constant 55 : index
    %504 = memref.load %arg7[%c55] : memref<98xf32, #tpu.memory_space<smem>>
    %505 = vector.extract_strided_slice %499 {offsets = [1, 0], sizes = [1, 256], strides = [1, 1]} : vector<2x256xf32> to vector<1x256xf32>
    %506 = vector.broadcast %504 : f32 to vector<1x256xf32>
    %507 = arith.mulf %506, %505 : vector<1x256xf32>
    %508 = arith.addf %503, %507 : vector<1x256xf32>
    %509 = vector.extract_strided_slice %38 {offsets = [3, 0], sizes = [1, 256], strides = [1, 1]} : vector<7x256xf32> to vector<1x256xf32>
    %510 = vector.extract_strided_slice %39 {offsets = [6, 0], sizes = [1, 256], strides = [1, 1]} : vector<7x256xf32> to vector<1x256xf32>
    %511 = arith.mulf %509, %510 : vector<1x256xf32>
    %512 = arith.mulf %511, %508 : vector<1x256xf32>
    %513 = arith.addf %496, %512 : vector<1x256xf32>
    %514 = vector.extract_strided_slice %37 {offsets = [0, 13], sizes = [2, 243], strides = [1, 1]} : vector<2x256xf32> to vector<2x243xf32>
    %515 = vector.extract_strided_slice %37 {offsets = [0, 0], sizes = [2, 13], strides = [1, 1]} : vector<2x256xf32> to vector<2x13xf32>
    %516 = tpu.concatenate %514, %515 in 1 : vector<2x243xf32>, vector<2x13xf32> -> vector<2x256xf32>
    %c56 = arith.constant 56 : index
    %517 = memref.load %arg7[%c56] : memref<98xf32, #tpu.memory_space<smem>>
    %518 = vector.extract_strided_slice %516 {offsets = [0, 0], sizes = [1, 256], strides = [1, 1]} : vector<2x256xf32> to vector<1x256xf32>
    %519 = vector.broadcast %517 : f32 to vector<1x256xf32>
    %520 = arith.mulf %519, %518 : vector<1x256xf32>
    %c57 = arith.constant 57 : index
    %521 = memref.load %arg7[%c57] : memref<98xf32, #tpu.memory_space<smem>>
    %522 = vector.extract_strided_slice %516 {offsets = [1, 0], sizes = [1, 256], strides = [1, 1]} : vector<2x256xf32> to vector<1x256xf32>
    %523 = vector.broadcast %521 : f32 to vector<1x256xf32>
    %524 = arith.mulf %523, %522 : vector<1x256xf32>
    %525 = arith.addf %520, %524 : vector<1x256xf32>
    %526 = vector.extract_strided_slice %38 {offsets = [4, 0], sizes = [1, 256], strides = [1, 1]} : vector<7x256xf32> to vector<1x256xf32>
    %527 = vector.extract_strided_slice %39 {offsets = [0, 0], sizes = [1, 256], strides = [1, 1]} : vector<7x256xf32> to vector<1x256xf32>
    %528 = arith.mulf %526, %527 : vector<1x256xf32>
    %529 = arith.mulf %528, %525 : vector<1x256xf32>
    %530 = arith.addf %513, %529 : vector<1x256xf32>
    %531 = vector.extract_strided_slice %37 {offsets = [0, 14], sizes = [2, 242], strides = [1, 1]} : vector<2x256xf32> to vector<2x242xf32>
    %532 = vector.extract_strided_slice %37 {offsets = [0, 0], sizes = [2, 14], strides = [1, 1]} : vector<2x256xf32> to vector<2x14xf32>
    %533 = tpu.concatenate %531, %532 in 1 : vector<2x242xf32>, vector<2x14xf32> -> vector<2x256xf32>
    %c58 = arith.constant 58 : index
    %534 = memref.load %arg7[%c58] : memref<98xf32, #tpu.memory_space<smem>>
    %535 = vector.extract_strided_slice %533 {offsets = [0, 0], sizes = [1, 256], strides = [1, 1]} : vector<2x256xf32> to vector<1x256xf32>
    %536 = vector.broadcast %534 : f32 to vector<1x256xf32>
    %537 = arith.mulf %536, %535 : vector<1x256xf32>
    %c59 = arith.constant 59 : index
    %538 = memref.load %arg7[%c59] : memref<98xf32, #tpu.memory_space<smem>>
    %539 = vector.extract_strided_slice %533 {offsets = [1, 0], sizes = [1, 256], strides = [1, 1]} : vector<2x256xf32> to vector<1x256xf32>
    %540 = vector.broadcast %538 : f32 to vector<1x256xf32>
    %541 = arith.mulf %540, %539 : vector<1x256xf32>
    %542 = arith.addf %537, %541 : vector<1x256xf32>
    %543 = vector.extract_strided_slice %38 {offsets = [4, 0], sizes = [1, 256], strides = [1, 1]} : vector<7x256xf32> to vector<1x256xf32>
    %544 = vector.extract_strided_slice %39 {offsets = [1, 0], sizes = [1, 256], strides = [1, 1]} : vector<7x256xf32> to vector<1x256xf32>
    %545 = arith.mulf %543, %544 : vector<1x256xf32>
    %546 = arith.mulf %545, %542 : vector<1x256xf32>
    %547 = arith.addf %530, %546 : vector<1x256xf32>
    %548 = vector.extract_strided_slice %37 {offsets = [0, 15], sizes = [2, 241], strides = [1, 1]} : vector<2x256xf32> to vector<2x241xf32>
    %549 = vector.extract_strided_slice %37 {offsets = [0, 0], sizes = [2, 15], strides = [1, 1]} : vector<2x256xf32> to vector<2x15xf32>
    %550 = tpu.concatenate %548, %549 in 1 : vector<2x241xf32>, vector<2x15xf32> -> vector<2x256xf32>
    %c60 = arith.constant 60 : index
    %551 = memref.load %arg7[%c60] : memref<98xf32, #tpu.memory_space<smem>>
    %552 = vector.extract_strided_slice %550 {offsets = [0, 0], sizes = [1, 256], strides = [1, 1]} : vector<2x256xf32> to vector<1x256xf32>
    %553 = vector.broadcast %551 : f32 to vector<1x256xf32>
    %554 = arith.mulf %553, %552 : vector<1x256xf32>
    %c61 = arith.constant 61 : index
    %555 = memref.load %arg7[%c61] : memref<98xf32, #tpu.memory_space<smem>>
    %556 = vector.extract_strided_slice %550 {offsets = [1, 0], sizes = [1, 256], strides = [1, 1]} : vector<2x256xf32> to vector<1x256xf32>
    %557 = vector.broadcast %555 : f32 to vector<1x256xf32>
    %558 = arith.mulf %557, %556 : vector<1x256xf32>
    %559 = arith.addf %554, %558 : vector<1x256xf32>
    %560 = vector.extract_strided_slice %38 {offsets = [4, 0], sizes = [1, 256], strides = [1, 1]} : vector<7x256xf32> to vector<1x256xf32>
    %561 = vector.extract_strided_slice %39 {offsets = [2, 0], sizes = [1, 256], strides = [1, 1]} : vector<7x256xf32> to vector<1x256xf32>
    %562 = arith.mulf %560, %561 : vector<1x256xf32>
    %563 = arith.mulf %562, %559 : vector<1x256xf32>
    %564 = arith.addf %547, %563 : vector<1x256xf32>
    %565 = vector.extract_strided_slice %37 {offsets = [0, 16], sizes = [2, 240], strides = [1, 1]} : vector<2x256xf32> to vector<2x240xf32>
    %566 = vector.extract_strided_slice %37 {offsets = [0, 0], sizes = [2, 16], strides = [1, 1]} : vector<2x256xf32> to vector<2x16xf32>
    %567 = tpu.concatenate %565, %566 in 1 : vector<2x240xf32>, vector<2x16xf32> -> vector<2x256xf32>
    %c62 = arith.constant 62 : index
    %568 = memref.load %arg7[%c62] : memref<98xf32, #tpu.memory_space<smem>>
    %569 = vector.extract_strided_slice %567 {offsets = [0, 0], sizes = [1, 256], strides = [1, 1]} : vector<2x256xf32> to vector<1x256xf32>
    %570 = vector.broadcast %568 : f32 to vector<1x256xf32>
    %571 = arith.mulf %570, %569 : vector<1x256xf32>
    %c63 = arith.constant 63 : index
    %572 = memref.load %arg7[%c63] : memref<98xf32, #tpu.memory_space<smem>>
    %573 = vector.extract_strided_slice %567 {offsets = [1, 0], sizes = [1, 256], strides = [1, 1]} : vector<2x256xf32> to vector<1x256xf32>
    %574 = vector.broadcast %572 : f32 to vector<1x256xf32>
    %575 = arith.mulf %574, %573 : vector<1x256xf32>
    %576 = arith.addf %571, %575 : vector<1x256xf32>
    %577 = vector.extract_strided_slice %38 {offsets = [4, 0], sizes = [1, 256], strides = [1, 1]} : vector<7x256xf32> to vector<1x256xf32>
    %578 = vector.extract_strided_slice %39 {offsets = [3, 0], sizes = [1, 256], strides = [1, 1]} : vector<7x256xf32> to vector<1x256xf32>
    %579 = arith.mulf %577, %578 : vector<1x256xf32>
    %580 = arith.mulf %579, %576 : vector<1x256xf32>
    %581 = arith.addf %564, %580 : vector<1x256xf32>
    %582 = vector.extract_strided_slice %37 {offsets = [0, 17], sizes = [2, 239], strides = [1, 1]} : vector<2x256xf32> to vector<2x239xf32>
    %583 = vector.extract_strided_slice %37 {offsets = [0, 0], sizes = [2, 17], strides = [1, 1]} : vector<2x256xf32> to vector<2x17xf32>
    %584 = tpu.concatenate %582, %583 in 1 : vector<2x239xf32>, vector<2x17xf32> -> vector<2x256xf32>
    %c64 = arith.constant 64 : index
    %585 = memref.load %arg7[%c64] : memref<98xf32, #tpu.memory_space<smem>>
    %586 = vector.extract_strided_slice %584 {offsets = [0, 0], sizes = [1, 256], strides = [1, 1]} : vector<2x256xf32> to vector<1x256xf32>
    %587 = vector.broadcast %585 : f32 to vector<1x256xf32>
    %588 = arith.mulf %587, %586 : vector<1x256xf32>
    %c65 = arith.constant 65 : index
    %589 = memref.load %arg7[%c65] : memref<98xf32, #tpu.memory_space<smem>>
    %590 = vector.extract_strided_slice %584 {offsets = [1, 0], sizes = [1, 256], strides = [1, 1]} : vector<2x256xf32> to vector<1x256xf32>
    %591 = vector.broadcast %589 : f32 to vector<1x256xf32>
    %592 = arith.mulf %591, %590 : vector<1x256xf32>
    %593 = arith.addf %588, %592 : vector<1x256xf32>
    %594 = vector.extract_strided_slice %38 {offsets = [4, 0], sizes = [1, 256], strides = [1, 1]} : vector<7x256xf32> to vector<1x256xf32>
    %595 = vector.extract_strided_slice %39 {offsets = [4, 0], sizes = [1, 256], strides = [1, 1]} : vector<7x256xf32> to vector<1x256xf32>
    %596 = arith.mulf %594, %595 : vector<1x256xf32>
    %597 = arith.mulf %596, %593 : vector<1x256xf32>
    %598 = arith.addf %581, %597 : vector<1x256xf32>
    %599 = vector.extract_strided_slice %37 {offsets = [0, 18], sizes = [2, 238], strides = [1, 1]} : vector<2x256xf32> to vector<2x238xf32>
    %600 = vector.extract_strided_slice %37 {offsets = [0, 0], sizes = [2, 18], strides = [1, 1]} : vector<2x256xf32> to vector<2x18xf32>
    %601 = tpu.concatenate %599, %600 in 1 : vector<2x238xf32>, vector<2x18xf32> -> vector<2x256xf32>
    %c66 = arith.constant 66 : index
    %602 = memref.load %arg7[%c66] : memref<98xf32, #tpu.memory_space<smem>>
    %603 = vector.extract_strided_slice %601 {offsets = [0, 0], sizes = [1, 256], strides = [1, 1]} : vector<2x256xf32> to vector<1x256xf32>
    %604 = vector.broadcast %602 : f32 to vector<1x256xf32>
    %605 = arith.mulf %604, %603 : vector<1x256xf32>
    %c67 = arith.constant 67 : index
    %606 = memref.load %arg7[%c67] : memref<98xf32, #tpu.memory_space<smem>>
    %607 = vector.extract_strided_slice %601 {offsets = [1, 0], sizes = [1, 256], strides = [1, 1]} : vector<2x256xf32> to vector<1x256xf32>
    %608 = vector.broadcast %606 : f32 to vector<1x256xf32>
    %609 = arith.mulf %608, %607 : vector<1x256xf32>
    %610 = arith.addf %605, %609 : vector<1x256xf32>
    %611 = vector.extract_strided_slice %38 {offsets = [4, 0], sizes = [1, 256], strides = [1, 1]} : vector<7x256xf32> to vector<1x256xf32>
    %612 = vector.extract_strided_slice %39 {offsets = [5, 0], sizes = [1, 256], strides = [1, 1]} : vector<7x256xf32> to vector<1x256xf32>
    %613 = arith.mulf %611, %612 : vector<1x256xf32>
    %614 = arith.mulf %613, %610 : vector<1x256xf32>
    %615 = arith.addf %598, %614 : vector<1x256xf32>
    %616 = vector.extract_strided_slice %37 {offsets = [0, 19], sizes = [2, 237], strides = [1, 1]} : vector<2x256xf32> to vector<2x237xf32>
    %617 = vector.extract_strided_slice %37 {offsets = [0, 0], sizes = [2, 19], strides = [1, 1]} : vector<2x256xf32> to vector<2x19xf32>
    %618 = tpu.concatenate %616, %617 in 1 : vector<2x237xf32>, vector<2x19xf32> -> vector<2x256xf32>
    %c68 = arith.constant 68 : index
    %619 = memref.load %arg7[%c68] : memref<98xf32, #tpu.memory_space<smem>>
    %620 = vector.extract_strided_slice %618 {offsets = [0, 0], sizes = [1, 256], strides = [1, 1]} : vector<2x256xf32> to vector<1x256xf32>
    %621 = vector.broadcast %619 : f32 to vector<1x256xf32>
    %622 = arith.mulf %621, %620 : vector<1x256xf32>
    %c69 = arith.constant 69 : index
    %623 = memref.load %arg7[%c69] : memref<98xf32, #tpu.memory_space<smem>>
    %624 = vector.extract_strided_slice %618 {offsets = [1, 0], sizes = [1, 256], strides = [1, 1]} : vector<2x256xf32> to vector<1x256xf32>
    %625 = vector.broadcast %623 : f32 to vector<1x256xf32>
    %626 = arith.mulf %625, %624 : vector<1x256xf32>
    %627 = arith.addf %622, %626 : vector<1x256xf32>
    %628 = vector.extract_strided_slice %38 {offsets = [4, 0], sizes = [1, 256], strides = [1, 1]} : vector<7x256xf32> to vector<1x256xf32>
    %629 = vector.extract_strided_slice %39 {offsets = [6, 0], sizes = [1, 256], strides = [1, 1]} : vector<7x256xf32> to vector<1x256xf32>
    %630 = arith.mulf %628, %629 : vector<1x256xf32>
    %631 = arith.mulf %630, %627 : vector<1x256xf32>
    %632 = arith.addf %615, %631 : vector<1x256xf32>
    %633 = vector.extract_strided_slice %37 {offsets = [0, 29], sizes = [2, 227], strides = [1, 1]} : vector<2x256xf32> to vector<2x227xf32>
    %634 = vector.extract_strided_slice %37 {offsets = [0, 0], sizes = [2, 29], strides = [1, 1]} : vector<2x256xf32> to vector<2x29xf32>
    %635 = tpu.concatenate %633, %634 in 1 : vector<2x227xf32>, vector<2x29xf32> -> vector<2x256xf32>
    %c70 = arith.constant 70 : index
    %636 = memref.load %arg7[%c70] : memref<98xf32, #tpu.memory_space<smem>>
    %637 = vector.extract_strided_slice %635 {offsets = [0, 0], sizes = [1, 256], strides = [1, 1]} : vector<2x256xf32> to vector<1x256xf32>
    %638 = vector.broadcast %636 : f32 to vector<1x256xf32>
    %639 = arith.mulf %638, %637 : vector<1x256xf32>
    %c71 = arith.constant 71 : index
    %640 = memref.load %arg7[%c71] : memref<98xf32, #tpu.memory_space<smem>>
    %641 = vector.extract_strided_slice %635 {offsets = [1, 0], sizes = [1, 256], strides = [1, 1]} : vector<2x256xf32> to vector<1x256xf32>
    %642 = vector.broadcast %640 : f32 to vector<1x256xf32>
    %643 = arith.mulf %642, %641 : vector<1x256xf32>
    %644 = arith.addf %639, %643 : vector<1x256xf32>
    %645 = vector.extract_strided_slice %38 {offsets = [5, 0], sizes = [1, 256], strides = [1, 1]} : vector<7x256xf32> to vector<1x256xf32>
    %646 = vector.extract_strided_slice %39 {offsets = [0, 0], sizes = [1, 256], strides = [1, 1]} : vector<7x256xf32> to vector<1x256xf32>
    %647 = arith.mulf %645, %646 : vector<1x256xf32>
    %648 = arith.mulf %647, %644 : vector<1x256xf32>
    %649 = arith.addf %632, %648 : vector<1x256xf32>
    %650 = vector.extract_strided_slice %37 {offsets = [0, 30], sizes = [2, 226], strides = [1, 1]} : vector<2x256xf32> to vector<2x226xf32>
    %651 = vector.extract_strided_slice %37 {offsets = [0, 0], sizes = [2, 30], strides = [1, 1]} : vector<2x256xf32> to vector<2x30xf32>
    %652 = tpu.concatenate %650, %651 in 1 : vector<2x226xf32>, vector<2x30xf32> -> vector<2x256xf32>
    %c72 = arith.constant 72 : index
    %653 = memref.load %arg7[%c72] : memref<98xf32, #tpu.memory_space<smem>>
    %654 = vector.extract_strided_slice %652 {offsets = [0, 0], sizes = [1, 256], strides = [1, 1]} : vector<2x256xf32> to vector<1x256xf32>
    %655 = vector.broadcast %653 : f32 to vector<1x256xf32>
    %656 = arith.mulf %655, %654 : vector<1x256xf32>
    %c73 = arith.constant 73 : index
    %657 = memref.load %arg7[%c73] : memref<98xf32, #tpu.memory_space<smem>>
    %658 = vector.extract_strided_slice %652 {offsets = [1, 0], sizes = [1, 256], strides = [1, 1]} : vector<2x256xf32> to vector<1x256xf32>
    %659 = vector.broadcast %657 : f32 to vector<1x256xf32>
    %660 = arith.mulf %659, %658 : vector<1x256xf32>
    %661 = arith.addf %656, %660 : vector<1x256xf32>
    %662 = vector.extract_strided_slice %38 {offsets = [5, 0], sizes = [1, 256], strides = [1, 1]} : vector<7x256xf32> to vector<1x256xf32>
    %663 = vector.extract_strided_slice %39 {offsets = [1, 0], sizes = [1, 256], strides = [1, 1]} : vector<7x256xf32> to vector<1x256xf32>
    %664 = arith.mulf %662, %663 : vector<1x256xf32>
    %665 = arith.mulf %664, %661 : vector<1x256xf32>
    %666 = arith.addf %649, %665 : vector<1x256xf32>
    %667 = vector.extract_strided_slice %37 {offsets = [0, 31], sizes = [2, 225], strides = [1, 1]} : vector<2x256xf32> to vector<2x225xf32>
    %668 = vector.extract_strided_slice %37 {offsets = [0, 0], sizes = [2, 31], strides = [1, 1]} : vector<2x256xf32> to vector<2x31xf32>
    %669 = tpu.concatenate %667, %668 in 1 : vector<2x225xf32>, vector<2x31xf32> -> vector<2x256xf32>
    %c74 = arith.constant 74 : index
    %670 = memref.load %arg7[%c74] : memref<98xf32, #tpu.memory_space<smem>>
    %671 = vector.extract_strided_slice %669 {offsets = [0, 0], sizes = [1, 256], strides = [1, 1]} : vector<2x256xf32> to vector<1x256xf32>
    %672 = vector.broadcast %670 : f32 to vector<1x256xf32>
    %673 = arith.mulf %672, %671 : vector<1x256xf32>
    %c75 = arith.constant 75 : index
    %674 = memref.load %arg7[%c75] : memref<98xf32, #tpu.memory_space<smem>>
    %675 = vector.extract_strided_slice %669 {offsets = [1, 0], sizes = [1, 256], strides = [1, 1]} : vector<2x256xf32> to vector<1x256xf32>
    %676 = vector.broadcast %674 : f32 to vector<1x256xf32>
    %677 = arith.mulf %676, %675 : vector<1x256xf32>
    %678 = arith.addf %673, %677 : vector<1x256xf32>
    %679 = vector.extract_strided_slice %38 {offsets = [5, 0], sizes = [1, 256], strides = [1, 1]} : vector<7x256xf32> to vector<1x256xf32>
    %680 = vector.extract_strided_slice %39 {offsets = [2, 0], sizes = [1, 256], strides = [1, 1]} : vector<7x256xf32> to vector<1x256xf32>
    %681 = arith.mulf %679, %680 : vector<1x256xf32>
    %682 = arith.mulf %681, %678 : vector<1x256xf32>
    %683 = arith.addf %666, %682 : vector<1x256xf32>
    %684 = vector.extract_strided_slice %37 {offsets = [0, 32], sizes = [2, 224], strides = [1, 1]} : vector<2x256xf32> to vector<2x224xf32>
    %685 = vector.extract_strided_slice %37 {offsets = [0, 0], sizes = [2, 32], strides = [1, 1]} : vector<2x256xf32> to vector<2x32xf32>
    %686 = tpu.concatenate %684, %685 in 1 : vector<2x224xf32>, vector<2x32xf32> -> vector<2x256xf32>
    %c76 = arith.constant 76 : index
    %687 = memref.load %arg7[%c76] : memref<98xf32, #tpu.memory_space<smem>>
    %688 = vector.extract_strided_slice %686 {offsets = [0, 0], sizes = [1, 256], strides = [1, 1]} : vector<2x256xf32> to vector<1x256xf32>
    %689 = vector.broadcast %687 : f32 to vector<1x256xf32>
    %690 = arith.mulf %689, %688 : vector<1x256xf32>
    %c77 = arith.constant 77 : index
    %691 = memref.load %arg7[%c77] : memref<98xf32, #tpu.memory_space<smem>>
    %692 = vector.extract_strided_slice %686 {offsets = [1, 0], sizes = [1, 256], strides = [1, 1]} : vector<2x256xf32> to vector<1x256xf32>
    %693 = vector.broadcast %691 : f32 to vector<1x256xf32>
    %694 = arith.mulf %693, %692 : vector<1x256xf32>
    %695 = arith.addf %690, %694 : vector<1x256xf32>
    %696 = vector.extract_strided_slice %38 {offsets = [5, 0], sizes = [1, 256], strides = [1, 1]} : vector<7x256xf32> to vector<1x256xf32>
    %697 = vector.extract_strided_slice %39 {offsets = [3, 0], sizes = [1, 256], strides = [1, 1]} : vector<7x256xf32> to vector<1x256xf32>
    %698 = arith.mulf %696, %697 : vector<1x256xf32>
    %699 = arith.mulf %698, %695 : vector<1x256xf32>
    %700 = arith.addf %683, %699 : vector<1x256xf32>
    %701 = vector.extract_strided_slice %37 {offsets = [0, 33], sizes = [2, 223], strides = [1, 1]} : vector<2x256xf32> to vector<2x223xf32>
    %702 = vector.extract_strided_slice %37 {offsets = [0, 0], sizes = [2, 33], strides = [1, 1]} : vector<2x256xf32> to vector<2x33xf32>
    %703 = tpu.concatenate %701, %702 in 1 : vector<2x223xf32>, vector<2x33xf32> -> vector<2x256xf32>
    %c78 = arith.constant 78 : index
    %704 = memref.load %arg7[%c78] : memref<98xf32, #tpu.memory_space<smem>>
    %705 = vector.extract_strided_slice %703 {offsets = [0, 0], sizes = [1, 256], strides = [1, 1]} : vector<2x256xf32> to vector<1x256xf32>
    %706 = vector.broadcast %704 : f32 to vector<1x256xf32>
    %707 = arith.mulf %706, %705 : vector<1x256xf32>
    %c79 = arith.constant 79 : index
    %708 = memref.load %arg7[%c79] : memref<98xf32, #tpu.memory_space<smem>>
    %709 = vector.extract_strided_slice %703 {offsets = [1, 0], sizes = [1, 256], strides = [1, 1]} : vector<2x256xf32> to vector<1x256xf32>
    %710 = vector.broadcast %708 : f32 to vector<1x256xf32>
    %711 = arith.mulf %710, %709 : vector<1x256xf32>
    %712 = arith.addf %707, %711 : vector<1x256xf32>
    %713 = vector.extract_strided_slice %38 {offsets = [5, 0], sizes = [1, 256], strides = [1, 1]} : vector<7x256xf32> to vector<1x256xf32>
    %714 = vector.extract_strided_slice %39 {offsets = [4, 0], sizes = [1, 256], strides = [1, 1]} : vector<7x256xf32> to vector<1x256xf32>
    %715 = arith.mulf %713, %714 : vector<1x256xf32>
    %716 = arith.mulf %715, %712 : vector<1x256xf32>
    %717 = arith.addf %700, %716 : vector<1x256xf32>
    %718 = vector.extract_strided_slice %37 {offsets = [0, 34], sizes = [2, 222], strides = [1, 1]} : vector<2x256xf32> to vector<2x222xf32>
    %719 = vector.extract_strided_slice %37 {offsets = [0, 0], sizes = [2, 34], strides = [1, 1]} : vector<2x256xf32> to vector<2x34xf32>
    %720 = tpu.concatenate %718, %719 in 1 : vector<2x222xf32>, vector<2x34xf32> -> vector<2x256xf32>
    %c80 = arith.constant 80 : index
    %721 = memref.load %arg7[%c80] : memref<98xf32, #tpu.memory_space<smem>>
    %722 = vector.extract_strided_slice %720 {offsets = [0, 0], sizes = [1, 256], strides = [1, 1]} : vector<2x256xf32> to vector<1x256xf32>
    %723 = vector.broadcast %721 : f32 to vector<1x256xf32>
    %724 = arith.mulf %723, %722 : vector<1x256xf32>
    %c81 = arith.constant 81 : index
    %725 = memref.load %arg7[%c81] : memref<98xf32, #tpu.memory_space<smem>>
    %726 = vector.extract_strided_slice %720 {offsets = [1, 0], sizes = [1, 256], strides = [1, 1]} : vector<2x256xf32> to vector<1x256xf32>
    %727 = vector.broadcast %725 : f32 to vector<1x256xf32>
    %728 = arith.mulf %727, %726 : vector<1x256xf32>
    %729 = arith.addf %724, %728 : vector<1x256xf32>
    %730 = vector.extract_strided_slice %38 {offsets = [5, 0], sizes = [1, 256], strides = [1, 1]} : vector<7x256xf32> to vector<1x256xf32>
    %731 = vector.extract_strided_slice %39 {offsets = [5, 0], sizes = [1, 256], strides = [1, 1]} : vector<7x256xf32> to vector<1x256xf32>
    %732 = arith.mulf %730, %731 : vector<1x256xf32>
    %733 = arith.mulf %732, %729 : vector<1x256xf32>
    %734 = arith.addf %717, %733 : vector<1x256xf32>
    %735 = vector.extract_strided_slice %37 {offsets = [0, 35], sizes = [2, 221], strides = [1, 1]} : vector<2x256xf32> to vector<2x221xf32>
    %736 = vector.extract_strided_slice %37 {offsets = [0, 0], sizes = [2, 35], strides = [1, 1]} : vector<2x256xf32> to vector<2x35xf32>
    %737 = tpu.concatenate %735, %736 in 1 : vector<2x221xf32>, vector<2x35xf32> -> vector<2x256xf32>
    %c82 = arith.constant 82 : index
    %738 = memref.load %arg7[%c82] : memref<98xf32, #tpu.memory_space<smem>>
    %739 = vector.extract_strided_slice %737 {offsets = [0, 0], sizes = [1, 256], strides = [1, 1]} : vector<2x256xf32> to vector<1x256xf32>
    %740 = vector.broadcast %738 : f32 to vector<1x256xf32>
    %741 = arith.mulf %740, %739 : vector<1x256xf32>
    %c83 = arith.constant 83 : index
    %742 = memref.load %arg7[%c83] : memref<98xf32, #tpu.memory_space<smem>>
    %743 = vector.extract_strided_slice %737 {offsets = [1, 0], sizes = [1, 256], strides = [1, 1]} : vector<2x256xf32> to vector<1x256xf32>
    %744 = vector.broadcast %742 : f32 to vector<1x256xf32>
    %745 = arith.mulf %744, %743 : vector<1x256xf32>
    %746 = arith.addf %741, %745 : vector<1x256xf32>
    %747 = vector.extract_strided_slice %38 {offsets = [5, 0], sizes = [1, 256], strides = [1, 1]} : vector<7x256xf32> to vector<1x256xf32>
    %748 = vector.extract_strided_slice %39 {offsets = [6, 0], sizes = [1, 256], strides = [1, 1]} : vector<7x256xf32> to vector<1x256xf32>
    %749 = arith.mulf %747, %748 : vector<1x256xf32>
    %750 = arith.mulf %749, %746 : vector<1x256xf32>
    %751 = arith.addf %734, %750 : vector<1x256xf32>
    %752 = vector.extract_strided_slice %37 {offsets = [0, 45], sizes = [2, 211], strides = [1, 1]} : vector<2x256xf32> to vector<2x211xf32>
    %753 = vector.extract_strided_slice %37 {offsets = [0, 0], sizes = [2, 45], strides = [1, 1]} : vector<2x256xf32> to vector<2x45xf32>
    %754 = tpu.concatenate %752, %753 in 1 : vector<2x211xf32>, vector<2x45xf32> -> vector<2x256xf32>
    %c84 = arith.constant 84 : index
    %755 = memref.load %arg7[%c84] : memref<98xf32, #tpu.memory_space<smem>>
    %756 = vector.extract_strided_slice %754 {offsets = [0, 0], sizes = [1, 256], strides = [1, 1]} : vector<2x256xf32> to vector<1x256xf32>
    %757 = vector.broadcast %755 : f32 to vector<1x256xf32>
    %758 = arith.mulf %757, %756 : vector<1x256xf32>
    %c85 = arith.constant 85 : index
    %759 = memref.load %arg7[%c85] : memref<98xf32, #tpu.memory_space<smem>>
    %760 = vector.extract_strided_slice %754 {offsets = [1, 0], sizes = [1, 256], strides = [1, 1]} : vector<2x256xf32> to vector<1x256xf32>
    %761 = vector.broadcast %759 : f32 to vector<1x256xf32>
    %762 = arith.mulf %761, %760 : vector<1x256xf32>
    %763 = arith.addf %758, %762 : vector<1x256xf32>
    %764 = vector.extract_strided_slice %38 {offsets = [6, 0], sizes = [1, 256], strides = [1, 1]} : vector<7x256xf32> to vector<1x256xf32>
    %765 = vector.extract_strided_slice %39 {offsets = [0, 0], sizes = [1, 256], strides = [1, 1]} : vector<7x256xf32> to vector<1x256xf32>
    %766 = arith.mulf %764, %765 : vector<1x256xf32>
    %767 = arith.mulf %766, %763 : vector<1x256xf32>
    %768 = arith.addf %751, %767 : vector<1x256xf32>
    %769 = vector.extract_strided_slice %37 {offsets = [0, 46], sizes = [2, 210], strides = [1, 1]} : vector<2x256xf32> to vector<2x210xf32>
    %770 = vector.extract_strided_slice %37 {offsets = [0, 0], sizes = [2, 46], strides = [1, 1]} : vector<2x256xf32> to vector<2x46xf32>
    %771 = tpu.concatenate %769, %770 in 1 : vector<2x210xf32>, vector<2x46xf32> -> vector<2x256xf32>
    %c86 = arith.constant 86 : index
    %772 = memref.load %arg7[%c86] : memref<98xf32, #tpu.memory_space<smem>>
    %773 = vector.extract_strided_slice %771 {offsets = [0, 0], sizes = [1, 256], strides = [1, 1]} : vector<2x256xf32> to vector<1x256xf32>
    %774 = vector.broadcast %772 : f32 to vector<1x256xf32>
    %775 = arith.mulf %774, %773 : vector<1x256xf32>
    %c87 = arith.constant 87 : index
    %776 = memref.load %arg7[%c87] : memref<98xf32, #tpu.memory_space<smem>>
    %777 = vector.extract_strided_slice %771 {offsets = [1, 0], sizes = [1, 256], strides = [1, 1]} : vector<2x256xf32> to vector<1x256xf32>
    %778 = vector.broadcast %776 : f32 to vector<1x256xf32>
    %779 = arith.mulf %778, %777 : vector<1x256xf32>
    %780 = arith.addf %775, %779 : vector<1x256xf32>
    %781 = vector.extract_strided_slice %38 {offsets = [6, 0], sizes = [1, 256], strides = [1, 1]} : vector<7x256xf32> to vector<1x256xf32>
    %782 = vector.extract_strided_slice %39 {offsets = [1, 0], sizes = [1, 256], strides = [1, 1]} : vector<7x256xf32> to vector<1x256xf32>
    %783 = arith.mulf %781, %782 : vector<1x256xf32>
    %784 = arith.mulf %783, %780 : vector<1x256xf32>
    %785 = arith.addf %768, %784 : vector<1x256xf32>
    %786 = vector.extract_strided_slice %37 {offsets = [0, 47], sizes = [2, 209], strides = [1, 1]} : vector<2x256xf32> to vector<2x209xf32>
    %787 = vector.extract_strided_slice %37 {offsets = [0, 0], sizes = [2, 47], strides = [1, 1]} : vector<2x256xf32> to vector<2x47xf32>
    %788 = tpu.concatenate %786, %787 in 1 : vector<2x209xf32>, vector<2x47xf32> -> vector<2x256xf32>
    %c88 = arith.constant 88 : index
    %789 = memref.load %arg7[%c88] : memref<98xf32, #tpu.memory_space<smem>>
    %790 = vector.extract_strided_slice %788 {offsets = [0, 0], sizes = [1, 256], strides = [1, 1]} : vector<2x256xf32> to vector<1x256xf32>
    %791 = vector.broadcast %789 : f32 to vector<1x256xf32>
    %792 = arith.mulf %791, %790 : vector<1x256xf32>
    %c89 = arith.constant 89 : index
    %793 = memref.load %arg7[%c89] : memref<98xf32, #tpu.memory_space<smem>>
    %794 = vector.extract_strided_slice %788 {offsets = [1, 0], sizes = [1, 256], strides = [1, 1]} : vector<2x256xf32> to vector<1x256xf32>
    %795 = vector.broadcast %793 : f32 to vector<1x256xf32>
    %796 = arith.mulf %795, %794 : vector<1x256xf32>
    %797 = arith.addf %792, %796 : vector<1x256xf32>
    %798 = vector.extract_strided_slice %38 {offsets = [6, 0], sizes = [1, 256], strides = [1, 1]} : vector<7x256xf32> to vector<1x256xf32>
    %799 = vector.extract_strided_slice %39 {offsets = [2, 0], sizes = [1, 256], strides = [1, 1]} : vector<7x256xf32> to vector<1x256xf32>
    %800 = arith.mulf %798, %799 : vector<1x256xf32>
    %801 = arith.mulf %800, %797 : vector<1x256xf32>
    %802 = arith.addf %785, %801 : vector<1x256xf32>
    %803 = vector.extract_strided_slice %37 {offsets = [0, 48], sizes = [2, 208], strides = [1, 1]} : vector<2x256xf32> to vector<2x208xf32>
    %804 = vector.extract_strided_slice %37 {offsets = [0, 0], sizes = [2, 48], strides = [1, 1]} : vector<2x256xf32> to vector<2x48xf32>
    %805 = tpu.concatenate %803, %804 in 1 : vector<2x208xf32>, vector<2x48xf32> -> vector<2x256xf32>
    %c90 = arith.constant 90 : index
    %806 = memref.load %arg7[%c90] : memref<98xf32, #tpu.memory_space<smem>>
    %807 = vector.extract_strided_slice %805 {offsets = [0, 0], sizes = [1, 256], strides = [1, 1]} : vector<2x256xf32> to vector<1x256xf32>
    %808 = vector.broadcast %806 : f32 to vector<1x256xf32>
    %809 = arith.mulf %808, %807 : vector<1x256xf32>
    %c91 = arith.constant 91 : index
    %810 = memref.load %arg7[%c91] : memref<98xf32, #tpu.memory_space<smem>>
    %811 = vector.extract_strided_slice %805 {offsets = [1, 0], sizes = [1, 256], strides = [1, 1]} : vector<2x256xf32> to vector<1x256xf32>
    %812 = vector.broadcast %810 : f32 to vector<1x256xf32>
    %813 = arith.mulf %812, %811 : vector<1x256xf32>
    %814 = arith.addf %809, %813 : vector<1x256xf32>
    %815 = vector.extract_strided_slice %38 {offsets = [6, 0], sizes = [1, 256], strides = [1, 1]} : vector<7x256xf32> to vector<1x256xf32>
    %816 = vector.extract_strided_slice %39 {offsets = [3, 0], sizes = [1, 256], strides = [1, 1]} : vector<7x256xf32> to vector<1x256xf32>
    %817 = arith.mulf %815, %816 : vector<1x256xf32>
    %818 = arith.mulf %817, %814 : vector<1x256xf32>
    %819 = arith.addf %802, %818 : vector<1x256xf32>
    %820 = vector.extract_strided_slice %37 {offsets = [0, 49], sizes = [2, 207], strides = [1, 1]} : vector<2x256xf32> to vector<2x207xf32>
    %821 = vector.extract_strided_slice %37 {offsets = [0, 0], sizes = [2, 49], strides = [1, 1]} : vector<2x256xf32> to vector<2x49xf32>
    %822 = tpu.concatenate %820, %821 in 1 : vector<2x207xf32>, vector<2x49xf32> -> vector<2x256xf32>
    %c92 = arith.constant 92 : index
    %823 = memref.load %arg7[%c92] : memref<98xf32, #tpu.memory_space<smem>>
    %824 = vector.extract_strided_slice %822 {offsets = [0, 0], sizes = [1, 256], strides = [1, 1]} : vector<2x256xf32> to vector<1x256xf32>
    %825 = vector.broadcast %823 : f32 to vector<1x256xf32>
    %826 = arith.mulf %825, %824 : vector<1x256xf32>
    %c93 = arith.constant 93 : index
    %827 = memref.load %arg7[%c93] : memref<98xf32, #tpu.memory_space<smem>>
    %828 = vector.extract_strided_slice %822 {offsets = [1, 0], sizes = [1, 256], strides = [1, 1]} : vector<2x256xf32> to vector<1x256xf32>
    %829 = vector.broadcast %827 : f32 to vector<1x256xf32>
    %830 = arith.mulf %829, %828 : vector<1x256xf32>
    %831 = arith.addf %826, %830 : vector<1x256xf32>
    %832 = vector.extract_strided_slice %38 {offsets = [6, 0], sizes = [1, 256], strides = [1, 1]} : vector<7x256xf32> to vector<1x256xf32>
    %833 = vector.extract_strided_slice %39 {offsets = [4, 0], sizes = [1, 256], strides = [1, 1]} : vector<7x256xf32> to vector<1x256xf32>
    %834 = arith.mulf %832, %833 : vector<1x256xf32>
    %835 = arith.mulf %834, %831 : vector<1x256xf32>
    %836 = arith.addf %819, %835 : vector<1x256xf32>
    %837 = vector.extract_strided_slice %37 {offsets = [0, 50], sizes = [2, 206], strides = [1, 1]} : vector<2x256xf32> to vector<2x206xf32>
    %838 = vector.extract_strided_slice %37 {offsets = [0, 0], sizes = [2, 50], strides = [1, 1]} : vector<2x256xf32> to vector<2x50xf32>
    %839 = tpu.concatenate %837, %838 in 1 : vector<2x206xf32>, vector<2x50xf32> -> vector<2x256xf32>
    %c94 = arith.constant 94 : index
    %840 = memref.load %arg7[%c94] : memref<98xf32, #tpu.memory_space<smem>>
    %841 = vector.extract_strided_slice %839 {offsets = [0, 0], sizes = [1, 256], strides = [1, 1]} : vector<2x256xf32> to vector<1x256xf32>
    %842 = vector.broadcast %840 : f32 to vector<1x256xf32>
    %843 = arith.mulf %842, %841 : vector<1x256xf32>
    %c95 = arith.constant 95 : index
    %844 = memref.load %arg7[%c95] : memref<98xf32, #tpu.memory_space<smem>>
    %845 = vector.extract_strided_slice %839 {offsets = [1, 0], sizes = [1, 256], strides = [1, 1]} : vector<2x256xf32> to vector<1x256xf32>
    %846 = vector.broadcast %844 : f32 to vector<1x256xf32>
    %847 = arith.mulf %846, %845 : vector<1x256xf32>
    %848 = arith.addf %843, %847 : vector<1x256xf32>
    %849 = vector.extract_strided_slice %38 {offsets = [6, 0], sizes = [1, 256], strides = [1, 1]} : vector<7x256xf32> to vector<1x256xf32>
    %850 = vector.extract_strided_slice %39 {offsets = [5, 0], sizes = [1, 256], strides = [1, 1]} : vector<7x256xf32> to vector<1x256xf32>
    %851 = arith.mulf %849, %850 : vector<1x256xf32>
    %852 = arith.mulf %851, %848 : vector<1x256xf32>
    %853 = arith.addf %836, %852 : vector<1x256xf32>
    %854 = vector.extract_strided_slice %37 {offsets = [0, 51], sizes = [2, 205], strides = [1, 1]} : vector<2x256xf32> to vector<2x205xf32>
    %855 = vector.extract_strided_slice %37 {offsets = [0, 0], sizes = [2, 51], strides = [1, 1]} : vector<2x256xf32> to vector<2x51xf32>
    %856 = tpu.concatenate %854, %855 in 1 : vector<2x205xf32>, vector<2x51xf32> -> vector<2x256xf32>
    %c96 = arith.constant 96 : index
    %857 = memref.load %arg7[%c96] : memref<98xf32, #tpu.memory_space<smem>>
    %858 = vector.extract_strided_slice %856 {offsets = [0, 0], sizes = [1, 256], strides = [1, 1]} : vector<2x256xf32> to vector<1x256xf32>
    %859 = vector.broadcast %857 : f32 to vector<1x256xf32>
    %860 = arith.mulf %859, %858 : vector<1x256xf32>
    %c97 = arith.constant 97 : index
    %861 = memref.load %arg7[%c97] : memref<98xf32, #tpu.memory_space<smem>>
    %862 = vector.extract_strided_slice %856 {offsets = [1, 0], sizes = [1, 256], strides = [1, 1]} : vector<2x256xf32> to vector<1x256xf32>
    %863 = vector.broadcast %861 : f32 to vector<1x256xf32>
    %864 = arith.mulf %863, %862 : vector<1x256xf32>
    %865 = arith.addf %860, %864 : vector<1x256xf32>
    %866 = vector.extract_strided_slice %38 {offsets = [6, 0], sizes = [1, 256], strides = [1, 1]} : vector<7x256xf32> to vector<1x256xf32>
    %867 = vector.extract_strided_slice %39 {offsets = [6, 0], sizes = [1, 256], strides = [1, 1]} : vector<7x256xf32> to vector<1x256xf32>
    %868 = arith.mulf %866, %867 : vector<1x256xf32>
    %869 = arith.mulf %868, %865 : vector<1x256xf32>
    %870 = arith.addf %853, %869 : vector<1x256xf32>
    %c0_25 = arith.constant 0 : index
    %871 = memref.load %arg8[%c0_25] : memref<1xf32, #tpu.memory_space<smem>>
    %872 = vector.broadcast %871 : f32 to vector<1x256xf32>
    %873 = arith.addf %870, %872 : vector<1x256xf32>
    %cst_26 = arith.constant 3.000000e+00 : f32
    %874 = vector.broadcast %cst_26 : f32 to vector<1x256xf32>
    %875 = arith.addf %873, %874 : vector<1x256xf32>
    %cst_27 = arith.constant 1.000000e-03 : f32
    %876 = vector.broadcast %cst_27 : f32 to vector<1x256xf32>
    %877 = arith.mulf %876, %875 : vector<1x256xf32>
    %878 = arith.maximumf %877, %875 : vector<1x256xf32>
    %cst_28 = arith.constant 6.000000e+00 : f32
    %879 = vector.broadcast %cst_28 : f32 to vector<1x256xf32>
    %880 = arith.minimumf %879, %878 : vector<1x256xf32>
    %cst_29 = arith.constant 0.166666672 : f32
    %881 = vector.broadcast %cst_29 : f32 to vector<1x256xf32>
    %882 = arith.mulf %880, %881 : vector<1x256xf32>
    %cst_30 = arith.constant 0.000000e+00 : f32
    %883 = vector.broadcast %cst_30 : f32 to vector<1x256xf32>
    %884 = arith.subf %883, %882 : vector<1x256xf32>
    %885 = math.exp %884 : vector<1x256xf32>
    %cst_31 = arith.constant 1.000000e+00 : f32
    %886 = vector.broadcast %cst_31 : f32 to vector<1x256xf32>
    %887 = arith.addf %886, %885 : vector<1x256xf32>
    %888 = tpu.reciprocal %887 {approx = true} : vector<1x256xf32> -> vector<1x256xf32>
    %889 = vector.broadcast %888 : vector<1x256xf32> to vector<16x256xf32>
    %890 = arith.mulf %30, %889 : vector<16x256xf32>
    %c0_32 = arith.constant 0 : index
    %c0_33 = arith.constant 0 : index
    %c0_34 = arith.constant 0 : index
    %891 = vector.load %arg9[%c0_32, %c0_33, %c0_34] : memref<1x16x256xf32, #tpu.memory_space<vmem>>, vector<1x16x256xf32>
    %892 = vector.shape_cast %891 : vector<1x16x256xf32> to vector<16x256xf32>
    %893 = vector.shape_cast %890 : vector<16x256xf32> to vector<1x16x256xf32>
    tpu.vector_store %arg9[%c0_32, %c0_33, %c0_34], %893 {strides = array<i32>} : memref<1x16x256xf32, #tpu.memory_space<vmem>>, vector<1x16x256xf32>,
    return
  }
  func.func @transform_0(%arg0: i32) -> (i32, i32, i32) {
    %c0_i32 = arith.constant 0 : i32
    %c0_i32_0 = arith.constant 0 : i32
    %c0_i32_1 = arith.constant 0 : i32
    return %arg0, %c0_i32, %c0_i32_0 : i32, i32, i32
  }
  func.func @transform_1(%arg0: i32) -> (i32, i32) {
    %c0_i32 = arith.constant 0 : i32
    %c0_i32_0 = arith.constant 0 : i32
    %c0_i32_1 = arith.constant 0 : i32
    return %c0_i32, %c0_i32_0 : i32, i32
  }
  func.func @transform_2(%arg0: i32) -> (i32, i32) {
    %c0_i32 = arith.constant 0 : i32
    %c0_i32_0 = arith.constant 0 : i32
    %c0_i32_1 = arith.constant 0 : i32
    return %c0_i32, %c0_i32_0 : i32, i32
  }
  func.func @transform_3(%arg0: i32) -> (i32, i32) {
    %c0_i32 = arith.constant 0 : i32
    %c0_i32_0 = arith.constant 0 : i32
    %c0_i32_1 = arith.constant 0 : i32
    return %c0_i32, %c0_i32_0 : i32, i32
  }
  func.func @transform_4(%arg0: i32) -> (i32, i32) {
    %c0_i32 = arith.constant 0 : i32
    %c0_i32_0 = arith.constant 0 : i32
    %c0_i32_1 = arith.constant 0 : i32
    return %c0_i32, %c0_i32_0 : i32, i32
  }
  func.func @transform_5(%arg0: i32) -> (i32, i32) {
    %c0_i32 = arith.constant 0 : i32
    %c0_i32_0 = arith.constant 0 : i32
    %c0_i32_1 = arith.constant 0 : i32
    return %c0_i32, %c0_i32_0 : i32, i32
  }
  func.func @transform_6(%arg0: i32) -> i32 {
    %c0_i32 = arith.constant 0 : i32
    %c0_i32_0 = arith.constant 0 : i32
    return %c0_i32 : i32
  }
  func.func @transform_7(%arg0: i32) -> i32 {
    %c0_i32 = arith.constant 0 : i32
    %c0_i32_0 = arith.constant 0 : i32
    return %c0_i32 : i32
  }
  func.func @transform_8(%arg0: i32) -> (i32, i32, i32) {
    %c0_i32 = arith.constant 0 : i32
    %c0_i32_0 = arith.constant 0 : i32
    %c0_i32_1 = arith.constant 0 : i32
    return %arg0, %c0_i32, %c0_i32_0 : i32, i32, i32
  }
}

</mosaic_0001>

<llo_original>
// kernel: tpu_custom_call.1
$region0: #{tpu_custom_call.1}
  #allocation0 [shape = 'u32[]', space=smem, size = 0x4, offset = 0x4, fixed_abs, tag = 'smem constant byte address 0x4 - core index']
  #allocation1 [shape = 'u32[144,128]{1,0:T(1,128)}', space=vmem, size = 0x12000, scoped, tag = 'internal scratch']
  %s0 = inlined_call_operand.hbm [shape: f32[2,256], index: 0, kind: input, shape index: {}]
  %s1 = inlined_call_operand.hbm [shape: f32[2,256], index: 1, kind: output, shape index: {}]
  %s2 = sld [smem:[#allocation0]]
  $region18: #{tpu_custom_call.1} parent=0
    _
  %s4 = ssub.s32 1, %s2
  %s5 = scalar_select 0, %s4, %s2
  $region1: #{tpu_custom_call.1} parent=0
    #allocation2 [shape = 'u8[2048]{0}', space=vmem, size = 0x800, scoped, tag = 'input window, operand 0, single buffered']
    #allocation3 [shape = 's32[1]{0}', space=sflag, size = 0x4, scoped, tag = 'scoped memory for tpu_custom_call.1']
    #allocation4 [shape = 's32[1]{0}', space=sflag, size = 0x4, scoped, tag = 'scoped memory for tpu_custom_call.1']
    #allocation5 [shape = 'u8[2048]{0}', space=vmem, size = 0x800, scoped, tag = 'output window, operand 0, single buffered']
    %6 = vsyncpa [#allocation3], 0
    %7 = vsyncpa [#allocation4], 0
    // Predicated region
    $region2: #{tpu_custom_call.1} parent=1 // pred_check
      _
    $region3: #{tpu_custom_call.1} parent=1 // pred_check_branch
      %9 = sbr.rel (0) target = $region5
    $region4: #{tpu_custom_call.1} parent=1 // pred_region
      %s11 = ssub.s32 64, 64
      %12 = vsyncadd [#allocation3], %s11
      %s14 = sshll.u32 [#allocation2], 4
      %s15 = int_to_ptr.vmem [resolvable:$true] %s14
      %17 = dma.hbm_to_vmem [thread:$0]  %s0, 64, %s15, [#allocation3]
    $region5: #{tpu_custom_call.1} parent=1 // pred_fallthru
      _
    // Predicated region
    $region6: #{tpu_custom_call.1} parent=1 // pred_check
      _
    $region7: #{tpu_custom_call.1} parent=1 // pred_check_branch
      %19 = sbr.rel (0) target = $region9
    $region8: #{tpu_custom_call.1} parent=1 // pred_region
      %20 = dma.done [#allocation3], 64
    $region9: #{tpu_custom_call.1} parent=1 // pred_fallthru
      _
    %v21 = vld [vmem:[#allocation2] sm:$0xf]
    %v24 = vunpack.c.l.s4 1983009808
    %v25 = vunpack.c.0.s8 %v24
    %v26 = vlaneseq
    %v27 = vshrl.u32 %v26, 7
    %v28 = vsub.s32 %v25, %v27
    %v29 = vrot.slane %v21, %v28
    %v30 = vcombine.high %v29, %v29
    %33 = vrot.lane.b32.xlu0 %v29, 3
    %v34 = vpop.permute.xlu0 %33
    %35 = vrot.lane.b32.xlu0 %v30, 3
    %v36 = vpop.permute.xlu0 %35
    %v37 = vlaneseq
    %v38 = vand.u32 %v37, 127
    %vm39 = vcmp.lt.s32.totalorder %v38, 3
    %v40 = vsel %vm39, %v34, %v36
    %v41 = vsel %vm39, %v36, %v34
    %v44 = vcombine.low %v40, %v41
    %v46 = vunpack.c.l.s4 1983009808
    %v47 = vunpack.c.0.s8 %v46
    %v48 = vlaneseq
    %v49 = vshrl.u32 %v48, 7
    %v50 = vsub.s32 %v47, %v49
    %v51 = vrot.slane %v44, %v50
    %53 = vst [vmem:[#allocation5] sm:$0xf] %v51
    // Predicated region
    $region10: #{tpu_custom_call.1} parent=1 // pred_check
      _
    $region11: #{tpu_custom_call.1} parent=1 // pred_check_branch
      %55 = sbr.rel (0) target = $region13
    $region12: #{tpu_custom_call.1} parent=1 // pred_region
      %s57 = ssub.s32 64, 64
      %58 = vsyncadd [#allocation4], %s57
      %s60 = sshll.u32 [#allocation5], 4
      %s61 = int_to_ptr.vmem [resolvable:$true] %s60
      %63 = dma.vmem_to_hbm [thread:$0]  %s61, 64, %s1, [#allocation4]
    $region13: #{tpu_custom_call.1} parent=1 // pred_fallthru
      _
    // Predicated region
    $region14: #{tpu_custom_call.1} parent=1 // pred_check
      _
    $region15: #{tpu_custom_call.1} parent=1 // pred_check_branch
      %65 = sbr.rel (0) target = $region17
    $region16: #{tpu_custom_call.1} parent=1 // pred_region
      %66 = dma.done [#allocation4], 64
    $region17: #{tpu_custom_call.1} parent=1 // pred_fallthru
      _
    %67 = vsyncpa [#allocation3], 1
    %68 = vsyncpa [#allocation4], 1

// kernel: tpu_custom_call.1
$region0: #{tpu_custom_call.1}
  #allocation0 [shape = 'u32[]', space=smem, size = 0x4, offset = 0x4, fixed_abs, tag = 'smem constant byte address 0x4 - core index']
  #allocation1 [shape = 'u32[144,128]{1,0:T(1,128)}', space=vmem, size = 0x12000, scoped, tag = 'internal scratch']
  #allocation2 [shape = 'f32[1]{0:T(128)S(6)}', space=smem, size = 0x200, scoped, tag = 'scoped memory for tpu_custom_call.1']
  %s0 = inlined_call_operand.hbm [shape: f32[2,16,256], index: 0, kind: input, shape index: {}]
  %s1 = inlined_call_operand.vmem [shape: f32[16,8], index: 1, kind: input, shape index: {}]
  %s2 = inlined_call_operand.vmem [shape: f32[1,8], index: 2, kind: input, shape index: {}]
  %s3 = inlined_call_operand.vmem [shape: f32[16,8], index: 3, kind: input, shape index: {}]
  %s4 = inlined_call_operand.vmem [shape: f32[7,256], index: 4, kind: input, shape index: {}]
  %s5 = inlined_call_operand.vmem [shape: f32[7,256], index: 5, kind: input, shape index: {}]
  %s6 = inlined_call_operand.vmem [shape: f32[98], index: 6, kind: input, shape index: {}]
  %s7 = inlined_call_operand.<no memory space> [shape: f32[1], index: 7, kind: input, shape index: {}]
  %s8 = inlined_call_operand.hbm [shape: f32[2,16,256], index: 8, kind: output, shape index: {}]
  %s9 = sld [smem:[#allocation0]]
  $region73: #{tpu_custom_call.1} parent=0
    _
  %s11 = ssub.s32 1, %s9
  %s12 = scalar_select 0, %s11, %s9
  %13 = sst [smem:[#allocation2]] %s7
  $region1: #{tpu_custom_call.1} parent=0
    #allocation3 [shape = 'u8[32768]{0}', space=vmem, size = 0x8000, scoped, tag = 'input window, operand 0']
    #allocation4 [shape = 's32[2]{0}', space=sflag, size = 0x8, scoped, tag = 'scoped memory for tpu_custom_call.1']
    #allocation5 [shape = 's32[2]{0}', space=sflag, size = 0x8, scoped, tag = 'scoped memory for tpu_custom_call.1']
    #allocation6 [shape = 's32[2]{0}', space=sflag, size = 0x8, scoped, tag = 'scoped memory for tpu_custom_call.1']
    #allocation7 [shape = 'u8[512]{0}', space=smem, size = 0x200, scoped, tag = 'input window, operand 6, single buffered']
    #allocation8 [shape = 'u8[32768]{0}', space=vmem, size = 0x8000, scoped, tag = 'output window, operand 0']
    %14 = vsyncpa [#allocation4], 0
    %s15 = scalar_lea.sflag [#allocation4], 1
    %16 = vsyncpa %s15, 0
    %17 = vsyncpa [#allocation6], 0
    %18 = vsyncpa [#allocation5], 0
    %s19 = scalar_lea.sflag [#allocation5], 1
    %20 = vsyncpa %s19, 0
    loop: start=0, step=1, limit=4
    $region2: #{tpu_custom_call.1} parent=1 // loop_pre_header
      _
    $region3: #{tpu_custom_call.1} parent=1 // loop_header
      %s22 = sphi 0, %s26
      %p23 = scmp.ge.s32.totalorder %s22, 4
      %s32 = sphi 0, %s34
      %s35 = sphi 0, %s32
      %s36 = sphi 0, %s35
      %s52 = sphi 0, %s36
      %s56 = sphi 0, %s56
      %s58 = sphi 0, %s56
      %s59 = sphi 0, %s58
      %s73 = sphi 0, %s59
      %s77 = sphi 0, %s77
      %s79 = sphi 0, %s77
      %s80 = sphi 0, %s79
      %s94 = sphi 0, %s80
      %s98 = sphi 0, %s98
      %s100 = sphi 0, %s98
      %s101 = sphi 0, %s100
      %s115 = sphi 0, %s101
      %s119 = sphi 0, %s119
      %s121 = sphi 0, %s119
      %s122 = sphi 0, %s121
      %s136 = sphi 0, %s122
      %s140 = sphi 0, %s140
      %s142 = sphi 0, %s140
      %s143 = sphi 0, %s142
      %s157 = sphi 0, %s143
      %s161 = sphi 0, %s161
      %s163 = sphi 0, %s161
      %s164 = sphi 0, %s163
      %s178 = sphi 0, %s164
      %s182 = sphi 0, %s182
      %s184 = sphi 0, %s182
      %s185 = sphi 0, %s184
      %s199 = sphi 0, %s185
      %s205 = sphi 0, %s207
      %s208 = sphi 0, %s205
      %s209 = sphi 0, %s208
      %s225 = sphi 0, %s209
    $region4: #{tpu_custom_call.1} parent=1 // loop_header_branch
      %25 = sbr.rel (%p23) target = $region8
    $region5: #{tpu_custom_call.1} parent=1 // loop_body
      %s27 = ssub.s32 %s22, 1
      %s28 = ssub.s32 %s22, 2
      %s29 = sadd.s32 %s22, 1
      %s30 = ssub.s32 %s22, %s29
      %p31 = scmp.eq.s32.totalorder %s30, 0
      %s33 = sadd.s32 %s32, 1
      %s34 = scalar_select %p31, %s32, %s33
      %p37 = pneg %p31
      %p38 = scmp.eq.s32.totalorder %s22, 1
      %p39 = por %p37, %p38
      %p40 = scmp.ne.s32.totalorder %s32, %s35
      %p41 = scmp.eq.s32.totalorder %s22, 0
      %p42 = por %p40, %p41
      %p43 = scmp.ne.s32.totalorder %s32, %s35
      %p44 = scmp.eq.s32.totalorder %s27, 1
      %p45 = por %p43, %p44
      %p46 = scmp.ne.s32.totalorder %s35, %s36
      %p47 = scmp.eq.s32.totalorder %s27, 0
      %p48 = por %p46, %p47
      %p49 = scmp.ne.s32.totalorder %s35, %s36
      %p50 = scmp.eq.s32.totalorder %s28, 1
      %p51 = por %p49, %p50
      %p53 = scmp.ne.s32.totalorder %s36, %s52
      %p54 = scmp.eq.s32.totalorder %s28, 0
      %p55 = por %p53, %p54
      %s57 = sadd.s32 %s56, 1
      %p60 = scmp.eq.s32.totalorder %s22, 1
      %p61 = scmp.ne.s32.totalorder %s56, %s58
      %p62 = scmp.eq.s32.totalorder %s22, 0
      %p63 = por %p61, %p62
      %p64 = scmp.ne.s32.totalorder %s56, %s58
      %p65 = scmp.eq.s32.totalorder %s27, 1
      %p66 = por %p64, %p65
      %p67 = scmp.ne.s32.totalorder %s58, %s59
      %p68 = scmp.eq.s32.totalorder %s27, 0
      %p69 = por %p67, %p68
      %p70 = scmp.ne.s32.totalorder %s58, %s59
      %p71 = scmp.eq.s32.totalorder %s28, 1
      %p72 = por %p70, %p71
      %p74 = scmp.ne.s32.totalorder %s59, %s73
      %p75 = scmp.eq.s32.totalorder %s28, 0
      %p76 = por %p74, %p75
      %s78 = sadd.s32 %s77, 1
      %p81 = scmp.eq.s32.totalorder %s22, 1
      %p82 = scmp.ne.s32.totalorder %s77, %s79
      %p83 = scmp.eq.s32.totalorder %s22, 0
      %p84 = por %p82, %p83
      %p85 = scmp.ne.s32.totalorder %s77, %s79
      %p86 = scmp.eq.s32.totalorder %s27, 1
      %p87 = por %p85, %p86
      %p88 = scmp.ne.s32.totalorder %s79, %s80
      %p89 = scmp.eq.s32.totalorder %s27, 0
      %p90 = por %p88, %p89
      %p91 = scmp.ne.s32.totalorder %s79, %s80
      %p92 = scmp.eq.s32.totalorder %s28, 1
      %p93 = por %p91, %p92
      %p95 = scmp.ne.s32.totalorder %s80, %s94
      %p96 = scmp.eq.s32.totalorder %s28, 0
      %p97 = por %p95, %p96
      %s99 = sadd.s32 %s98, 1
      %p102 = scmp.eq.s32.totalorder %s22, 1
      %p103 = scmp.ne.s32.totalorder %s98, %s100
      %p104 = scmp.eq.s32.totalorder %s22, 0
      %p105 = por %p103, %p104
      %p106 = scmp.ne.s32.totalorder %s98, %s100
      %p107 = scmp.eq.s32.totalorder %s27, 1
      %p108 = por %p106, %p107
      %p109 = scmp.ne.s32.totalorder %s100, %s101
      %p110 = scmp.eq.s32.totalorder %s27, 0
      %p111 = por %p109, %p110
      %p112 = scmp.ne.s32.totalorder %s100, %s101
      %p113 = scmp.eq.s32.totalorder %s28, 1
      %p114 = por %p112, %p113
      %p116 = scmp.ne.s32.totalorder %s101, %s115
      %p117 = scmp.eq.s32.totalorder %s28, 0
      %p118 = por %p116, %p117
      %s120 = sadd.s32 %s119, 1
      %p123 = scmp.eq.s32.totalorder %s22, 1
      %p124 = scmp.ne.s32.totalorder %s119, %s121
      %p125 = scmp.eq.s32.totalorder %s22, 0
      %p126 = por %p124, %p125
      %p127 = scmp.ne.s32.totalorder %s119, %s121
      %p128 = scmp.eq.s32.totalorder %s27, 1
      %p129 = por %p127, %p128
      %p130 = scmp.ne.s32.totalorder %s121, %s122
      %p131 = scmp.eq.s32.totalorder %s27, 0
      %p132 = por %p130, %p131
      %p133 = scmp.ne.s32.totalorder %s121, %s122
      %p134 = scmp.eq.s32.totalorder %s28, 1
      %p135 = por %p133, %p134
      %p137 = scmp.ne.s32.totalorder %s122, %s136
      %p138 = scmp.eq.s32.totalorder %s28, 0
      %p139 = por %p137, %p138
      %s141 = sadd.s32 %s140, 1
      %p144 = scmp.eq.s32.totalorder %s22, 1
      %p145 = scmp.ne.s32.totalorder %s140, %s142
      %p146 = scmp.eq.s32.totalorder %s22, 0
      %p147 = por %p145, %p146
      %p148 = scmp.ne.s32.totalorder %s140, %s142
      %p149 = scmp.eq.s32.totalorder %s27, 1
      %p150 = por %p148, %p149
      %p151 = scmp.ne.s32.totalorder %s142, %s143
      %p152 = scmp.eq.s32.totalorder %s27, 0
      %p153 = por %p151, %p152
      %p154 = scmp.ne.s32.totalorder %s142, %s143
      %p155 = scmp.eq.s32.totalorder %s28, 1
      %p156 = por %p154, %p155
      %p158 = scmp.ne.s32.totalorder %s143, %s157
      %p159 = scmp.eq.s32.totalorder %s28, 0
      %p160 = por %p158, %p159
      %s162 = sadd.s32 %s161, 1
      %p165 = scmp.eq.s32.totalorder %s22, 1
      %p166 = scmp.ne.s32.totalorder %s161, %s163
      %p167 = scmp.eq.s32.totalorder %s22, 0
      %p168 = por %p166, %p167
      %p169 = scmp.ne.s32.totalorder %s161, %s163
      %p170 = scmp.eq.s32.totalorder %s27, 1
      %p171 = por %p169, %p170
      %p172 = scmp.ne.s32.totalorder %s163, %s164
      %p173 = scmp.eq.s32.totalorder %s27, 0
      %p174 = por %p172, %p173
      %p175 = scmp.ne.s32.totalorder %s163, %s164
      %p176 = scmp.eq.s32.totalorder %s28, 1
      %p177 = por %p175, %p176
      %p179 = scmp.ne.s32.totalorder %s164, %s178
      %p180 = scmp.eq.s32.totalorder %s28, 0
      %p181 = por %p179, %p180
      %s183 = sadd.s32 %s182, 1
      %p186 = scmp.eq.s32.totalorder %s22, 1
      %p187 = scmp.ne.s32.totalorder %s182, %s184
      %p188 = scmp.eq.s32.totalorder %s22, 0
      %p189 = por %p187, %p188
      %p190 = scmp.ne.s32.totalorder %s182, %s184
      %p191 = scmp.eq.s32.totalorder %s27, 1
      %p192 = por %p190, %p191
      %p193 = scmp.ne.s32.totalorder %s184, %s185
      %p194 = scmp.eq.s32.totalorder %s27, 0
      %p195 = por %p193, %p194
      %p196 = scmp.ne.s32.totalorder %s184, %s185
      %p197 = scmp.eq.s32.totalorder %s28, 1
      %p198 = por %p196, %p197
      %p200 = scmp.ne.s32.totalorder %s185, %s199
      %p201 = scmp.eq.s32.totalorder %s28, 0
      %p202 = por %p200, %p201
      %s203 = ssub.s32 %s22, %s29
      %p204 = scmp.eq.s32.totalorder %s203, 0
      %s206 = sadd.s32 %s205, 1
      %s207 = scalar_select %p204, %s205, %s206
      %p210 = pneg %p204
      %p211 = scmp.eq.s32.totalorder %s22, 1
      %p212 = por %p210, %p211
      %p213 = scmp.ne.s32.totalorder %s205, %s208
      %p214 = scmp.eq.s32.totalorder %s22, 0
      %p215 = por %p213, %p214
      %p216 = scmp.ne.s32.totalorder %s205, %s208
      %p217 = scmp.eq.s32.totalorder %s27, 1
      %p218 = por %p216, %p217
      %p219 = scmp.ne.s32.totalorder %s208, %s209
      %p220 = scmp.eq.s32.totalorder %s27, 0
      %p221 = por %p219, %p220
      %p222 = scmp.ne.s32.totalorder %s208, %s209
      %p223 = scmp.eq.s32.totalorder %s28, 1
      %p224 = por %p222, %p223
      %p226 = scmp.ne.s32.totalorder %s209, %s225
      %p227 = scmp.eq.s32.totalorder %s28, 0
      %p228 = por %p226, %p227
      %p229 = scmp.le.s32.totalorder 1, %s22
      %p230 = scmp.lt.s32.totalorder %s22, 3
      %p231 = pnand %p229, %p230
      %p232 = pneg %p231
      // Predicated region
      $region9: #{tpu_custom_call.1} parent=5 // pred_check
        _
      $region10: #{tpu_custom_call.1} parent=5 // pred_check_branch
        %234 = sbr.rel (%p231) target = $region12
      $region11: #{tpu_custom_call.1} parent=5 // pred_region
        %s235 = ssub.s32 %s22, 1
        // Predicated region
        $region13: #{tpu_custom_call.1} parent=11 // pred_check
          %p236 = pneg %p69
        $region14: #{tpu_custom_call.1} parent=11 // pred_check_branch
          %238 = sbr.rel (%p236) target = $region16
        $region15: #{tpu_custom_call.1} parent=11 // pred_region
          _
        $region16: #{tpu_custom_call.1} parent=11 // pred_fallthru
          _
        // Predicated region
        $region17: #{tpu_custom_call.1} parent=11 // pred_check
          %p239 = pneg %p90
        $region18: #{tpu_custom_call.1} parent=11 // pred_check_branch
          %241 = sbr.rel (%p239) target = $region20
        $region19: #{tpu_custom_call.1} parent=11 // pred_region
          _
        $region20: #{tpu_custom_call.1} parent=11 // pred_fallthru
          _
        // Predicated region
        $region21: #{tpu_custom_call.1} parent=11 // pred_check
          %p242 = pneg %p111
        $region22: #{tpu_custom_call.1} parent=11 // pred_check_branch
          %244 = sbr.rel (%p242) target = $region24
        $region23: #{tpu_custom_call.1} parent=11 // pred_region
          _
        $region24: #{tpu_custom_call.1} parent=11 // pred_fallthru
          _
        // Predicated region
        $region25: #{tpu_custom_call.1} parent=11 // pred_check
          %p245 = pneg %p132
        $region26: #{tpu_custom_call.1} parent=11 // pred_check_branch
          %247 = sbr.rel (%p245) target = $region28
        $region27: #{tpu_custom_call.1} parent=11 // pred_region
          _
        $region28: #{tpu_custom_call.1} parent=11 // pred_fallthru
          _
        // Predicated region
        $region29: #{tpu_custom_call.1} parent=11 // pred_check
          %p248 = pneg %p153
        $region30: #{tpu_custom_call.1} parent=11 // pred_check_branch
          %250 = sbr.rel (%p248) target = $region32
        $region31: #{tpu_custom_call.1} parent=11 // pred_region
          _
        $region32: #{tpu_custom_call.1} parent=11 // pred_fallthru
          _
        // Predicated region
        $region33: #{tpu_custom_call.1} parent=11 // pred_check
          %p251 = pneg %p174
        $region34: #{tpu_custom_call.1} parent=11 // pred_check_branch
          %253 = sbr.rel (%p251) target = $region36
        $region35: #{tpu_custom_call.1} parent=11 // pred_region
          %s255 = ssub.s32 16, 16
          %256 = vsyncadd [#allocation6], %s255
          %s258 = sshll.u32 %s6, 4
          %s259 = int_to_ptr.vmem [resolvable:$true] %s258
          %261 = dma.vmem_to_smem %s259, 16, [#allocation7], [#allocation6]
        $region36: #{tpu_custom_call.1} parent=11 // pred_fallthru
          _
        // Predicated region
        $region37: #{tpu_custom_call.1} parent=11 // pred_check
          %p262 = pneg %p195
        $region38: #{tpu_custom_call.1} parent=11 // pred_check_branch
          %264 = sbr.rel (%p262) target = $region40
        $region39: #{tpu_custom_call.1} parent=11 // pred_region
          _
        $region40: #{tpu_custom_call.1} parent=11 // pred_fallthru
          _
      $region12: #{tpu_custom_call.1} parent=5 // pred_fallthru
        _
      %p265 = scmp.lt.s32.totalorder %s22, 2
      // Predicated region
      $region41: #{tpu_custom_call.1} parent=5 // pred_check
        %p266 = pneg %p265
      $region42: #{tpu_custom_call.1} parent=5 // pred_check_branch
        %268 = sbr.rel (%p266) target = $region44
      $region43: #{tpu_custom_call.1} parent=5 // pred_region
        // Predicated region
        $region45: #{tpu_custom_call.1} parent=43 // pred_check
          %p269 = pneg %p42
        $region46: #{tpu_custom_call.1} parent=43 // pred_check_branch
          %271 = sbr.rel (%p269) target = $region48
        $region47: #{tpu_custom_call.1} parent=43 // pred_region
          %s272 = sand.u32 %s32, 1
          %s273 = scalar_lea.sflag [#allocation4], %s272
          %s274 = sand.u32 %s32, 1
          %s275 = smul.addr %s274, 32
          %s276 = scalar_lea.vmem [#allocation3], %s275
          %s278 = ssub.s32 512, 512
          %279 = vsyncadd %s273, %s278
          %s280 = smul.addr %s22, 4
          %s281 = smul.addr %s280, 128
          %s282 = scalar_lea.hbm %s0, %s281
          %s283 = sshll.u32 %s276, 4
          %s284 = int_to_ptr.vmem [resolvable:$true] %s283
          %289 = dma.hbm_to_vmem [thread:$0]  %s282, 512, %s284, %s273, 256, 256, 16
        $region48: #{tpu_custom_call.1} parent=43 // pred_fallthru
          _
      $region44: #{tpu_custom_call.1} parent=5 // pred_fallthru
        _
      %p290 = scmp.le.s32.totalorder 1, %s22
      %p291 = scmp.lt.s32.totalorder %s22, 3
      %p292 = pnand %p290, %p291
      %p293 = pneg %p292
      // Predicated region
      $region49: #{tpu_custom_call.1} parent=5 // pred_check
        _
      $region50: #{tpu_custom_call.1} parent=5 // pred_check_branch
        %295 = sbr.rel (%p292) target = $region52
      $region51: #{tpu_custom_call.1} parent=5 // pred_region
        %s296 = ssub.s32 %s22, 1
        %s297 = sand.u32 %s35, 1
        %s298 = scalar_lea.sflag [#allocation4], %s297
        %s299 = sand.u32 %s35, 1
        %s300 = smul.addr %s299, 32
        %s301 = scalar_lea.vmem [#allocation3], %s300
        // Predicated region
        $region53: #{tpu_custom_call.1} parent=51 // pred_check
          %p302 = pneg %p48
        $region54: #{tpu_custom_call.1} parent=51 // pred_check_branch
          %304 = sbr.rel (%p302) target = $region56
        $region55: #{tpu_custom_call.1} parent=51 // pred_region
          %305 = dma.done %s298, 512
        $region56: #{tpu_custom_call.1} parent=51 // pred_fallthru
          _
        // Predicated region
        $region57: #{tpu_custom_call.1} parent=51 // pred_check
          %p306 = pneg %p174
        $region58: #{tpu_custom_call.1} parent=51 // pred_check_branch
          %308 = sbr.rel (%p306) target = $region60
        $region59: #{tpu_custom_call.1} parent=51 // pred_region
          %309 = dma.done [#allocation6], 16
        $region60: #{tpu_custom_call.1} parent=51 // pred_fallthru
          _
        %310 = sfence
        %s311 = sand.u32 %s35, 1
        %s312 = scalar_lea.sflag [#allocation4], %s311
        %s313 = sand.u32 %s35, 1
        %s314 = smul.addr %s313, 32
        %s315 = scalar_lea.vmem [#allocation3], %s314
        %p316 = pneg %p48
        %p317 = pneg %p45
        %p318 = pneg %p69
        %p319 = pneg %p66
        %p320 = pneg %p90
        %p321 = pneg %p87
        %p322 = pneg %p111
        %p323 = pneg %p108
        %p324 = pneg %p132
        %p325 = pneg %p129
        %p326 = pneg %p153
        %p327 = pneg %p150
        %p328 = pneg %p174
        %p329 = pneg %p171
        %p330 = pneg %p195
        %p331 = pneg %p192
        %p332 = pneg %p221
        %p333 = pneg %p218
        %s334 = sand.u32 %s208, 1
        %s335 = scalar_lea.sflag [#allocation5], %s334
        %s336 = sand.u32 %s208, 1
        %s337 = smul.addr %s336, 32
        %s338 = scalar_lea.vmem [#allocation8], %s337
        %v339 = vld [vmem:[%s301] sm:$0xff]
        %v340 = vld [vmem:[%s301 + $0x8] sm:$0xff]
        %v341 = vld [vmem:[%s301 + $0x10] sm:$0xff]
        %v342 = vld [vmem:[%s301 + $0x18] sm:$0xff]
        %v343 = vadd.f32 %v339, %v340
        %344 = vadd.xlane.f32.xlu0 %v343
        %v345 = vpop.xlane.xlu0 %344
        %v346 = vadd.f32 %v341, %v342
        %347 = vadd.xlane.f32.xlu0 %v346
        %v348 = vpop.xlane.xlu0 %347
        %v349 = vmul.f32 %v345, 0.00390625
        %v350 = vmul.f32 %v348, 0.00390625
        %v351 = vld [vmem:[%s1] sm:$0xff]
        %v352 = vld [vmem:[%s1 + $0x8] sm:$0xff]
        %v353 = vmul.f32 %v351, %v349
        %v354 = vmul.f32 %v352, %v350
        %vm355 = vcmask 64512
        %v356 = vsel %vm355, %v353, 0.0
        %v357 = vsel %vm355, %v354, 0.0
        %v358 = vadd.f32 %v356, %v357
        %v359 = vrot.slane %v358, 4
        %v360 = vadd.f32 %v358, %v359
        %v361 = vrot.slane %v360, 2
        %v362 = vadd.f32 %v360, %v361
        %v363 = vrot.slane %v362, 1
        %v364 = vadd.f32 %v362, %v363
        %v365 = vld [vmem:[%s2] sm:$0x1]
        %v366 = vadd.f32 %v364, %v365
        %v367 = vmax.f32 %v366, 0.0
        %v368 = vld [vmem:[%s3] sm:$0xff]
        %v369 = vld [vmem:[%s3 + $0x8] sm:$0xff]
        %v370 = vlaneseq
        %v371 = vshrl.u32 %v370, 7
        %v372 = vsub.s32 0, %v371
        %v373 = vrot.slane %v367, %v372
        %v374 = vmul.f32 %v368, %v373
        %v375 = vmul.f32 %v369, %v373
        %v376 = vsel %vm355, %v374, 0.0
        %377 = vadd.xlane.f32.xlu0 %v376
        %v378 = vpop.xlane.xlu0 %377
        %v379 = vsel %vm355, %v375, 0.0
        %380 = vadd.xlane.f32.xlu0 %v379
        %v381 = vpop.xlane.xlu0 %380
        %v382 = vadd.f32 %v378, 3.0
        %v383 = vadd.f32 %v381, 3.0
        %v384 = vmul.f32 %v382, 0.001
        %v385 = vmul.f32 %v383, 0.001
        %v386 = vmax.f32 %v384, %v382
        %v387 = vmax.f32 %v385, %v383
        %v388 = vmin.f32 %v386, 6.0
        %v389 = vmin.f32 %v387, 6.0
        %v390 = vmul.f32 %v388, 0.16666667
        %v391 = vmul.f32 %v389, 0.16666667
        %v392 = vmul.f32 %v339, %v390
        %v393 = vmul.f32 %v340, %v390
        %v394 = vmul.f32 %v341, %v391
        %v395 = vmul.f32 %v342, %v391
        %v396 = vmax.f32 %v392, %v394
        %v397 = vrot.slane %v396, 4
        %v398 = vmax.f32 %v396, %v397
        %v399 = vrot.slane %v398, 2
        %v400 = vmax.f32 %v398, %v399
        %v401 = vrot.slane %v400, 1
        %v402 = vmax.f32 %v400, %v401
        %v403 = vmax.f32 %v393, %v395
        %v404 = vrot.slane %v403, 4
        %v405 = vmax.f32 %v403, %v404
        %v406 = vrot.slane %v405, 2
        %v407 = vmax.f32 %v405, %v406
        %v408 = vrot.slane %v407, 1
        %v409 = vmax.f32 %v407, %v408
        %v410 = vadd.f32 %v392, %v394
        %v411 = vrot.slane %v410, 4
        %v412 = vadd.f32 %v410, %v411
        %v413 = vrot.slane %v412, 2
        %v414 = vadd.f32 %v412, %v413
        %v415 = vrot.slane %v414, 1
        %v416 = vadd.f32 %v414, %v415
        %v417 = vadd.f32 %v393, %v395
        %v418 = vrot.slane %v417, 4
        %v419 = vadd.f32 %v417, %v418
        %v420 = vrot.slane %v419, 2
        %v421 = vadd.f32 %v419, %v420
        %v422 = vrot.slane %v421, 1
        %v423 = vadd.f32 %v421, %v422
        %v424 = vmul.f32 %v416, 0.0625
        %v425 = vmul.f32 %v423, 0.0625
        %vm426 = vcmask 1040384
        %v427 = vsel %vm426, %v402, %v424
        %v428 = vsel %vm426, %v409, %v425
        %v429 = vld [vmem:[%s4] sm:$0x7f]
        %v430 = vld [vmem:[%s4 + $0x8] sm:$0x7f]
        %v431 = vld [vmem:[%s5] sm:$0x7f]
        %v432 = vld [vmem:[%s5 + $0x8] sm:$0x7f]
        %434 = vrot.lane.b32.xlu0 %v428, 51
        %v435 = vpop.permute.xlu0 %434
        %438 = vrot.lane.b32.xlu0 %v427, 51
        %v439 = vpop.permute.xlu0 %438
        %vm440 = vcmask 416768
        %v441 = vsel %vm440, %v439, %v435
        %v444 = vsel %vm440, %v435, %v439
        %s445 = sld [smem:[#allocation7]]
        %v446 = vstv %s445
        %v447 = vmul.f32 %v446, %v444
        %v448 = vmul.f32 %v446, %v441
        %s449 = sld [smem:[#allocation7 + $0x1]]
        %v450 = vstv %s449
        %v451 = vmul.f32 %v450, %v444
        %v452 = vmul.f32 %v450, %v441
        %v455 = vrot.slane %v451, 1
        %v456 = vrot.slane %v452, 1
        %v459 = vadd.f32 %v447, %v455
        %v460 = vadd.f32 %v448, %v456
        %v461 = vmul.f32 %v429, %v431
        %v462 = vmul.f32 %v430, %v432
        %v463 = vmul.f32 %v461, %v459
        %v464 = vmul.f32 %v462, %v460
        %v465 = vadd.f32 %v463, 0.0
        %v466 = vadd.f32 %v464, 0.0
        %467 = vrot.lane.b32.xlu0 %v428, 50
        %v468 = vpop.permute.xlu0 %467
        %470 = vrot.lane.b32.xlu0 %v427, 50
        %v471 = vpop.permute.xlu0 %470
        %vm472 = vcmask 408576
        %v473 = vsel %vm472, %v471, %v468
        %v476 = vsel %vm472, %v468, %v471
        %s477 = sld [smem:[#allocation7 + $0x2]]
        %v478 = vstv %s477
        %v479 = vmul.f32 %v478, %v476
        %v480 = vmul.f32 %v478, %v473
        %s481 = sld [smem:[#allocation7 + $0x3]]
        %v482 = vstv %s481
        %v483 = vmul.f32 %v482, %v476
        %v484 = vmul.f32 %v482, %v473
        %v487 = vrot.slane %v483, 1
        %v488 = vrot.slane %v484, 1
        %v491 = vadd.f32 %v479, %v487
        %v492 = vadd.f32 %v480, %v488
        %v495 = vrot.slane %v431, 1
        %v496 = vrot.slane %v432, 1
        %v499 = vmul.f32 %v429, %v495
        %v500 = vmul.f32 %v430, %v496
        %v501 = vmul.f32 %v499, %v491
        %v502 = vmul.f32 %v500, %v492
        %v503 = vadd.f32 %v465, %v501
        %v504 = vadd.f32 %v466, %v502
        %505 = vrot.lane.b32.xlu0 %v428, 49
        %v506 = vpop.permute.xlu0 %505
        %508 = vrot.lane.b32.xlu0 %v427, 49
        %v509 = vpop.permute.xlu0 %508
        %vm510 = vcmask 400384
        %v511 = vsel %vm510, %v509, %v506
        %v514 = vsel %vm510, %v506, %v509
        %s515 = sld [smem:[#allocation7 + $0x4]]
        %v516 = vstv %s515
        %v517 = vmul.f32 %v516, %v514
        %v518 = vmul.f32 %v516, %v511
        %s519 = sld [smem:[#allocation7 + $0x5]]
        %v520 = vstv %s519
        %v521 = vmul.f32 %v520, %v514
        %v522 = vmul.f32 %v520, %v511
        %v525 = vrot.slane %v521, 1
        %v526 = vrot.slane %v522, 1
        %v529 = vadd.f32 %v517, %v525
        %v530 = vadd.f32 %v518, %v526
        %v531 = vrot.slane %v431, 2
        %v532 = vrot.slane %v432, 2
        %v535 = vmul.f32 %v429, %v531
        %v536 = vmul.f32 %v430, %v532
        %v537 = vmul.f32 %v535, %v529
        %v538 = vmul.f32 %v536, %v530
        %v539 = vadd.f32 %v503, %v537
        %v540 = vadd.f32 %v504, %v538
        %541 = vrot.lane.b32.xlu0 %v428, 48
        %v542 = vpop.permute.xlu0 %541
        %544 = vrot.lane.b32.xlu0 %v427, 48
        %v545 = vpop.permute.xlu0 %544
        %vm546 = vcmask 392192
        %v547 = vsel %vm546, %v545, %v542
        %v550 = vsel %vm546, %v542, %v545
        %s551 = sld [smem:[#allocation7 + $0x6]]
        %v552 = vstv %s551
        %v553 = vmul.f32 %v552, %v550
        %v554 = vmul.f32 %v552, %v547
        %s555 = sld [smem:[#allocation7 + $0x7]]
        %v556 = vstv %s555
        %v557 = vmul.f32 %v556, %v550
        %v558 = vmul.f32 %v556, %v547
        %v561 = vrot.slane %v557, 1
        %v562 = vrot.slane %v558, 1
        %v565 = vadd.f32 %v553, %v561
        %v566 = vadd.f32 %v554, %v562
        %v567 = vrot.slane %v431, 3
        %v568 = vrot.slane %v432, 3
        %v571 = vmul.f32 %v429, %v567
        %v572 = vmul.f32 %v430, %v568
        %v573 = vmul.f32 %v571, %v565
        %v574 = vmul.f32 %v572, %v566
        %v575 = vadd.f32 %v539, %v573
        %v576 = vadd.f32 %v540, %v574
        %577 = vrot.lane.b32.xlu0 %v428, 47
        %v578 = vpop.permute.xlu0 %577
        %580 = vrot.lane.b32.xlu0 %v427, 47
        %v581 = vpop.permute.xlu0 %580
        %vm582 = vcmask 384000
        %v583 = vsel %vm582, %v581, %v578
        %v586 = vsel %vm582, %v578, %v581
        %s587 = sld [smem:[#allocation7 + $0x8]]
        %v588 = vstv %s587
        %v589 = vmul.f32 %v588, %v586
        %v590 = vmul.f32 %v588, %v583
        %s591 = sld [smem:[#allocation7 + $0x9]]
        %v592 = vstv %s591
        %v593 = vmul.f32 %v592, %v586
        %v594 = vmul.f32 %v592, %v583
        %v597 = vrot.slane %v593, 1
        %v598 = vrot.slane %v594, 1
        %v601 = vadd.f32 %v589, %v597
        %v602 = vadd.f32 %v590, %v598
        %v603 = vrot.slane %v431, 4
        %v604 = vrot.slane %v432, 4
        %v607 = vmul.f32 %v429, %v603
        %v608 = vmul.f32 %v430, %v604
        %v609 = vmul.f32 %v607, %v601
        %v610 = vmul.f32 %v608, %v602
        %v611 = vadd.f32 %v575, %v609
        %v612 = vadd.f32 %v576, %v610
        %613 = vrot.lane.b32.xlu0 %v428, 46
        %v614 = vpop.permute.xlu0 %613
        %616 = vrot.lane.b32.xlu0 %v427, 46
        %v617 = vpop.permute.xlu0 %616
        %vm618 = vcmask 375808
        %v619 = vsel %vm618, %v617, %v614
        %v622 = vsel %vm618, %v614, %v617
        %s623 = sld [smem:[#allocation7 + $0xa]]
        %v624 = vstv %s623
        %v625 = vmul.f32 %v624, %v622
        %v626 = vmul.f32 %v624, %v619
        %s627 = sld [smem:[#allocation7 + $0xb]]
        %v628 = vstv %s627
        %v629 = vmul.f32 %v628, %v622
        %v630 = vmul.f32 %v628, %v619
        %v633 = vrot.slane %v629, 1
        %v634 = vrot.slane %v630, 1
        %v637 = vadd.f32 %v625, %v633
        %v638 = vadd.f32 %v626, %v634
        %v639 = vrot.slane %v431, 5
        %v640 = vrot.slane %v432, 5
        %v643 = vmul.f32 %v429, %v639
        %v644 = vmul.f32 %v430, %v640
        %v645 = vmul.f32 %v643, %v637
        %v646 = vmul.f32 %v644, %v638
        %v647 = vadd.f32 %v611, %v645
        %v648 = vadd.f32 %v612, %v646
        %649 = vrot.lane.b32.xlu0 %v428, 45
        %v650 = vpop.permute.xlu0 %649
        %652 = vrot.lane.b32.xlu0 %v427, 45
        %v653 = vpop.permute.xlu0 %652
        %vm654 = vcmask 367616
        %v655 = vsel %vm654, %v653, %v650
        %v658 = vsel %vm654, %v650, %v653
        %s659 = sld [smem:[#allocation7 + $0xc]]
        %v660 = vstv %s659
        %v661 = vmul.f32 %v660, %v658
        %v662 = vmul.f32 %v660, %v655
        %s663 = sld [smem:[#allocation7 + $0xd]]
        %v664 = vstv %s663
        %v665 = vmul.f32 %v664, %v658
        %v666 = vmul.f32 %v664, %v655
        %v669 = vrot.slane %v665, 1
        %v670 = vrot.slane %v666, 1
        %v673 = vadd.f32 %v661, %v669
        %v674 = vadd.f32 %v662, %v670
        %v675 = vrot.slane %v431, 6
        %v676 = vrot.slane %v432, 6
        %v679 = vmul.f32 %v429, %v675
        %v680 = vmul.f32 %v430, %v676
        %v681 = vmul.f32 %v679, %v673
        %v682 = vmul.f32 %v680, %v674
        %v683 = vadd.f32 %v647, %v681
        %v684 = vadd.f32 %v648, %v682
        %685 = vrot.lane.b32.xlu0 %v428, 35
        %v686 = vpop.permute.xlu0 %685
        %688 = vrot.lane.b32.xlu0 %v427, 35
        %v689 = vpop.permute.xlu0 %688
        %vm690 = vcmask 285696
        %v691 = vsel %vm690, %v689, %v686
        %v694 = vsel %vm690, %v686, %v689
        %s695 = sld [smem:[#allocation7 + $0xe]]
        %v696 = vstv %s695
        %v697 = vmul.f32 %v696, %v694
        %v698 = vmul.f32 %v696, %v691
        %s699 = sld [smem:[#allocation7 + $0xf]]
        %v700 = vstv %s699
        %v701 = vmul.f32 %v700, %v694
        %v702 = vmul.f32 %v700, %v691
        %v705 = vrot.slane %v701, 1
        %v706 = vrot.slane %v702, 1
        %v709 = vadd.f32 %v697, %v705
        %v710 = vadd.f32 %v698, %v706
        %v711 = vrot.slane %v431, 7
        %v712 = vrot.slane %v432, 7
        %v715 = vmul.f32 %v429, %v711
        %v716 = vmul.f32 %v430, %v712
        %v719 = vrot.slane %v709, 7
        %v720 = vrot.slane %v710, 7
        %v723 = vmul.f32 %v715, %v719
        %v724 = vmul.f32 %v716, %v720
        %v727 = vrot.slane %v723, 1
        %v728 = vrot.slane %v724, 1
        %v731 = vadd.f32 %v683, %v727
        %v732 = vadd.f32 %v684, %v728
        %733 = vrot.lane.b32.xlu0 %v428, 34
        %v734 = vpop.permute.xlu0 %733
        %736 = vrot.lane.b32.xlu0 %v427, 34
        %v737 = vpop.permute.xlu0 %736
        %vm738 = vcmask 277504
        %v739 = vsel %vm738, %v737, %v734
        %v742 = vsel %vm738, %v734, %v737
        %s743 = sld [smem:[#allocation7 + $0x10]]
        %v744 = vstv %s743
        %v745 = vmul.f32 %v744, %v742
        %v746 = vmul.f32 %v744, %v739
        %s747 = sld [smem:[#allocation7 + $0x11]]
        %v748 = vstv %s747
        %v749 = vmul.f32 %v748, %v742
        %v750 = vmul.f32 %v748, %v739
        %v753 = vrot.slane %v749, 1
        %v754 = vrot.slane %v750, 1
        %v757 = vadd.f32 %v745, %v753
        %v758 = vadd.f32 %v746, %v754
        %v761 = vrot.slane %v757, 7
        %v762 = vrot.slane %v758, 7
        %v765 = vmul.f32 %v461, %v761
        %v766 = vmul.f32 %v462, %v762
        %v769 = vrot.slane %v765, 1
        %v770 = vrot.slane %v766, 1
        %v773 = vadd.f32 %v731, %v769
        %v774 = vadd.f32 %v732, %v770
        %775 = vrot.lane.b32.xlu0 %v428, 33
        %v776 = vpop.permute.xlu0 %775
        %778 = vrot.lane.b32.xlu0 %v427, 33
        %v779 = vpop.permute.xlu0 %778
        %vm780 = vcmask 269312
        %v781 = vsel %vm780, %v779, %v776
        %v784 = vsel %vm780, %v776, %v779
        %s785 = sld [smem:[#allocation7 + $0x12]]
        %v786 = vstv %s785
        %v787 = vmul.f32 %v786, %v784
        %v788 = vmul.f32 %v786, %v781
        %s789 = sld [smem:[#allocation7 + $0x13]]
        %v790 = vstv %s789
        %v791 = vmul.f32 %v790, %v784
        %v792 = vmul.f32 %v790, %v781
        %v795 = vrot.slane %v791, 1
        %v796 = vrot.slane %v792, 1
        %v799 = vadd.f32 %v787, %v795
        %v800 = vadd.f32 %v788, %v796
        %v803 = vrot.slane %v799, 7
        %v804 = vrot.slane %v800, 7
        %v807 = vmul.f32 %v499, %v803
        %v808 = vmul.f32 %v500, %v804
        %v811 = vrot.slane %v807, 1
        %v812 = vrot.slane %v808, 1
        %v815 = vadd.f32 %v773, %v811
        %v816 = vadd.f32 %v774, %v812
        %817 = vrot.lane.b32.xlu0 %v428, 32
        %v818 = vpop.permute.xlu0 %817
        %820 = vrot.lane.b32.xlu0 %v427, 32
        %v821 = vpop.permute.xlu0 %820
        %vm822 = vcmask 261120
        %v823 = vsel %vm822, %v821, %v818
        %v826 = vsel %vm822, %v818, %v821
        %s827 = sld [smem:[#allocation7 + $0x14]]
        %v828 = vstv %s827
        %v829 = vmul.f32 %v828, %v826
        %v830 = vmul.f32 %v828, %v823
        %s831 = sld [smem:[#allocation7 + $0x15]]
        %v832 = vstv %s831
        %v833 = vmul.f32 %v832, %v826
        %v834 = vmul.f32 %v832, %v823
        %v837 = vrot.slane %v833, 1
        %v838 = vrot.slane %v834, 1
        %v841 = vadd.f32 %v829, %v837
        %v842 = vadd.f32 %v830, %v838
        %v845 = vrot.slane %v841, 7
        %v846 = vrot.slane %v842, 7
        %v849 = vmul.f32 %v535, %v845
        %v850 = vmul.f32 %v536, %v846
        %v853 = vrot.slane %v849, 1
        %v854 = vrot.slane %v850, 1
        %v857 = vadd.f32 %v815, %v853
        %v858 = vadd.f32 %v816, %v854
        %859 = vrot.lane.b32.xlu0 %v428, 31
        %v860 = vpop.permute.xlu0 %859
        %862 = vrot.lane.b32.xlu0 %v427, 31
        %v863 = vpop.permute.xlu0 %862
        %vm864 = vcmask 252928
        %v865 = vsel %vm864, %v863, %v860
        %v868 = vsel %vm864, %v860, %v863
        %s869 = sld [smem:[#allocation7 + $0x16]]
        %v870 = vstv %s869
        %v871 = vmul.f32 %v870, %v868
        %v872 = vmul.f32 %v870, %v865
        %s873 = sld [smem:[#allocation7 + $0x17]]
        %v874 = vstv %s873
        %v875 = vmul.f32 %v874, %v868
        %v876 = vmul.f32 %v874, %v865
        %v879 = vrot.slane %v875, 1
        %v880 = vrot.slane %v876, 1
        %v883 = vadd.f32 %v871, %v879
        %v884 = vadd.f32 %v872, %v880
        %v887 = vrot.slane %v883, 7
        %v888 = vrot.slane %v884, 7
        %v891 = vmul.f32 %v571, %v887
        %v892 = vmul.f32 %v572, %v888
        %v895 = vrot.slane %v891, 1
        %v896 = vrot.slane %v892, 1
        %v899 = vadd.f32 %v857, %v895
        %v900 = vadd.f32 %v858, %v896
        %901 = vrot.lane.b32.xlu0 %v428, 30
        %v902 = vpop.permute.xlu0 %901
        %904 = vrot.lane.b32.xlu0 %v427, 30
        %v905 = vpop.permute.xlu0 %904
        %vm906 = vcmask 244736
        %v907 = vsel %vm906, %v905, %v902
        %v910 = vsel %vm906, %v902, %v905
        %s911 = sld [smem:[#allocation7 + $0x18]]
        %v912 = vstv %s911
        %v913 = vmul.f32 %v912, %v910
        %v914 = vmul.f32 %v912, %v907
        %s915 = sld [smem:[#allocation7 + $0x19]]
        %v916 = vstv %s915
        %v917 = vmul.f32 %v916, %v910
        %v918 = vmul.f32 %v916, %v907
        %v921 = vrot.slane %v917, 1
        %v922 = vrot.slane %v918, 1
        %v925 = vadd.f32 %v913, %v921
        %v926 = vadd.f32 %v914, %v922
        %v929 = vrot.slane %v925, 7
        %v930 = vrot.slane %v926, 7
        %v933 = vmul.f32 %v607, %v929
        %v934 = vmul.f32 %v608, %v930
        %v937 = vrot.slane %v933, 1
        %v938 = vrot.slane %v934, 1
        %v941 = vadd.f32 %v899, %v937
        %v942 = vadd.f32 %v900, %v938
        %943 = vrot.lane.b32.xlu0 %v428, 29
        %v944 = vpop.permute.xlu0 %943
        %946 = vrot.lane.b32.xlu0 %v427, 29
        %v947 = vpop.permute.xlu0 %946
        %vm948 = vcmask 236544
        %v949 = vsel %vm948, %v947, %v944
        %v952 = vsel %vm948, %v944, %v947
        %s953 = sld [smem:[#allocation7 + $0x1a]]
        %v954 = vstv %s953
        %v955 = vmul.f32 %v954, %v952
        %v956 = vmul.f32 %v954, %v949
        %s957 = sld [smem:[#allocation7 + $0x1b]]
        %v958 = vstv %s957
        %v959 = vmul.f32 %v958, %v952
        %v960 = vmul.f32 %v958, %v949
        %v963 = vrot.slane %v959, 1
        %v964 = vrot.slane %v960, 1
        %v967 = vadd.f32 %v955, %v963
        %v968 = vadd.f32 %v956, %v964
        %v971 = vrot.slane %v967, 7
        %v972 = vrot.slane %v968, 7
        %v975 = vmul.f32 %v643, %v971
        %v976 = vmul.f32 %v644, %v972
        %v979 = vrot.slane %v975, 1
        %v980 = vrot.slane %v976, 1
        %v983 = vadd.f32 %v941, %v979
        %v984 = vadd.f32 %v942, %v980
        %985 = vrot.lane.b32.xlu0 %v428, 19
        %v986 = vpop.permute.xlu0 %985
        %988 = vrot.lane.b32.xlu0 %v427, 19
        %v989 = vpop.permute.xlu0 %988
        %vm990 = vcmask 154624
        %v991 = vsel %vm990, %v989, %v986
        %v994 = vsel %vm990, %v986, %v989
        %s995 = sld [smem:[#allocation7 + $0x1c]]
        %v996 = vstv %s995
        %v997 = vmul.f32 %v996, %v994
        %v998 = vmul.f32 %v996, %v991
        %s999 = sld [smem:[#allocation7 + $0x1d]]
        %v1000 = vstv %s999
        %v1001 = vmul.f32 %v1000, %v994
        %v1002 = vmul.f32 %v1000, %v991
        %v1005 = vrot.slane %v1001, 1
        %v1006 = vrot.slane %v1002, 1
        %v1009 = vadd.f32 %v997, %v1005
        %v1010 = vadd.f32 %v998, %v1006
        %v1013 = vrot.slane %v1009, 6
        %v1014 = vrot.slane %v1010, 6
        %v1017 = vmul.f32 %v679, %v1013
        %v1018 = vmul.f32 %v680, %v1014
        %v1021 = vrot.slane %v1017, 2
        %v1022 = vrot.slane %v1018, 2
        %v1025 = vadd.f32 %v983, %v1021
        %v1026 = vadd.f32 %v984, %v1022
        %1027 = vrot.lane.b32.xlu0 %v428, 18
        %v1028 = vpop.permute.xlu0 %1027
        %1030 = vrot.lane.b32.xlu0 %v427, 18
        %v1031 = vpop.permute.xlu0 %1030
        %vm1032 = vcmask 146432
        %v1033 = vsel %vm1032, %v1031, %v1028
        %v1036 = vsel %vm1032, %v1028, %v1031
        %s1037 = sld [smem:[#allocation7 + $0x1e]]
        %v1038 = vstv %s1037
        %v1039 = vmul.f32 %v1038, %v1036
        %v1040 = vmul.f32 %v1038, %v1033
        %s1041 = sld [smem:[#allocation7 + $0x1f]]
        %v1042 = vstv %s1041
        %v1043 = vmul.f32 %v1042, %v1036
        %v1044 = vmul.f32 %v1042, %v1033
        %v1047 = vrot.slane %v1043, 1
        %v1048 = vrot.slane %v1044, 1
        %v1051 = vadd.f32 %v1039, %v1047
        %v1052 = vadd.f32 %v1040, %v1048
        %v1055 = vrot.slane %v1051, 6
        %v1056 = vrot.slane %v1052, 6
        %v1059 = vmul.f32 %v715, %v1055
        %v1060 = vmul.f32 %v716, %v1056
        %v1063 = vrot.slane %v1059, 2
        %v1064 = vrot.slane %v1060, 2
        %v1067 = vadd.f32 %v1025, %v1063
        %v1068 = vadd.f32 %v1026, %v1064
        %1069 = vrot.lane.b32.xlu0 %v428, 17
        %v1070 = vpop.permute.xlu0 %1069
        %1072 = vrot.lane.b32.xlu0 %v427, 17
        %v1073 = vpop.permute.xlu0 %1072
        %vm1074 = vcmask 138240
        %v1075 = vsel %vm1074, %v1073, %v1070
        %v1078 = vsel %vm1074, %v1070, %v1073
        %s1079 = sld [smem:[#allocation7 + $0x20]]
        %v1080 = vstv %s1079
        %v1081 = vmul.f32 %v1080, %v1078
        %v1082 = vmul.f32 %v1080, %v1075
        %s1083 = sld [smem:[#allocation7 + $0x21]]
        %v1084 = vstv %s1083
        %v1085 = vmul.f32 %v1084, %v1078
        %v1086 = vmul.f32 %v1084, %v1075
        %v1089 = vrot.slane %v1085, 1
        %v1090 = vrot.slane %v1086, 1
        %v1093 = vadd.f32 %v1081, %v1089
        %v1094 = vadd.f32 %v1082, %v1090
        %v1097 = vrot.slane %v1093, 6
        %v1098 = vrot.slane %v1094, 6
        %v1101 = vmul.f32 %v461, %v1097
        %v1102 = vmul.f32 %v462, %v1098
        %v1105 = vrot.slane %v1101, 2
        %v1106 = vrot.slane %v1102, 2
        %v1109 = vadd.f32 %v1067, %v1105
        %v1110 = vadd.f32 %v1068, %v1106
        %1111 = vrot.lane.b32.xlu0 %v428, 16
        %v1112 = vpop.permute.xlu0 %1111
        %1114 = vrot.lane.b32.xlu0 %v427, 16
        %v1115 = vpop.permute.xlu0 %1114
        %vm1116 = vcmask 130048
        %v1117 = vsel %vm1116, %v1115, %v1112
        %v1120 = vsel %vm1116, %v1112, %v1115
        %s1121 = sld [smem:[#allocation7 + $0x22]]
        %v1122 = vstv %s1121
        %v1123 = vmul.f32 %v1122, %v1120
        %v1124 = vmul.f32 %v1122, %v1117
        %s1125 = sld [smem:[#allocation7 + $0x23]]
        %v1126 = vstv %s1125
        %v1127 = vmul.f32 %v1126, %v1120
        %v1128 = vmul.f32 %v1126, %v1117
        %v1131 = vrot.slane %v1127, 1
        %v1132 = vrot.slane %v1128, 1
        %v1135 = vadd.f32 %v1123, %v1131
        %v1136 = vadd.f32 %v1124, %v1132
        %v1139 = vrot.slane %v1135, 6
        %v1140 = vrot.slane %v1136, 6
        %v1143 = vmul.f32 %v499, %v1139
        %v1144 = vmul.f32 %v500, %v1140
        %v1147 = vrot.slane %v1143, 2
        %v1148 = vrot.slane %v1144, 2
        %v1151 = vadd.f32 %v1109, %v1147
        %v1152 = vadd.f32 %v1110, %v1148
        %1153 = vrot.lane.b32.xlu0 %v428, 15
        %v1154 = vpop.permute.xlu0 %1153
        %1156 = vrot.lane.b32.xlu0 %v427, 15
        %v1157 = vpop.permute.xlu0 %1156
        %vm1158 = vcmask 121856
        %v1159 = vsel %vm1158, %v1157, %v1154
        %v1162 = vsel %vm1158, %v1154, %v1157
        %s1163 = sld [smem:[#allocation7 + $0x24]]
        %v1164 = vstv %s1163
        %v1165 = vmul.f32 %v1164, %v1162
        %v1166 = vmul.f32 %v1164, %v1159
        %s1167 = sld [smem:[#allocation7 + $0x25]]
        %v1168 = vstv %s1167
        %v1169 = vmul.f32 %v1168, %v1162
        %v1170 = vmul.f32 %v1168, %v1159
        %v1173 = vrot.slane %v1169, 1
        %v1174 = vrot.slane %v1170, 1
        %v1177 = vadd.f32 %v1165, %v1173
        %v1178 = vadd.f32 %v1166, %v1174
        %v1181 = vrot.slane %v1177, 6
        %v1182 = vrot.slane %v1178, 6
        %v1185 = vmul.f32 %v535, %v1181
        %v1186 = vmul.f32 %v536, %v1182
        %v1189 = vrot.slane %v1185, 2
        %v1190 = vrot.slane %v1186, 2
        %v1193 = vadd.f32 %v1151, %v1189
        %v1194 = vadd.f32 %v1152, %v1190
        %1195 = vrot.lane.b32.xlu0 %v428, 14
        %v1196 = vpop.permute.xlu0 %1195
        %1198 = vrot.lane.b32.xlu0 %v427, 14
        %v1199 = vpop.permute.xlu0 %1198
        %vm1200 = vcmask 113664
        %v1201 = vsel %vm1200, %v1199, %v1196
        %v1204 = vsel %vm1200, %v1196, %v1199
        %s1205 = sld [smem:[#allocation7 + $0x26]]
        %v1206 = vstv %s1205
        %v1207 = vmul.f32 %v1206, %v1204
        %v1208 = vmul.f32 %v1206, %v1201
        %s1209 = sld [smem:[#allocation7 + $0x27]]
        %v1210 = vstv %s1209
        %v1211 = vmul.f32 %v1210, %v1204
        %v1212 = vmul.f32 %v1210, %v1201
        %v1215 = vrot.slane %v1211, 1
        %v1216 = vrot.slane %v1212, 1
        %v1219 = vadd.f32 %v1207, %v1215
        %v1220 = vadd.f32 %v1208, %v1216
        %v1223 = vrot.slane %v1219, 6
        %v1224 = vrot.slane %v1220, 6
        %v1227 = vmul.f32 %v571, %v1223
        %v1228 = vmul.f32 %v572, %v1224
        %v1231 = vrot.slane %v1227, 2
        %v1232 = vrot.slane %v1228, 2
        %v1235 = vadd.f32 %v1193, %v1231
        %v1236 = vadd.f32 %v1194, %v1232
        %1237 = vrot.lane.b32.xlu0 %v428, 13
        %v1238 = vpop.permute.xlu0 %1237
        %1240 = vrot.lane.b32.xlu0 %v427, 13
        %v1241 = vpop.permute.xlu0 %1240
        %vm1242 = vcmask 105472
        %v1243 = vsel %vm1242, %v1241, %v1238
        %v1246 = vsel %vm1242, %v1238, %v1241
        %s1247 = sld [smem:[#allocation7 + $0x28]]
        %v1248 = vstv %s1247
        %v1249 = vmul.f32 %v1248, %v1246
        %v1250 = vmul.f32 %v1248, %v1243
        %s1251 = sld [smem:[#allocation7 + $0x29]]
        %v1252 = vstv %s1251
        %v1253 = vmul.f32 %v1252, %v1246
        %v1254 = vmul.f32 %v1252, %v1243
        %v1257 = vrot.slane %v1253, 1
        %v1258 = vrot.slane %v1254, 1
        %v1261 = vadd.f32 %v1249, %v1257
        %v1262 = vadd.f32 %v1250, %v1258
        %v1265 = vrot.slane %v1261, 6
        %v1266 = vrot.slane %v1262, 6
        %v1269 = vmul.f32 %v607, %v1265
        %v1270 = vmul.f32 %v608, %v1266
        %v1273 = vrot.slane %v1269, 2
        %v1274 = vrot.slane %v1270, 2
        %v1277 = vadd.f32 %v1235, %v1273
        %v1278 = vadd.f32 %v1236, %v1274
        %1279 = vrot.lane.b32.xlu0 %v428, 3
        %v1280 = vpop.permute.xlu0 %1279
        %1282 = vrot.lane.b32.xlu0 %v427, 3
        %v1283 = vpop.permute.xlu0 %1282
        %vm1284 = vcmask 23552
        %v1285 = vsel %vm1284, %v1283, %v1280
        %v1288 = vsel %vm1284, %v1280, %v1283
        %s1289 = sld [smem:[#allocation7 + $0x2a]]
        %v1290 = vstv %s1289
        %v1291 = vmul.f32 %v1290, %v1288
        %v1292 = vmul.f32 %v1290, %v1285
        %s1293 = sld [smem:[#allocation7 + $0x2b]]
        %v1294 = vstv %s1293
        %v1295 = vmul.f32 %v1294, %v1288
        %v1296 = vmul.f32 %v1294, %v1285
        %v1299 = vrot.slane %v1295, 1
        %v1300 = vrot.slane %v1296, 1
        %v1303 = vadd.f32 %v1291, %v1299
        %v1304 = vadd.f32 %v1292, %v1300
        %v1307 = vrot.slane %v1303, 5
        %v1308 = vrot.slane %v1304, 5
        %v1311 = vmul.f32 %v643, %v1307
        %v1312 = vmul.f32 %v644, %v1308
        %v1315 = vrot.slane %v1311, 3
        %v1316 = vrot.slane %v1312, 3
        %v1319 = vadd.f32 %v1277, %v1315
        %v1320 = vadd.f32 %v1278, %v1316
        %1321 = vrot.lane.b32.xlu0 %v428, 2
        %v1322 = vpop.permute.xlu0 %1321
        %1324 = vrot.lane.b32.xlu0 %v427, 2
        %v1325 = vpop.permute.xlu0 %1324
        %vm1326 = vcmask 15360
        %v1327 = vsel %vm1326, %v1325, %v1322
        %v1330 = vsel %vm1326, %v1322, %v1325
        %s1331 = sld [smem:[#allocation7 + $0x2c]]
        %v1332 = vstv %s1331
        %v1333 = vmul.f32 %v1332, %v1330
        %v1334 = vmul.f32 %v1332, %v1327
        %s1335 = sld [smem:[#allocation7 + $0x2d]]
        %v1336 = vstv %s1335
        %v1337 = vmul.f32 %v1336, %v1330
        %v1338 = vmul.f32 %v1336, %v1327
        %v1341 = vrot.slane %v1337, 1
        %v1342 = vrot.slane %v1338, 1
        %v1345 = vadd.f32 %v1333, %v1341
        %v1346 = vadd.f32 %v1334, %v1342
        %v1349 = vrot.slane %v1345, 5
        %v1350 = vrot.slane %v1346, 5
        %v1353 = vmul.f32 %v679, %v1349
        %v1354 = vmul.f32 %v680, %v1350
        %v1357 = vrot.slane %v1353, 3
        %v1358 = vrot.slane %v1354, 3
        %v1361 = vadd.f32 %v1319, %v1357
        %v1362 = vadd.f32 %v1320, %v1358
        %1363 = vrot.lane.b32.xlu0 %v428, 1
        %v1364 = vpop.permute.xlu0 %1363
        %1366 = vrot.lane.b32.xlu0 %v427, 1
        %v1367 = vpop.permute.xlu0 %1366
        %vm1368 = vcmask 7168
        %v1369 = vsel %vm1368, %v1367, %v1364
        %v1372 = vsel %vm1368, %v1364, %v1367
        %s1373 = sld [smem:[#allocation7 + $0x2e]]
        %v1374 = vstv %s1373
        %v1375 = vmul.f32 %v1374, %v1372
        %v1376 = vmul.f32 %v1374, %v1369
        %s1377 = sld [smem:[#allocation7 + $0x2f]]
        %v1378 = vstv %s1377
        %v1379 = vmul.f32 %v1378, %v1372
        %v1380 = vmul.f32 %v1378, %v1369
        %v1383 = vrot.slane %v1379, 1
        %v1384 = vrot.slane %v1380, 1
        %v1387 = vadd.f32 %v1375, %v1383
        %v1388 = vadd.f32 %v1376, %v1384
        %v1391 = vrot.slane %v1387, 5
        %v1392 = vrot.slane %v1388, 5
        %v1395 = vmul.f32 %v715, %v1391
        %v1396 = vmul.f32 %v716, %v1392
        %v1399 = vrot.slane %v1395, 3
        %v1400 = vrot.slane %v1396, 3
        %v1403 = vadd.f32 %v1361, %v1399
        %v1404 = vadd.f32 %v1362, %v1400
        %s1405 = sld [smem:[#allocation7 + $0x30]]
        %v1406 = vstv %s1405
        %v1407 = vmul.f32 %v1406, %v427
        %v1408 = vmul.f32 %v1406, %v428
        %s1409 = sld [smem:[#allocation7 + $0x31]]
        %v1410 = vstv %s1409
        %v1411 = vmul.f32 %v1410, %v427
        %v1412 = vmul.f32 %v1410, %v428
        %v1415 = vrot.slane %v1411, 1
        %v1416 = vrot.slane %v1412, 1
        %v1419 = vadd.f32 %v1407, %v1415
        %v1420 = vadd.f32 %v1408, %v1416
        %v1423 = vrot.slane %v1419, 5
        %v1424 = vrot.slane %v1420, 5
        %v1427 = vmul.f32 %v461, %v1423
        %v1428 = vmul.f32 %v462, %v1424
        %v1431 = vrot.slane %v1427, 3
        %v1432 = vrot.slane %v1428, 3
        %v1435 = vadd.f32 %v1403, %v1431
        %v1436 = vadd.f32 %v1404, %v1432
        %1437 = vrot.lane.b32.xlu0 %v427, 127
        %v1438 = vpop.permute.xlu0 %1437
        %1439 = vrot.lane.b32.xlu0 %v428, 127
        %v1440 = vpop.permute.xlu0 %1439
        %vm1441 = vcmask 1039360
        %v1442 = vsel %vm1441, %v1438, %v1440
        %v1446 = vsel %vm1441, %v1440, %v1438
        %s1447 = sld [smem:[#allocation7 + $0x32]]
        %v1448 = vstv %s1447
        %v1449 = vmul.f32 %v1448, %v1442
        %v1450 = vmul.f32 %v1448, %v1446
        %s1451 = sld [smem:[#allocation7 + $0x33]]
        %v1452 = vstv %s1451
        %v1453 = vmul.f32 %v1452, %v1442
        %v1454 = vmul.f32 %v1452, %v1446
        %v1457 = vrot.slane %v1453, 1
        %v1458 = vrot.slane %v1454, 1
        %v1461 = vadd.f32 %v1449, %v1457
        %v1462 = vadd.f32 %v1450, %v1458
        %v1465 = vrot.slane %v1461, 5
        %v1466 = vrot.slane %v1462, 5
        %v1469 = vmul.f32 %v499, %v1465
        %v1470 = vmul.f32 %v500, %v1466
        %v1473 = vrot.slane %v1469, 3
        %v1474 = vrot.slane %v1470, 3
        %v1477 = vadd.f32 %v1435, %v1473
        %v1478 = vadd.f32 %v1436, %v1474
        %1479 = vrot.lane.b32.xlu0 %v427, 126
        %v1480 = vpop.permute.xlu0 %1479
        %1481 = vrot.lane.b32.xlu0 %v428, 126
        %v1482 = vpop.permute.xlu0 %1481
        %vm1483 = vcmask 1031168
        %v1484 = vsel %vm1483, %v1480, %v1482
        %v1488 = vsel %vm1483, %v1482, %v1480
        %s1489 = sld [smem:[#allocation7 + $0x34]]
        %v1490 = vstv %s1489
        %v1491 = vmul.f32 %v1490, %v1484
        %v1492 = vmul.f32 %v1490, %v1488
        %s1493 = sld [smem:[#allocation7 + $0x35]]
        %v1494 = vstv %s1493
        %v1495 = vmul.f32 %v1494, %v1484
        %v1496 = vmul.f32 %v1494, %v1488
        %v1499 = vrot.slane %v1495, 1
        %v1500 = vrot.slane %v1496, 1
        %v1503 = vadd.f32 %v1491, %v1499
        %v1504 = vadd.f32 %v1492, %v1500
        %v1507 = vrot.slane %v1503, 5
        %v1508 = vrot.slane %v1504, 5
        %v1511 = vmul.f32 %v535, %v1507
        %v1512 = vmul.f32 %v536, %v1508
        %v1515 = vrot.slane %v1511, 3
        %v1516 = vrot.slane %v1512, 3
        %v1519 = vadd.f32 %v1477, %v1515
        %v1520 = vadd.f32 %v1478, %v1516
        %1521 = vrot.lane.b32.xlu0 %v427, 125
        %v1522 = vpop.permute.xlu0 %1521
        %1523 = vrot.lane.b32.xlu0 %v428, 125
        %v1524 = vpop.permute.xlu0 %1523
        %vm1525 = vcmask 1022976
        %v1526 = vsel %vm1525, %v1522, %v1524
        %v1530 = vsel %vm1525, %v1524, %v1522
        %s1531 = sld [smem:[#allocation7 + $0x36]]
        %v1532 = vstv %s1531
        %v1533 = vmul.f32 %v1532, %v1526
        %v1534 = vmul.f32 %v1532, %v1530
        %s1535 = sld [smem:[#allocation7 + $0x37]]
        %v1536 = vstv %s1535
        %v1537 = vmul.f32 %v1536, %v1526
        %v1538 = vmul.f32 %v1536, %v1530
        %v1541 = vrot.slane %v1537, 1
        %v1542 = vrot.slane %v1538, 1
        %v1545 = vadd.f32 %v1533, %v1541
        %v1546 = vadd.f32 %v1534, %v1542
        %v1549 = vrot.slane %v1545, 5
        %v1550 = vrot.slane %v1546, 5
        %v1553 = vmul.f32 %v571, %v1549
        %v1554 = vmul.f32 %v572, %v1550
        %v1557 = vrot.slane %v1553, 3
        %v1558 = vrot.slane %v1554, 3
        %v1561 = vadd.f32 %v1519, %v1557
        %v1562 = vadd.f32 %v1520, %v1558
        %1563 = vrot.lane.b32.xlu0 %v427, 115
        %v1564 = vpop.permute.xlu0 %1563
        %1565 = vrot.lane.b32.xlu0 %v428, 115
        %v1566 = vpop.permute.xlu0 %1565
        %vm1567 = vcmask 941056
        %v1568 = vsel %vm1567, %v1564, %v1566
        %v1572 = vsel %vm1567, %v1566, %v1564
        %s1573 = sld [smem:[#allocation7 + $0x38]]
        %v1574 = vstv %s1573
        %v1575 = vmul.f32 %v1574, %v1568
        %v1576 = vmul.f32 %v1574, %v1572
        %s1577 = sld [smem:[#allocation7 + $0x39]]
        %v1578 = vstv %s1577
        %v1579 = vmul.f32 %v1578, %v1568
        %v1580 = vmul.f32 %v1578, %v1572
        %v1583 = vrot.slane %v1579, 1
        %v1584 = vrot.slane %v1580, 1
        %v1587 = vadd.f32 %v1575, %v1583
        %v1588 = vadd.f32 %v1576, %v1584
        %v1591 = vrot.slane %v1587, 4
        %v1592 = vrot.slane %v1588, 4
        %v1595 = vmul.f32 %v607, %v1591
        %v1596 = vmul.f32 %v608, %v1592
        %v1599 = vrot.slane %v1595, 4
        %v1600 = vrot.slane %v1596, 4
        %v1603 = vadd.f32 %v1561, %v1599
        %v1604 = vadd.f32 %v1562, %v1600
        %1605 = vrot.lane.b32.xlu0 %v427, 114
        %v1606 = vpop.permute.xlu0 %1605
        %1607 = vrot.lane.b32.xlu0 %v428, 114
        %v1608 = vpop.permute.xlu0 %1607
        %vm1609 = vcmask 932864
        %v1610 = vsel %vm1609, %v1606, %v1608
        %v1614 = vsel %vm1609, %v1608, %v1606
        %s1615 = sld [smem:[#allocation7 + $0x3a]]
        %v1616 = vstv %s1615
        %v1617 = vmul.f32 %v1616, %v1610
        %v1618 = vmul.f32 %v1616, %v1614
        %s1619 = sld [smem:[#allocation7 + $0x3b]]
        %v1620 = vstv %s1619
        %v1621 = vmul.f32 %v1620, %v1610
        %v1622 = vmul.f32 %v1620, %v1614
        %v1625 = vrot.slane %v1621, 1
        %v1626 = vrot.slane %v1622, 1
        %v1629 = vadd.f32 %v1617, %v1625
        %v1630 = vadd.f32 %v1618, %v1626
        %v1633 = vrot.slane %v1629, 4
        %v1634 = vrot.slane %v1630, 4
        %v1637 = vmul.f32 %v643, %v1633
        %v1638 = vmul.f32 %v644, %v1634
        %v1641 = vrot.slane %v1637, 4
        %v1642 = vrot.slane %v1638, 4
        %v1645 = vadd.f32 %v1603, %v1641
        %v1646 = vadd.f32 %v1604, %v1642
        %1647 = vrot.lane.b32.xlu0 %v427, 113
        %v1648 = vpop.permute.xlu0 %1647
        %1649 = vrot.lane.b32.xlu0 %v428, 113
        %v1650 = vpop.permute.xlu0 %1649
        %vm1651 = vcmask 924672
        %v1652 = vsel %vm1651, %v1648, %v1650
        %v1656 = vsel %vm1651, %v1650, %v1648
        %s1657 = sld [smem:[#allocation7 + $0x3c]]
        %v1658 = vstv %s1657
        %v1659 = vmul.f32 %v1658, %v1652
        %v1660 = vmul.f32 %v1658, %v1656
        %s1661 = sld [smem:[#allocation7 + $0x3d]]
        %v1662 = vstv %s1661
        %v1663 = vmul.f32 %v1662, %v1652
        %v1664 = vmul.f32 %v1662, %v1656
        %v1667 = vrot.slane %v1663, 1
        %v1668 = vrot.slane %v1664, 1
        %v1671 = vadd.f32 %v1659, %v1667
        %v1672 = vadd.f32 %v1660, %v1668
        %v1675 = vrot.slane %v1671, 4
        %v1676 = vrot.slane %v1672, 4
        %v1679 = vmul.f32 %v679, %v1675
        %v1680 = vmul.f32 %v680, %v1676
        %v1683 = vrot.slane %v1679, 4
        %v1684 = vrot.slane %v1680, 4
        %v1687 = vadd.f32 %v1645, %v1683
        %v1688 = vadd.f32 %v1646, %v1684
        %1689 = vrot.lane.b32.xlu0 %v427, 112
        %v1690 = vpop.permute.xlu0 %1689
        %1691 = vrot.lane.b32.xlu0 %v428, 112
        %v1692 = vpop.permute.xlu0 %1691
        %vm1693 = vcmask 916480
        %v1694 = vsel %vm1693, %v1690, %v1692
        %v1698 = vsel %vm1693, %v1692, %v1690
        %s1699 = sld [smem:[#allocation7 + $0x3e]]
        %v1700 = vstv %s1699
        %v1701 = vmul.f32 %v1700, %v1694
        %v1702 = vmul.f32 %v1700, %v1698
        %s1703 = sld [smem:[#allocation7 + $0x3f]]
        %v1704 = vstv %s1703
        %v1705 = vmul.f32 %v1704, %v1694
        %v1706 = vmul.f32 %v1704, %v1698
        %v1709 = vrot.slane %v1705, 1
        %v1710 = vrot.slane %v1706, 1
        %v1713 = vadd.f32 %v1701, %v1709
        %v1714 = vadd.f32 %v1702, %v1710
        %v1717 = vrot.slane %v1713, 4
        %v1718 = vrot.slane %v1714, 4
        %v1721 = vmul.f32 %v715, %v1717
        %v1722 = vmul.f32 %v716, %v1718
        %v1725 = vrot.slane %v1721, 4
        %v1726 = vrot.slane %v1722, 4
        %v1729 = vadd.f32 %v1687, %v1725
        %v1730 = vadd.f32 %v1688, %v1726
        %1731 = vrot.lane.b32.xlu0 %v427, 111
        %v1732 = vpop.permute.xlu0 %1731
        %1733 = vrot.lane.b32.xlu0 %v428, 111
        %v1734 = vpop.permute.xlu0 %1733
        %vm1735 = vcmask 908288
        %v1736 = vsel %vm1735, %v1732, %v1734
        %v1740 = vsel %vm1735, %v1734, %v1732
        %s1741 = sld [smem:[#allocation7 + $0x40]]
        %v1742 = vstv %s1741
        %v1743 = vmul.f32 %v1742, %v1736
        %v1744 = vmul.f32 %v1742, %v1740
        %s1745 = sld [smem:[#allocation7 + $0x41]]
        %v1746 = vstv %s1745
        %v1747 = vmul.f32 %v1746, %v1736
        %v1748 = vmul.f32 %v1746, %v1740
        %v1751 = vrot.slane %v1747, 1
        %v1752 = vrot.slane %v1748, 1
        %v1755 = vadd.f32 %v1743, %v1751
        %v1756 = vadd.f32 %v1744, %v1752
        %v1759 = vrot.slane %v1755, 4
        %v1760 = vrot.slane %v1756, 4
        %v1763 = vmul.f32 %v461, %v1759
        %v1764 = vmul.f32 %v462, %v1760
        %v1767 = vrot.slane %v1763, 4
        %v1768 = vrot.slane %v1764, 4
        %v1771 = vadd.f32 %v1729, %v1767
        %v1772 = vadd.f32 %v1730, %v1768
        %1773 = vrot.lane.b32.xlu0 %v427, 110
        %v1774 = vpop.permute.xlu0 %1773
        %1775 = vrot.lane.b32.xlu0 %v428, 110
        %v1776 = vpop.permute.xlu0 %1775
        %vm1777 = vcmask 900096
        %v1778 = vsel %vm1777, %v1774, %v1776
        %v1782 = vsel %vm1777, %v1776, %v1774
        %s1783 = sld [smem:[#allocation7 + $0x42]]
        %v1784 = vstv %s1783
        %v1785 = vmul.f32 %v1784, %v1778
        %v1786 = vmul.f32 %v1784, %v1782
        %s1787 = sld [smem:[#allocation7 + $0x43]]
        %v1788 = vstv %s1787
        %v1789 = vmul.f32 %v1788, %v1778
        %v1790 = vmul.f32 %v1788, %v1782
        %v1793 = vrot.slane %v1789, 1
        %v1794 = vrot.slane %v1790, 1
        %v1797 = vadd.f32 %v1785, %v1793
        %v1798 = vadd.f32 %v1786, %v1794
        %v1801 = vrot.slane %v1797, 4
        %v1802 = vrot.slane %v1798, 4
        %v1805 = vmul.f32 %v499, %v1801
        %v1806 = vmul.f32 %v500, %v1802
        %v1809 = vrot.slane %v1805, 4
        %v1810 = vrot.slane %v1806, 4
        %v1813 = vadd.f32 %v1771, %v1809
        %v1814 = vadd.f32 %v1772, %v1810
        %1815 = vrot.lane.b32.xlu0 %v427, 109
        %v1816 = vpop.permute.xlu0 %1815
        %1817 = vrot.lane.b32.xlu0 %v428, 109
        %v1818 = vpop.permute.xlu0 %1817
        %vm1819 = vcmask 891904
        %v1820 = vsel %vm1819, %v1816, %v1818
        %v1824 = vsel %vm1819, %v1818, %v1816
        %s1825 = sld [smem:[#allocation7 + $0x44]]
        %v1826 = vstv %s1825
        %v1827 = vmul.f32 %v1826, %v1820
        %v1828 = vmul.f32 %v1826, %v1824
        %s1829 = sld [smem:[#allocation7 + $0x45]]
        %v1830 = vstv %s1829
        %v1831 = vmul.f32 %v1830, %v1820
        %v1832 = vmul.f32 %v1830, %v1824
        %v1835 = vrot.slane %v1831, 1
        %v1836 = vrot.slane %v1832, 1
        %v1839 = vadd.f32 %v1827, %v1835
        %v1840 = vadd.f32 %v1828, %v1836
        %v1843 = vrot.slane %v1839, 4
        %v1844 = vrot.slane %v1840, 4
        %v1847 = vmul.f32 %v535, %v1843
        %v1848 = vmul.f32 %v536, %v1844
        %v1851 = vrot.slane %v1847, 4
        %v1852 = vrot.slane %v1848, 4
        %v1855 = vadd.f32 %v1813, %v1851
        %v1856 = vadd.f32 %v1814, %v1852
        %1857 = vrot.lane.b32.xlu0 %v427, 99
        %v1858 = vpop.permute.xlu0 %1857
        %1859 = vrot.lane.b32.xlu0 %v428, 99
        %v1860 = vpop.permute.xlu0 %1859
        %vm1861 = vcmask 809984
        %v1862 = vsel %vm1861, %v1858, %v1860
        %v1866 = vsel %vm1861, %v1860, %v1858
        %s1867 = sld [smem:[#allocation7 + $0x46]]
        %v1868 = vstv %s1867
        %v1869 = vmul.f32 %v1868, %v1862
        %v1870 = vmul.f32 %v1868, %v1866
        %s1871 = sld [smem:[#allocation7 + $0x47]]
        %v1872 = vstv %s1871
        %v1873 = vmul.f32 %v1872, %v1862
        %v1874 = vmul.f32 %v1872, %v1866
        %v1877 = vrot.slane %v1873, 1
        %v1878 = vrot.slane %v1874, 1
        %v1881 = vadd.f32 %v1869, %v1877
        %v1882 = vadd.f32 %v1870, %v1878
        %v1885 = vrot.slane %v1881, 3
        %v1886 = vrot.slane %v1882, 3
        %v1889 = vmul.f32 %v571, %v1885
        %v1890 = vmul.f32 %v572, %v1886
        %v1893 = vrot.slane %v1889, 5
        %v1894 = vrot.slane %v1890, 5
        %v1897 = vadd.f32 %v1855, %v1893
        %v1898 = vadd.f32 %v1856, %v1894
        %1899 = vrot.lane.b32.xlu0 %v427, 98
        %v1900 = vpop.permute.xlu0 %1899
        %1901 = vrot.lane.b32.xlu0 %v428, 98
        %v1902 = vpop.permute.xlu0 %1901
        %vm1903 = vcmask 801792
        %v1904 = vsel %vm1903, %v1900, %v1902
        %v1908 = vsel %vm1903, %v1902, %v1900
        %s1909 = sld [smem:[#allocation7 + $0x48]]
        %v1910 = vstv %s1909
        %v1911 = vmul.f32 %v1910, %v1904
        %v1912 = vmul.f32 %v1910, %v1908
        %s1913 = sld [smem:[#allocation7 + $0x49]]
        %v1914 = vstv %s1913
        %v1915 = vmul.f32 %v1914, %v1904
        %v1916 = vmul.f32 %v1914, %v1908
        %v1919 = vrot.slane %v1915, 1
        %v1920 = vrot.slane %v1916, 1
        %v1923 = vadd.f32 %v1911, %v1919
        %v1924 = vadd.f32 %v1912, %v1920
        %v1927 = vrot.slane %v1923, 3
        %v1928 = vrot.slane %v1924, 3
        %v1931 = vmul.f32 %v607, %v1927
        %v1932 = vmul.f32 %v608, %v1928
        %v1935 = vrot.slane %v1931, 5
        %v1936 = vrot.slane %v1932, 5
        %v1939 = vadd.f32 %v1897, %v1935
        %v1940 = vadd.f32 %v1898, %v1936
        %1941 = vrot.lane.b32.xlu0 %v427, 97
        %v1942 = vpop.permute.xlu0 %1941
        %1943 = vrot.lane.b32.xlu0 %v428, 97
        %v1944 = vpop.permute.xlu0 %1943
        %vm1945 = vcmask 793600
        %v1946 = vsel %vm1945, %v1942, %v1944
        %v1950 = vsel %vm1945, %v1944, %v1942
        %s1951 = sld [smem:[#allocation7 + $0x4a]]
        %v1952 = vstv %s1951
        %v1953 = vmul.f32 %v1952, %v1946
        %v1954 = vmul.f32 %v1952, %v1950
        %s1955 = sld [smem:[#allocation7 + $0x4b]]
        %v1956 = vstv %s1955
        %v1957 = vmul.f32 %v1956, %v1946
        %v1958 = vmul.f32 %v1956, %v1950
        %v1961 = vrot.slane %v1957, 1
        %v1962 = vrot.slane %v1958, 1
        %v1965 = vadd.f32 %v1953, %v1961
        %v1966 = vadd.f32 %v1954, %v1962
        %v1969 = vrot.slane %v1965, 3
        %v1970 = vrot.slane %v1966, 3
        %v1973 = vmul.f32 %v643, %v1969
        %v1974 = vmul.f32 %v644, %v1970
        %v1977 = vrot.slane %v1973, 5
        %v1978 = vrot.slane %v1974, 5
        %v1981 = vadd.f32 %v1939, %v1977
        %v1982 = vadd.f32 %v1940, %v1978
        %1983 = vrot.lane.b32.xlu0 %v427, 96
        %v1984 = vpop.permute.xlu0 %1983
        %1985 = vrot.lane.b32.xlu0 %v428, 96
        %v1986 = vpop.permute.xlu0 %1985
        %vm1987 = vcmask 785408
        %v1988 = vsel %vm1987, %v1984, %v1986
        %v1992 = vsel %vm1987, %v1986, %v1984
        %s1993 = sld [smem:[#allocation7 + $0x4c]]
        %v1994 = vstv %s1993
        %v1995 = vmul.f32 %v1994, %v1988
        %v1996 = vmul.f32 %v1994, %v1992
        %s1997 = sld [smem:[#allocation7 + $0x4d]]
        %v1998 = vstv %s1997
        %v1999 = vmul.f32 %v1998, %v1988
        %v2000 = vmul.f32 %v1998, %v1992
        %v2003 = vrot.slane %v1999, 1
        %v2004 = vrot.slane %v2000, 1
        %v2007 = vadd.f32 %v1995, %v2003
        %v2008 = vadd.f32 %v1996, %v2004
        %v2011 = vrot.slane %v2007, 3
        %v2012 = vrot.slane %v2008, 3
        %v2015 = vmul.f32 %v679, %v2011
        %v2016 = vmul.f32 %v680, %v2012
        %v2019 = vrot.slane %v2015, 5
        %v2020 = vrot.slane %v2016, 5
        %v2023 = vadd.f32 %v1981, %v2019
        %v2024 = vadd.f32 %v1982, %v2020
        %2025 = vrot.lane.b32.xlu0 %v427, 95
        %v2026 = vpop.permute.xlu0 %2025
        %2027 = vrot.lane.b32.xlu0 %v428, 95
        %v2028 = vpop.permute.xlu0 %2027
        %vm2029 = vcmask 777216
        %v2030 = vsel %vm2029, %v2026, %v2028
        %v2034 = vsel %vm2029, %v2028, %v2026
        %s2035 = sld [smem:[#allocation7 + $0x4e]]
        %v2036 = vstv %s2035
        %v2037 = vmul.f32 %v2036, %v2030
        %v2038 = vmul.f32 %v2036, %v2034
        %s2039 = sld [smem:[#allocation7 + $0x4f]]
        %v2040 = vstv %s2039
        %v2041 = vmul.f32 %v2040, %v2030
        %v2042 = vmul.f32 %v2040, %v2034
        %v2045 = vrot.slane %v2041, 1
        %v2046 = vrot.slane %v2042, 1
        %v2049 = vadd.f32 %v2037, %v2045
        %v2050 = vadd.f32 %v2038, %v2046
        %v2053 = vrot.slane %v2049, 3
        %v2054 = vrot.slane %v2050, 3
        %v2057 = vmul.f32 %v715, %v2053
        %v2058 = vmul.f32 %v716, %v2054
        %v2061 = vrot.slane %v2057, 5
        %v2062 = vrot.slane %v2058, 5
        %v2065 = vadd.f32 %v2023, %v2061
        %v2066 = vadd.f32 %v2024, %v2062
        %2067 = vrot.lane.b32.xlu0 %v427, 94
        %v2068 = vpop.permute.xlu0 %2067
        %2069 = vrot.lane.b32.xlu0 %v428, 94
        %v2070 = vpop.permute.xlu0 %2069
        %vm2071 = vcmask 769024
        %v2072 = vsel %vm2071, %v2068, %v2070
        %v2076 = vsel %vm2071, %v2070, %v2068
        %s2077 = sld [smem:[#allocation7 + $0x50]]
        %v2078 = vstv %s2077
        %v2079 = vmul.f32 %v2078, %v2072
        %v2080 = vmul.f32 %v2078, %v2076
        %s2081 = sld [smem:[#allocation7 + $0x51]]
        %v2082 = vstv %s2081
        %v2083 = vmul.f32 %v2082, %v2072
        %v2084 = vmul.f32 %v2082, %v2076
        %v2087 = vrot.slane %v2083, 1
        %v2088 = vrot.slane %v2084, 1
        %v2091 = vadd.f32 %v2079, %v2087
        %v2092 = vadd.f32 %v2080, %v2088
        %v2095 = vrot.slane %v2091, 3
        %v2096 = vrot.slane %v2092, 3
        %v2099 = vmul.f32 %v461, %v2095
        %v2100 = vmul.f32 %v462, %v2096
        %v2103 = vrot.slane %v2099, 5
        %v2104 = vrot.slane %v2100, 5
        %v2107 = vadd.f32 %v2065, %v2103
        %v2108 = vadd.f32 %v2066, %v2104
        %2109 = vrot.lane.b32.xlu0 %v427, 93
        %v2110 = vpop.permute.xlu0 %2109
        %2111 = vrot.lane.b32.xlu0 %v428, 93
        %v2112 = vpop.permute.xlu0 %2111
        %vm2113 = vcmask 760832
        %v2114 = vsel %vm2113, %v2110, %v2112
        %v2118 = vsel %vm2113, %v2112, %v2110
        %s2119 = sld [smem:[#allocation7 + $0x52]]
        %v2120 = vstv %s2119
        %v2121 = vmul.f32 %v2120, %v2114
        %v2122 = vmul.f32 %v2120, %v2118
        %s2123 = sld [smem:[#allocation7 + $0x53]]
        %v2124 = vstv %s2123
        %v2125 = vmul.f32 %v2124, %v2114
        %v2126 = vmul.f32 %v2124, %v2118
        %v2129 = vrot.slane %v2125, 1
        %v2130 = vrot.slane %v2126, 1
        %v2133 = vadd.f32 %v2121, %v2129
        %v2134 = vadd.f32 %v2122, %v2130
        %v2137 = vrot.slane %v2133, 3
        %v2138 = vrot.slane %v2134, 3
        %v2141 = vmul.f32 %v499, %v2137
        %v2142 = vmul.f32 %v500, %v2138
        %v2145 = vrot.slane %v2141, 5
        %v2146 = vrot.slane %v2142, 5
        %v2149 = vadd.f32 %v2107, %v2145
        %v2150 = vadd.f32 %v2108, %v2146
        %2151 = vrot.lane.b32.xlu0 %v427, 83
        %v2152 = vpop.permute.xlu0 %2151
        %2153 = vrot.lane.b32.xlu0 %v428, 83
        %v2154 = vpop.permute.xlu0 %2153
        %vm2155 = vcmask 678912
        %v2156 = vsel %vm2155, %v2152, %v2154
        %v2160 = vsel %vm2155, %v2154, %v2152
        %s2161 = sld [smem:[#allocation7 + $0x54]]
        %v2162 = vstv %s2161
        %v2163 = vmul.f32 %v2162, %v2156
        %v2164 = vmul.f32 %v2162, %v2160
        %s2165 = sld [smem:[#allocation7 + $0x55]]
        %v2166 = vstv %s2165
        %v2167 = vmul.f32 %v2166, %v2156
        %v2168 = vmul.f32 %v2166, %v2160
        %v2171 = vrot.slane %v2167, 1
        %v2172 = vrot.slane %v2168, 1
        %v2175 = vadd.f32 %v2163, %v2171
        %v2176 = vadd.f32 %v2164, %v2172
        %v2179 = vrot.slane %v2175, 2
        %v2180 = vrot.slane %v2176, 2
        %v2183 = vmul.f32 %v535, %v2179
        %v2184 = vmul.f32 %v536, %v2180
        %v2187 = vrot.slane %v2183, 6
        %v2188 = vrot.slane %v2184, 6
        %v2191 = vadd.f32 %v2149, %v2187
        %v2192 = vadd.f32 %v2150, %v2188
        %2193 = vrot.lane.b32.xlu0 %v427, 82
        %v2194 = vpop.permute.xlu0 %2193
        %2195 = vrot.lane.b32.xlu0 %v428, 82
        %v2196 = vpop.permute.xlu0 %2195
        %vm2197 = vcmask 670720
        %v2198 = vsel %vm2197, %v2194, %v2196
        %v2202 = vsel %vm2197, %v2196, %v2194
        %s2203 = sld [smem:[#allocation7 + $0x56]]
        %v2204 = vstv %s2203
        %v2205 = vmul.f32 %v2204, %v2198
        %v2206 = vmul.f32 %v2204, %v2202
        %s2207 = sld [smem:[#allocation7 + $0x57]]
        %v2208 = vstv %s2207
        %v2209 = vmul.f32 %v2208, %v2198
        %v2210 = vmul.f32 %v2208, %v2202
        %v2213 = vrot.slane %v2209, 1
        %v2214 = vrot.slane %v2210, 1
        %v2217 = vadd.f32 %v2205, %v2213
        %v2218 = vadd.f32 %v2206, %v2214
        %v2221 = vrot.slane %v2217, 2
        %v2222 = vrot.slane %v2218, 2
        %v2225 = vmul.f32 %v571, %v2221
        %v2226 = vmul.f32 %v572, %v2222
        %v2229 = vrot.slane %v2225, 6
        %v2230 = vrot.slane %v2226, 6
        %v2233 = vadd.f32 %v2191, %v2229
        %v2234 = vadd.f32 %v2192, %v2230
        %2235 = vrot.lane.b32.xlu0 %v427, 81
        %v2236 = vpop.permute.xlu0 %2235
        %2237 = vrot.lane.b32.xlu0 %v428, 81
        %v2238 = vpop.permute.xlu0 %2237
        %vm2239 = vcmask 662528
        %v2240 = vsel %vm2239, %v2236, %v2238
        %v2244 = vsel %vm2239, %v2238, %v2236
        %s2245 = sld [smem:[#allocation7 + $0x58]]
        %v2246 = vstv %s2245
        %v2247 = vmul.f32 %v2246, %v2240
        %v2248 = vmul.f32 %v2246, %v2244
        %s2249 = sld [smem:[#allocation7 + $0x59]]
        %v2250 = vstv %s2249
        %v2251 = vmul.f32 %v2250, %v2240
        %v2252 = vmul.f32 %v2250, %v2244
        %v2255 = vrot.slane %v2251, 1
        %v2256 = vrot.slane %v2252, 1
        %v2259 = vadd.f32 %v2247, %v2255
        %v2260 = vadd.f32 %v2248, %v2256
        %v2263 = vrot.slane %v2259, 2
        %v2264 = vrot.slane %v2260, 2
        %v2267 = vmul.f32 %v607, %v2263
        %v2268 = vmul.f32 %v608, %v2264
        %v2271 = vrot.slane %v2267, 6
        %v2272 = vrot.slane %v2268, 6
        %v2275 = vadd.f32 %v2233, %v2271
        %v2276 = vadd.f32 %v2234, %v2272
        %2277 = vrot.lane.b32.xlu0 %v427, 80
        %v2278 = vpop.permute.xlu0 %2277
        %2279 = vrot.lane.b32.xlu0 %v428, 80
        %v2280 = vpop.permute.xlu0 %2279
        %vm2281 = vcmask 654336
        %v2282 = vsel %vm2281, %v2278, %v2280
        %v2286 = vsel %vm2281, %v2280, %v2278
        %s2287 = sld [smem:[#allocation7 + $0x5a]]
        %v2288 = vstv %s2287
        %v2289 = vmul.f32 %v2288, %v2282
        %v2290 = vmul.f32 %v2288, %v2286
        %s2291 = sld [smem:[#allocation7 + $0x5b]]
        %v2292 = vstv %s2291
        %v2293 = vmul.f32 %v2292, %v2282
        %v2294 = vmul.f32 %v2292, %v2286
        %v2297 = vrot.slane %v2293, 1
        %v2298 = vrot.slane %v2294, 1
        %v2301 = vadd.f32 %v2289, %v2297
        %v2302 = vadd.f32 %v2290, %v2298
        %v2305 = vrot.slane %v2301, 2
        %v2306 = vrot.slane %v2302, 2
        %v2309 = vmul.f32 %v643, %v2305
        %v2310 = vmul.f32 %v644, %v2306
        %v2313 = vrot.slane %v2309, 6
        %v2314 = vrot.slane %v2310, 6
        %v2317 = vadd.f32 %v2275, %v2313
        %v2318 = vadd.f32 %v2276, %v2314
        %2319 = vrot.lane.b32.xlu0 %v427, 79
        %v2320 = vpop.permute.xlu0 %2319
        %2321 = vrot.lane.b32.xlu0 %v428, 79
        %v2322 = vpop.permute.xlu0 %2321
        %vm2323 = vcmask 646144
        %v2324 = vsel %vm2323, %v2320, %v2322
        %v2328 = vsel %vm2323, %v2322, %v2320
        %s2329 = sld [smem:[#allocation7 + $0x5c]]
        %v2330 = vstv %s2329
        %v2331 = vmul.f32 %v2330, %v2324
        %v2332 = vmul.f32 %v2330, %v2328
        %s2333 = sld [smem:[#allocation7 + $0x5d]]
        %v2334 = vstv %s2333
        %v2335 = vmul.f32 %v2334, %v2324
        %v2336 = vmul.f32 %v2334, %v2328
        %v2339 = vrot.slane %v2335, 1
        %v2340 = vrot.slane %v2336, 1
        %v2343 = vadd.f32 %v2331, %v2339
        %v2344 = vadd.f32 %v2332, %v2340
        %v2347 = vrot.slane %v2343, 2
        %v2348 = vrot.slane %v2344, 2
        %v2351 = vmul.f32 %v679, %v2347
        %v2352 = vmul.f32 %v680, %v2348
        %v2355 = vrot.slane %v2351, 6
        %v2356 = vrot.slane %v2352, 6
        %v2359 = vadd.f32 %v2317, %v2355
        %v2360 = vadd.f32 %v2318, %v2356
        %2361 = vrot.lane.b32.xlu0 %v427, 78
        %v2362 = vpop.permute.xlu0 %2361
        %2363 = vrot.lane.b32.xlu0 %v428, 78
        %v2364 = vpop.permute.xlu0 %2363
        %vm2365 = vcmask 637952
        %v2366 = vsel %vm2365, %v2362, %v2364
        %v2370 = vsel %vm2365, %v2364, %v2362
        %s2371 = sld [smem:[#allocation7 + $0x5e]]
        %v2372 = vstv %s2371
        %v2373 = vmul.f32 %v2372, %v2366
        %v2374 = vmul.f32 %v2372, %v2370
        %s2375 = sld [smem:[#allocation7 + $0x5f]]
        %v2376 = vstv %s2375
        %v2377 = vmul.f32 %v2376, %v2366
        %v2378 = vmul.f32 %v2376, %v2370
        %v2381 = vrot.slane %v2377, 1
        %v2382 = vrot.slane %v2378, 1
        %v2385 = vadd.f32 %v2373, %v2381
        %v2386 = vadd.f32 %v2374, %v2382
        %v2389 = vrot.slane %v2385, 2
        %v2390 = vrot.slane %v2386, 2
        %v2393 = vmul.f32 %v715, %v2389
        %v2394 = vmul.f32 %v716, %v2390
        %v2397 = vrot.slane %v2393, 6
        %v2398 = vrot.slane %v2394, 6
        %v2401 = vadd.f32 %v2359, %v2397
        %v2402 = vadd.f32 %v2360, %v2398
        %2403 = vrot.lane.b32.xlu0 %v427, 77
        %v2404 = vpop.permute.xlu0 %2403
        %2405 = vrot.lane.b32.xlu0 %v428, 77
        %v2406 = vpop.permute.xlu0 %2405
        %vm2407 = vcmask 629760
        %v2408 = vsel %vm2407, %v2404, %v2406
        %v2412 = vsel %vm2407, %v2406, %v2404
        %s2413 = sld [smem:[#allocation7 + $0x60]]
        %v2414 = vstv %s2413
        %v2415 = vmul.f32 %v2414, %v2408
        %v2416 = vmul.f32 %v2414, %v2412
        %s2417 = sld [smem:[#allocation7 + $0x61]]
        %v2418 = vstv %s2417
        %v2419 = vmul.f32 %v2418, %v2408
        %v2420 = vmul.f32 %v2418, %v2412
        %v2423 = vrot.slane %v2419, 1
        %v2424 = vrot.slane %v2420, 1
        %v2427 = vadd.f32 %v2415, %v2423
        %v2428 = vadd.f32 %v2416, %v2424
        %v2431 = vrot.slane %v2427, 2
        %v2432 = vrot.slane %v2428, 2
        %v2435 = vmul.f32 %v461, %v2431
        %v2436 = vmul.f32 %v462, %v2432
        %v2439 = vrot.slane %v2435, 6
        %v2440 = vrot.slane %v2436, 6
        %v2443 = vadd.f32 %v2401, %v2439
        %v2444 = vadd.f32 %v2402, %v2440
        %s2445 = sld [smem:[#allocation2]]
        %v2446 = vstv %s2445
        %v2447 = vadd.f32 %v2443, %v2446
        %v2448 = vadd.f32 %v2444, %v2446
        %v2449 = vadd.f32 %v2447, 3.0
        %v2450 = vadd.f32 %v2448, 3.0
        %v2451 = vmul.f32 %v2449, 0.001
        %v2452 = vmul.f32 %v2450, 0.001
        %v2453 = vmax.f32 %v2451, %v2449
        %v2454 = vmax.f32 %v2452, %v2450
        %v2455 = vmin.f32 %v2453, 6.0
        %v2456 = vmin.f32 %v2454, 6.0
        %v2457 = vmul.f32 %v2455, 0.16666667
        %v2458 = vmul.f32 %v2456, 0.16666667
        %v2459 = vsub.f32 0.0, %v2457
        %v2460 = vsub.f32 0.0, %v2458
        %v2461 = vmul.f32 %v2459, 1.442695
        %v2462 = vpow.pop %v2461
        %v2463 = vmul.f32 %v2460, 1.442695
        %v2464 = vpow.pop %v2463
        %v2465 = vadd.f32 %v2462, 1.0
        %v2466 = vadd.f32 %v2464, 1.0
        %v2467 = vrcp.pop %v2465
        %v2468 = vrcp.pop %v2466
        %v2469 = vlaneseq
        %v2470 = vshrl.u32 %v2469, 7
        %v2471 = vsub.s32 0, %v2470
        %v2472 = vrot.slane %v2467, %v2471
        %v2473 = vlaneseq
        %v2474 = vshrl.u32 %v2473, 7
        %v2475 = vsub.s32 0, %v2474
        %v2476 = vrot.slane %v2468, %v2475
        %v2477 = vmul.f32 %v392, %v2472
        %v2478 = vmul.f32 %v393, %v2476
        %v2479 = vmul.f32 %v394, %v2472
        %v2480 = vmul.f32 %v395, %v2476
        %2481 = vst [vmem:[%s338] sm:$0xff] %v2477
        %2482 = vst [vmem:[%s338 + $0x8] sm:$0xff] %v2478
        %2483 = vst [vmem:[%s338 + $0x10] sm:$0xff] %v2479
        %2484 = vst [vmem:[%s338 + $0x18] sm:$0xff] %v2480
        %s2485 = sand.u32 %s208, 1
        %s2486 = scalar_lea.sflag [#allocation5], %s2485
        %s2487 = sand.u32 %s208, 1
        %s2488 = smul.addr %s2487, 32
        %s2489 = scalar_lea.vmem [#allocation8], %s2488
        // Predicated region
        $region61: #{tpu_custom_call.1} parent=51 // pred_check
          %p2490 = pneg %p218
        $region62: #{tpu_custom_call.1} parent=51 // pred_check_branch
          %2492 = sbr.rel (%p2490) target = $region64
        $region63: #{tpu_custom_call.1} parent=51 // pred_region
          %s2494 = ssub.s32 512, 512
          %2495 = vsyncadd %s2486, %s2494
          %s2496 = smul.addr %s27, 4
          %s2497 = smul.addr %s2496, 128
          %s2498 = scalar_lea.hbm %s8, %s2497
          %s2499 = sshll.u32 %s2489, 4
          %s2500 = int_to_ptr.vmem [resolvable:$true] %s2499
          %2505 = dma.vmem_to_hbm [thread:$0]  %s2500, 512, %s2498, %s2486, 256, 256, 16
        $region64: #{tpu_custom_call.1} parent=51 // pred_fallthru
          _
      $region52: #{tpu_custom_call.1} parent=5 // pred_fallthru
        _
      %p2506 = scmp.le.s32.totalorder 2, %s22
      // Predicated region
      $region65: #{tpu_custom_call.1} parent=5 // pred_check
        %p2507 = pneg %p2506
      $region66: #{tpu_custom_call.1} parent=5 // pred_check_branch
        %2509 = sbr.rel (%p2507) target = $region68
      $region67: #{tpu_custom_call.1} parent=5 // pred_region
        %s2510 = ssub.s32 %s22, 2
        // Predicated region
        $region69: #{tpu_custom_call.1} parent=67 // pred_check
          %p2511 = pneg %p224
        $region70: #{tpu_custom_call.1} parent=67 // pred_check_branch
          %2513 = sbr.rel (%p2511) target = $region72
        $region71: #{tpu_custom_call.1} parent=67 // pred_region
          %s2514 = sand.u32 %s209, 1
          %s2515 = scalar_lea.sflag [#allocation5], %s2514
          %s2516 = sand.u32 %s209, 1
          %s2517 = smul.addr %s2516, 32
          %s2518 = scalar_lea.vmem [#allocation8], %s2517
          %2519 = dma.done %s2515, 512
        $region72: #{tpu_custom_call.1} parent=67 // pred_fallthru
          _
      $region68: #{tpu_custom_call.1} parent=5 // pred_fallthru
        _
    $region6: #{tpu_custom_call.1} parent=1 // loop_footer
      %s26 = sadd.s32 1, %s22
    $region7: #{tpu_custom_call.1} parent=1 // loop_footer_branch
      %21 = sbr.rel target = $region3
    $region8: #{tpu_custom_call.1} parent=1 // loop_exit
      _
    %2520 = vsyncpa [#allocation4], 1
    %s2521 = scalar_lea.sflag [#allocation4], 1
    %2522 = vsyncpa %s2521, 1
    %2523 = vsyncpa [#allocation5], 1
    %s2524 = scalar_lea.sflag [#allocation5], 1
    %2525 = vsyncpa %s2524, 1
    %2526 = vsyncpa [#allocation6], 1
    %s2527 = scalar_lea.sflag [#allocation6], 1
    %2528 = vsyncpa %s2527, 1

</llo_original>
